<compile_context>
chip_gen: v5e
topology: v5e:2x2
jax: 0.10.0
libtpu: 0.0.40
codegen_flags: <defaults>
</compile_context>

<pallas_src>
import functools

import jax
import jax.numpy as jnp
from jax import lax
from jax.experimental import pallas as pl
from jax.experimental.pallas import tpu as pltpu


def _round_up(n, m):
    return ((n + m - 1) // m) * m


# ---------------------------------------------------------------------------
# Fused whole-network kernel
# ---------------------------------------------------------------------------
def _lenet_kernel(x_ref, c1w_ref, c1b_ref, c2w_ref, c2b_ref,
                  f1w_ref, f1b_ref, f2w_ref, f2b_ref, f3w_ref, f3b_ref,
                  o_ref, *, t):
    """Whole LeNet forward for `t` images (t multiple of 8).

    x_ref : (4, 7, t, 28) f32   image rows split by (row%4, row//4)
    c1w   : (5, 28, 144) bf16   conv1 banded weights, cols (dx, co, pw)
    c1b   : (1, 72)      f32    conv1 bias per (co, pw) column
    c2w   : (5, 72, 128) bf16   conv2 banded weights, rows (ci, pw), cols (dx, c2, qw)
    c2b   : (1, 64)      f32
    f1w   : (4, 64, 128) bf16   fc1 weight split by pooled row qh, N padded 100->128
    f2w   : (128, 128)   bf16   fc2 (K pad 100->128, N pad 64->128)
    f3w   : (128, 128)   bf16   fc3 (only column 0 real)
    o_ref : (t, 1)       f32
    """
    bf16 = jnp.bfloat16
    f32 = jnp.float32

    # ---------------- conv1 + ReLU + 2x2 max-pool ----------------
    # h1[par]: (6*t, 72) f32, rows (m, image) with pooled row ph = 2*m + par,
    # columns (co, pw).  Pool over dx comes from the two 72-wide column halves,
    # pool over dy from the two accumulated matmul groups.
    h1 = []
    for par in (0, 1):
        pooled = None
        for dy in (0, 1):
            z = None
            for kh in range(5):
                c = 2 * par + dy + kh                       # image row = 4*m + c
                lhs = x_ref[c % 4, c // 4:c // 4 + 6, :, :]  # (6, t, 28)
                lhs = lhs.reshape(6 * t, 28).astype(bf16)    # aligned row-merge
                zz = jnp.dot(lhs, c1w_ref[kh], preferred_element_type=f32)
                z = zz if z is None else z + zz              # (6t, 144)
            zdx = jnp.maximum(z[:, 0:72], z[:, 72:144])      # max over dx
            pooled = zdx if pooled is None else jnp.maximum(pooled, zdx)
        h1.append(jnp.maximum(pooled + c1b_ref[...], 0.0))   # (6t, 72)

    # ---------------- conv2 + ReLU + 2x2 max-pool ----------------
    # h2: (4*t, 64) f32, rows (qh, image), columns (c2, qw).
    pooled = None
    for dy in (0, 1):
        z = None
        for kh in range(5):
            c = dy + kh                                      # h1 row ph = 2*qh + c
            lhs = h1[c % 2][(c // 2) * t:(c // 2 + 4) * t, :].astype(bf16)
            zz = jnp.dot(lhs, c2w_ref[kh], preferred_element_type=f32)
            z = zz if z is None else z + zz                  # (4t, 128)
        zdx = jnp.maximum(z[:, 0:64], z[:, 64:128])
        pooled = zdx if pooled is None else jnp.maximum(pooled, zdx)
    h2 = jnp.maximum(pooled + c2b_ref[...], 0.0)             # (4t, 64)

    # ---------------- fc1 -> ReLU -> fc2 -> ReLU -> fc3 ----------------
    y = None
    for qh in range(4):                                      # fc1 split over qh
        yy = jnp.dot(h2[qh * t:(qh + 1) * t, :].astype(bf16), f1w_ref[qh],
                     preferred_element_type=f32)
        y = yy if y is None else y + yy                      # (t, 128)
    y = jnp.maximum(y + f1b_ref[...], 0.0)
    y = jnp.dot(y.astype(bf16), f2w_ref[...], preferred_element_type=f32)
    y = jnp.maximum(y + f2b_ref[...], 0.0)
    y = jnp.dot(y.astype(bf16), f3w_ref[...], preferred_element_type=f32)
    o_ref[...] = y[:, 0:1] + f3b_ref[...]


# ---------------------------------------------------------------------------
# Weight preparation (tiny XLA ops, folds pooling / layouts into the weights)
# ---------------------------------------------------------------------------
def _prep_params(params):
    w1, b1, w2, b2, wf1, bf1, wf2, bf2, wf3, bf3 = params
    f32, bf16 = jnp.float32, jnp.bfloat16

    # conv1 banded weights: B1[kh, s_in, dx*72 + co*12 + pw]
    #   = w1[co, 0, kh, s_in - 2*pw - dx] if tap in range else 0
    wm1 = w1[:, 0].astype(f32)                                 # (co, kh, kw)
    s_in = jnp.arange(28)[:, None, None]
    dx = jnp.arange(2)[None, :, None]
    pw = jnp.arange(12)[None, None, :]
    kw = s_in - 2 * pw - dx                                    # (28, 2, 12)
    valid = (kw >= 0) & (kw <= 4)
    g = wm1[:, :, jnp.clip(kw, 0, 4)]                          # (co, kh, s_in, dx, pw)
    g = jnp.where(valid[None, None], g, 0.0)
    c1w = g.transpose(1, 2, 3, 0, 4).reshape(5, 28, 144).astype(bf16)
    c1b = jnp.repeat(b1.astype(f32), 12)[None, :]              # (1, 72)

    # conv2 banded weights: B2[kh, ci*12 + pw, dx*64 + c2*4 + qw]
    pw2 = jnp.arange(12)[:, None, None]
    dx2 = jnp.arange(2)[None, :, None]
    qw = jnp.arange(4)[None, None, :]
    kw2 = pw2 - 2 * qw - dx2                                   # (12, 2, 4)
    valid2 = (kw2 >= 0) & (kw2 <= 4)
    g2 = w2.astype(f32)[:, :, :, jnp.clip(kw2, 0, 4)]          # (c2, ci, kh, pw, dx, qw)
    g2 = jnp.where(valid2[None, None, None], g2, 0.0)
    c2w = g2.transpose(2, 1, 3, 4, 0, 5).reshape(5, 72, 128).astype(bf16)
    c2b = jnp.repeat(b2.astype(f32), 4)[None, :]               # (1, 64)

    # fc1 split by pooled row qh: W1[qh, c2*4+qw, n] = wf1[n, c2*16 + qh*4 + qw]
    t1 = wf1.astype(f32).reshape(100, 16, 4, 4).transpose(2, 1, 3, 0)   # (qh,c2,qw,n)
    f1w = jnp.pad(t1.reshape(4, 64, 100), ((0, 0), (0, 0), (0, 28))).astype(bf16)
    f1b = jnp.pad(bf1.astype(f32), (0, 28))[None, :]                    # (1, 128)

    f2w = jnp.pad(wf2.astype(f32).T, ((0, 28), (0, 64))).astype(bf16)   # (128, 128)
    f2b = jnp.pad(bf2.astype(f32), (0, 64))[None, :]                    # (1, 128)

    f3w = jnp.pad(wf3.astype(f32).T, ((0, 64), (0, 127))).astype(bf16)  # (128, 128)
    f3b = bf3.astype(f32)[None, :]                                      # (1, 1)

    return (c1w, c1b, c2w, c2b, f1w, f1b, f2w, f2b, f3w, f3b)


# ---------------------------------------------------------------------------
# Full forward pass
# ---------------------------------------------------------------------------
def cnn_forward(x, params, *, images_per_step=None):
    B = x.shape[0]
    if images_per_step is None:
        images_per_step = max(8, min(64, ((B // 2) // 8) * 8))
    T = max(8, (images_per_step // 8) * 8)
    Bp = _round_up(B, T)

    xi = x.reshape(B, 28, 28).astype(jnp.float32)
    if Bp != B:
        xi = jnp.pad(xi, ((0, Bp - B), (0, 0), (0, 0)))
    # Split image rows by parity mod 4 (pure permutation, no expansion) so every
    # conv/pool row window the kernel needs is a contiguous, aligned slice:
    #   x4[p, m, b, :] = image[b, 4*m + p, :]
    x4 = xi.reshape(Bp, 7, 4, 28).transpose(2, 1, 0, 3)        # (4, 7, Bp, 28)

    w = _prep_params(params)
    (c1w, c1b, c2w, c2b, f1w, f1b, f2w, f2b, f3w, f3b) = w

    flops = 2 * Bp * (576 * 25 * 6 + 64 * 150 * 16 + 256 * 100 + 100 * 64 + 64)
    bytes_accessed = int(x4.size * x4.dtype.itemsize + Bp * 4
                         + sum(a.size * a.dtype.itemsize for a in w))

    out = pl.pallas_call(
        functools.partial(_lenet_kernel, t=T),
        out_shape=jax.ShapeDtypeStruct((Bp, 1), jnp.float32),
        grid=(Bp // T,),
        in_specs=[
            pl.BlockSpec((4, 7, T, 28), lambda i: (0, 0, i, 0)),   # streamed images
            pl.BlockSpec(c1w.shape, lambda i: (0, 0, 0)),          # resident weights
            pl.BlockSpec(c1b.shape, lambda i: (0, 0)),
            pl.BlockSpec(c2w.shape, lambda i: (0, 0, 0)),
            pl.BlockSpec(c2b.shape, lambda i: (0, 0)),
            pl.BlockSpec(f1w.shape, lambda i: (0, 0, 0)),
            pl.BlockSpec(f1b.shape, lambda i: (0, 0)),
            pl.BlockSpec(f2w.shape, lambda i: (0, 0)),
            pl.BlockSpec(f2b.shape, lambda i: (0, 0)),
            pl.BlockSpec(f3w.shape, lambda i: (0, 0)),
            pl.BlockSpec(f3b.shape, lambda i: (0, 0)),
        ],
        out_specs=pl.BlockSpec((T, 1), lambda i: (i, 0)),
        compiler_params=pltpu.CompilerParams(
            dimension_semantics=("parallel",)),
        cost_estimate=pl.CostEstimate(flops=flops, transcendentals=0,
                                      bytes_accessed=bytes_accessed),
    )(x4, *w)
    return out[:B]


# ---------------------------------------------------------------------------
# Pure-JAX (lax) reference for a sanity check
# ---------------------------------------------------------------------------
def cnn_reference(x, params):
    w1, b1, w2, b2, wf1, bf1, wf2, bf2, wf3, bf3 = params
    B = x.shape[0]
    xi = x.reshape(B, 1, 28, 28).astype(jnp.float32)
    dn = ("NCHW", "OIHW", "NCHW")

    def pool(t):
        return lax.reduce_window(t, -jnp.inf, lax.max,
                                 (1, 1, 2, 2), (1, 1, 2, 2), "VALID")

    y = lax.conv_general_dilated(xi, w1, (1, 1), "VALID", dimension_numbers=dn)
    y = pool(jnp.maximum(y + b1.reshape(1, -1, 1, 1), 0.0))
    y = lax.conv_general_dilated(y, w2, (1, 1), "VALID", dimension_numbers=dn)
    y = pool(jnp.maximum(y + b2.reshape(1, -1, 1, 1), 0.0))
    y = y.reshape(B, 16 * 4 * 4)
    y = jnp.maximum(y @ wf1.T + bf1, 0.0)
    y = jnp.maximum(y @ wf2.T + bf2, 0.0)
    return y @ wf3.T + bf3


# ---------------------------------------------------------------------------
def make_params(key):
    ks = jax.random.split(key, 10)
    s = 0.1
    w1 = s * jax.random.normal(ks[0], (6, 1, 5, 5), jnp.float32)
    b1 = s * jax.random.normal(ks[1], (6,), jnp.float32)
    w2 = s * jax.random.normal(ks[2], (16, 6, 5, 5), jnp.float32)
    b2 = s * jax.random.normal(ks[3], (16,), jnp.float32)
    wf1 = s * jax.random.normal(ks[4], (100, 256), jnp.float32)
    bf1 = s * jax.random.normal(ks[5], (100,), jnp.float32)
    wf2 = s * jax.random.normal(ks[6], (64, 100), jnp.float32)
    bf2 = s * jax.random.normal(ks[7], (64,), jnp.float32)
    wf3 = s * jax.random.normal(ks[8], (1, 64), jnp.float32)
    bf3 = s * jax.random.normal(ks[9], (1,), jnp.float32)
    return (w1, b1, w2, b2, wf1, bf1, wf2, bf2, wf3, bf3)


if __name__ == "__main__":
    key = jax.random.PRNGKey(0)
    k_x, k_p = jax.random.split(key)
    B = 16                                   # 2 parallel grid steps of 8 images
    x = jax.random.normal(k_x, (B, 784), jnp.float32)
    params = make_params(k_p)

    fwd = jax.jit(cnn_forward)
    out = jax.block_until_ready(fwd(x, params))
    assert out.shape == (B, 1), out.shape
    assert bool(jnp.all(jnp.isfinite(out)))

    ref = jax.block_until_ready(cnn_reference(x, params))
    max_diff = float(jnp.max(jnp.abs(out - ref)))
    # bf16 MXU operands (per perf review) => a few 1e-3 absolute error budget.
    assert max_diff < 3e-2, f"mismatch vs reference: {max_diff}"

    print("KERNEL_OK")
</pallas_src>

<mosaic_0001>
module attributes {stable_mosaic.version = 11 : i64} {
  func.func @_lenet_kernel(%arg0: i32, %arg1: memref<4x7x8x28xf32, #tpu.memory_space<vmem>>, %arg2: memref<5x28x144xbf16, #tpu.memory_space<vmem>>, %arg3: memref<1x72xf32, #tpu.memory_space<vmem>>, %arg4: memref<5x72x128xbf16, #tpu.memory_space<vmem>>, %arg5: memref<1x64xf32, #tpu.memory_space<vmem>>, %arg6: memref<4x64x128xbf16, #tpu.memory_space<vmem>>, %arg7: memref<1x128xf32, #tpu.memory_space<vmem>>, %arg8: memref<128x128xbf16, #tpu.memory_space<vmem>>, %arg9: memref<1x128xf32, #tpu.memory_space<vmem>>, %arg10: memref<128x128xbf16, #tpu.memory_space<vmem>>, %arg11: memref<1x1xf32, #tpu.memory_space<vmem>>, %arg12: memref<8x1xf32, #tpu.memory_space<vmem>>) attributes {dimension_semantics = [#tpu.dimension_semantics<parallel>], iteration_bounds = array<i64: 2>, scalar_prefetch = 0 : i64, scratch_operands = 0 : i64, tpu.core_type = #tpu.core_type<tc>, window_params = [{transform_indices = @transform_0, window_bounds = array<i64: 4, 7, 8, 28>}, {pipeline_mode = #tpu.pipeline_mode<synchronous>, transform_indices = @transform_1, window_bounds = array<i64: 5, 28, 144>}, {pipeline_mode = #tpu.pipeline_mode<synchronous>, transform_indices = @transform_2, window_bounds = array<i64: 1, 72>}, {pipeline_mode = #tpu.pipeline_mode<synchronous>, transform_indices = @transform_3, window_bounds = array<i64: 5, 72, 128>}, {pipeline_mode = #tpu.pipeline_mode<synchronous>, transform_indices = @transform_4, window_bounds = array<i64: 1, 64>}, {pipeline_mode = #tpu.pipeline_mode<synchronous>, transform_indices = @transform_5, window_bounds = array<i64: 4, 64, 128>}, {pipeline_mode = #tpu.pipeline_mode<synchronous>, transform_indices = @transform_6, window_bounds = array<i64: 1, 128>}, {pipeline_mode = #tpu.pipeline_mode<synchronous>, transform_indices = @transform_7, window_bounds = array<i64: 128, 128>}, {pipeline_mode = #tpu.pipeline_mode<synchronous>, transform_indices = @transform_8, window_bounds = array<i64: 1, 128>}, {pipeline_mode = #tpu.pipeline_mode<synchronous>, transform_indices = @transform_9, window_bounds = array<i64: 128, 128>}, {pipeline_mode = #tpu.pipeline_mode<synchronous>, transform_indices = @transform_10, window_bounds = array<i64: 1, 1>}, {transform_indices = @transform_11, window_bounds = array<i64: 8, 1>}]} {
    %c0 = arith.constant 0 : index
    %c0_0 = arith.constant 0 : index
    %c0_1 = arith.constant 0 : index
    %c0_2 = arith.constant 0 : index
    %0 = vector.load %arg1[%c0, %c0_0, %c0_1, %c0_2] : memref<4x7x8x28xf32, #tpu.memory_space<vmem>>, vector<1x6x8x28xf32>
    %1 = vector.shape_cast %0 : vector<1x6x8x28xf32> to vector<6x8x28xf32>
    %2 = vector.shape_cast %1 : vector<6x8x28xf32> to vector<48x28xf32>
    %3 = arith.truncf %2 : vector<48x28xf32> to vector<48x28xbf16>
    %c0_3 = arith.constant 0 : index
    %c0_4 = arith.constant 0 : index
    %c0_5 = arith.constant 0 : index
    %4 = vector.load %arg2[%c0_3, %c0_4, %c0_5] : memref<5x28x144xbf16, #tpu.memory_space<vmem>>, vector<1x28x144xbf16>
    %5 = vector.shape_cast %4 : vector<1x28x144xbf16> to vector<28x144xbf16>
    %cst = arith.constant dense<0.000000e+00> : vector<48x144xf32>
    %6 = tpu.matmul %3, %5, %cst {dimension_numbers = #tpu.dot_dimension_numbers<[1], [0], [0], [1], [0, 0, 1, 1], [], []>} : vector<48x28xbf16>, vector<28x144xbf16>, vector<48x144xf32> -> vector<48x144xf32>
    %c1 = arith.constant 1 : index
    %c0_6 = arith.constant 0 : index
    %c0_7 = arith.constant 0 : index
    %c0_8 = arith.constant 0 : index
    %7 = vector.load %arg1[%c1, %c0_6, %c0_7, %c0_8] : memref<4x7x8x28xf32, #tpu.memory_space<vmem>>, vector<1x6x8x28xf32>
    %8 = vector.shape_cast %7 : vector<1x6x8x28xf32> to vector<6x8x28xf32>
    %9 = vector.shape_cast %8 : vector<6x8x28xf32> to vector<48x28xf32>
    %10 = arith.truncf %9 : vector<48x28xf32> to vector<48x28xbf16>
    %c1_9 = arith.constant 1 : index
    %c0_10 = arith.constant 0 : index
    %c0_11 = arith.constant 0 : index
    %11 = vector.load %arg2[%c1_9, %c0_10, %c0_11] : memref<5x28x144xbf16, #tpu.memory_space<vmem>>, vector<1x28x144xbf16>
    %12 = vector.shape_cast %11 : vector<1x28x144xbf16> to vector<28x144xbf16>
    %cst_12 = arith.constant dense<0.000000e+00> : vector<48x144xf32>
    %13 = tpu.matmul %10, %12, %cst_12 {dimension_numbers = #tpu.dot_dimension_numbers<[1], [0], [0], [1], [0, 0, 1, 1], [], []>} : vector<48x28xbf16>, vector<28x144xbf16>, vector<48x144xf32> -> vector<48x144xf32>
    %14 = arith.addf %6, %13 : vector<48x144xf32>
    %c2 = arith.constant 2 : index
    %c0_13 = arith.constant 0 : index
    %c0_14 = arith.constant 0 : index
    %c0_15 = arith.constant 0 : index
    %15 = vector.load %arg1[%c2, %c0_13, %c0_14, %c0_15] : memref<4x7x8x28xf32, #tpu.memory_space<vmem>>, vector<1x6x8x28xf32>
    %16 = vector.shape_cast %15 : vector<1x6x8x28xf32> to vector<6x8x28xf32>
    %17 = vector.shape_cast %16 : vector<6x8x28xf32> to vector<48x28xf32>
    %18 = arith.truncf %17 : vector<48x28xf32> to vector<48x28xbf16>
    %c2_16 = arith.constant 2 : index
    %c0_17 = arith.constant 0 : index
    %c0_18 = arith.constant 0 : index
    %19 = vector.load %arg2[%c2_16, %c0_17, %c0_18] : memref<5x28x144xbf16, #tpu.memory_space<vmem>>, vector<1x28x144xbf16>
    %20 = vector.shape_cast %19 : vector<1x28x144xbf16> to vector<28x144xbf16>
    %cst_19 = arith.constant dense<0.000000e+00> : vector<48x144xf32>
    %21 = tpu.matmul %18, %20, %cst_19 {dimension_numbers = #tpu.dot_dimension_numbers<[1], [0], [0], [1], [0, 0, 1, 1], [], []>} : vector<48x28xbf16>, vector<28x144xbf16>, vector<48x144xf32> -> vector<48x144xf32>
    %22 = arith.addf %14, %21 : vector<48x144xf32>
    %c3 = arith.constant 3 : index
    %c0_20 = arith.constant 0 : index
    %c0_21 = arith.constant 0 : index
    %c0_22 = arith.constant 0 : index
    %23 = vector.load %arg1[%c3, %c0_20, %c0_21, %c0_22] : memref<4x7x8x28xf32, #tpu.memory_space<vmem>>, vector<1x6x8x28xf32>
    %24 = vector.shape_cast %23 : vector<1x6x8x28xf32> to vector<6x8x28xf32>
    %25 = vector.shape_cast %24 : vector<6x8x28xf32> to vector<48x28xf32>
    %26 = arith.truncf %25 : vector<48x28xf32> to vector<48x28xbf16>
    %c3_23 = arith.constant 3 : index
    %c0_24 = arith.constant 0 : index
    %c0_25 = arith.constant 0 : index
    %27 = vector.load %arg2[%c3_23, %c0_24, %c0_25] : memref<5x28x144xbf16, #tpu.memory_space<vmem>>, vector<1x28x144xbf16>
    %28 = vector.shape_cast %27 : vector<1x28x144xbf16> to vector<28x144xbf16>
    %cst_26 = arith.constant dense<0.000000e+00> : vector<48x144xf32>
    %29 = tpu.matmul %26, %28, %cst_26 {dimension_numbers = #tpu.dot_dimension_numbers<[1], [0], [0], [1], [0, 0, 1, 1], [], []>} : vector<48x28xbf16>, vector<28x144xbf16>, vector<48x144xf32> -> vector<48x144xf32>
    %30 = arith.addf %22, %29 : vector<48x144xf32>
    %c0_27 = arith.constant 0 : index
    %c1_28 = arith.constant 1 : index
    %c0_29 = arith.constant 0 : index
    %c0_30 = arith.constant 0 : index
    %31 = vector.load %arg1[%c0_27, %c1_28, %c0_29, %c0_30] : memref<4x7x8x28xf32, #tpu.memory_space<vmem>>, vector<1x6x8x28xf32>
    %32 = vector.shape_cast %31 : vector<1x6x8x28xf32> to vector<6x8x28xf32>
    %33 = vector.shape_cast %32 : vector<6x8x28xf32> to vector<48x28xf32>
    %34 = arith.truncf %33 : vector<48x28xf32> to vector<48x28xbf16>
    %c4 = arith.constant 4 : index
    %c0_31 = arith.constant 0 : index
    %c0_32 = arith.constant 0 : index
    %35 = vector.load %arg2[%c4, %c0_31, %c0_32] : memref<5x28x144xbf16, #tpu.memory_space<vmem>>, vector<1x28x144xbf16>
    %36 = vector.shape_cast %35 : vector<1x28x144xbf16> to vector<28x144xbf16>
    %cst_33 = arith.constant dense<0.000000e+00> : vector<48x144xf32>
    %37 = tpu.matmul %34, %36, %cst_33 {dimension_numbers = #tpu.dot_dimension_numbers<[1], [0], [0], [1], [0, 0, 1, 1], [], []>} : vector<48x28xbf16>, vector<28x144xbf16>, vector<48x144xf32> -> vector<48x144xf32>
    %38 = arith.addf %30, %37 : vector<48x144xf32>
    %39 = vector.extract_strided_slice %38 {offsets = [0, 0], sizes = [48, 72], strides = [1, 1]} : vector<48x144xf32> to vector<48x72xf32>
    %40 = vector.extract_strided_slice %38 {offsets = [0, 72], sizes = [48, 72], strides = [1, 1]} : vector<48x144xf32> to vector<48x72xf32>
    %41 = arith.maximumf %39, %40 : vector<48x72xf32>
    %c1_34 = arith.constant 1 : index
    %c0_35 = arith.constant 0 : index
    %c0_36 = arith.constant 0 : index
    %c0_37 = arith.constant 0 : index
    %42 = vector.load %arg1[%c1_34, %c0_35, %c0_36, %c0_37] : memref<4x7x8x28xf32, #tpu.memory_space<vmem>>, vector<1x6x8x28xf32>
    %43 = vector.shape_cast %42 : vector<1x6x8x28xf32> to vector<6x8x28xf32>
    %44 = vector.shape_cast %43 : vector<6x8x28xf32> to vector<48x28xf32>
    %45 = arith.truncf %44 : vector<48x28xf32> to vector<48x28xbf16>
    %c0_38 = arith.constant 0 : index
    %c0_39 = arith.constant 0 : index
    %c0_40 = arith.constant 0 : index
    %46 = vector.load %arg2[%c0_38, %c0_39, %c0_40] : memref<5x28x144xbf16, #tpu.memory_space<vmem>>, vector<1x28x144xbf16>
    %47 = vector.shape_cast %46 : vector<1x28x144xbf16> to vector<28x144xbf16>
    %cst_41 = arith.constant dense<0.000000e+00> : vector<48x144xf32>
    %48 = tpu.matmul %45, %47, %cst_41 {dimension_numbers = #tpu.dot_dimension_numbers<[1], [0], [0], [1], [0, 0, 1, 1], [], []>} : vector<48x28xbf16>, vector<28x144xbf16>, vector<48x144xf32> -> vector<48x144xf32>
    %c2_42 = arith.constant 2 : index
    %c0_43 = arith.constant 0 : index
    %c0_44 = arith.constant 0 : index
    %c0_45 = arith.constant 0 : index
    %49 = vector.load %arg1[%c2_42, %c0_43, %c0_44, %c0_45] : memref<4x7x8x28xf32, #tpu.memory_space<vmem>>, vector<1x6x8x28xf32>
    %50 = vector.shape_cast %49 : vector<1x6x8x28xf32> to vector<6x8x28xf32>
    %51 = vector.shape_cast %50 : vector<6x8x28xf32> to vector<48x28xf32>
    %52 = arith.truncf %51 : vector<48x28xf32> to vector<48x28xbf16>
    %c1_46 = arith.constant 1 : index
    %c0_47 = arith.constant 0 : index
    %c0_48 = arith.constant 0 : index
    %53 = vector.load %arg2[%c1_46, %c0_47, %c0_48] : memref<5x28x144xbf16, #tpu.memory_space<vmem>>, vector<1x28x144xbf16>
    %54 = vector.shape_cast %53 : vector<1x28x144xbf16> to vector<28x144xbf16>
    %cst_49 = arith.constant dense<0.000000e+00> : vector<48x144xf32>
    %55 = tpu.matmul %52, %54, %cst_49 {dimension_numbers = #tpu.dot_dimension_numbers<[1], [0], [0], [1], [0, 0, 1, 1], [], []>} : vector<48x28xbf16>, vector<28x144xbf16>, vector<48x144xf32> -> vector<48x144xf32>
    %56 = arith.addf %48, %55 : vector<48x144xf32>
    %c3_50 = arith.constant 3 : index
    %c0_51 = arith.constant 0 : index
    %c0_52 = arith.constant 0 : index
    %c0_53 = arith.constant 0 : index
    %57 = vector.load %arg1[%c3_50, %c0_51, %c0_52, %c0_53] : memref<4x7x8x28xf32, #tpu.memory_space<vmem>>, vector<1x6x8x28xf32>
    %58 = vector.shape_cast %57 : vector<1x6x8x28xf32> to vector<6x8x28xf32>
    %59 = vector.shape_cast %58 : vector<6x8x28xf32> to vector<48x28xf32>
    %60 = arith.truncf %59 : vector<48x28xf32> to vector<48x28xbf16>
    %c2_54 = arith.constant 2 : index
    %c0_55 = arith.constant 0 : index
    %c0_56 = arith.constant 0 : index
    %61 = vector.load %arg2[%c2_54, %c0_55, %c0_56] : memref<5x28x144xbf16, #tpu.memory_space<vmem>>, vector<1x28x144xbf16>
    %62 = vector.shape_cast %61 : vector<1x28x144xbf16> to vector<28x144xbf16>
    %cst_57 = arith.constant dense<0.000000e+00> : vector<48x144xf32>
    %63 = tpu.matmul %60, %62, %cst_57 {dimension_numbers = #tpu.dot_dimension_numbers<[1], [0], [0], [1], [0, 0, 1, 1], [], []>} : vector<48x28xbf16>, vector<28x144xbf16>, vector<48x144xf32> -> vector<48x144xf32>
    %64 = arith.addf %56, %63 : vector<48x144xf32>
    %c0_58 = arith.constant 0 : index
    %c1_59 = arith.constant 1 : index
    %c0_60 = arith.constant 0 : index
    %c0_61 = arith.constant 0 : index
    %65 = vector.load %arg1[%c0_58, %c1_59, %c0_60, %c0_61] : memref<4x7x8x28xf32, #tpu.memory_space<vmem>>, vector<1x6x8x28xf32>
    %66 = vector.shape_cast %65 : vector<1x6x8x28xf32> to vector<6x8x28xf32>
    %67 = vector.shape_cast %66 : vector<6x8x28xf32> to vector<48x28xf32>
    %68 = arith.truncf %67 : vector<48x28xf32> to vector<48x28xbf16>
    %c3_62 = arith.constant 3 : index
    %c0_63 = arith.constant 0 : index
    %c0_64 = arith.constant 0 : index
    %69 = vector.load %arg2[%c3_62, %c0_63, %c0_64] : memref<5x28x144xbf16, #tpu.memory_space<vmem>>, vector<1x28x144xbf16>
    %70 = vector.shape_cast %69 : vector<1x28x144xbf16> to vector<28x144xbf16>
    %cst_65 = arith.constant dense<0.000000e+00> : vector<48x144xf32>
    %71 = tpu.matmul %68, %70, %cst_65 {dimension_numbers = #tpu.dot_dimension_numbers<[1], [0], [0], [1], [0, 0, 1, 1], [], []>} : vector<48x28xbf16>, vector<28x144xbf16>, vector<48x144xf32> -> vector<48x144xf32>
    %72 = arith.addf %64, %71 : vector<48x144xf32>
    %c1_66 = arith.constant 1 : index
    %c1_67 = arith.constant 1 : index
    %c0_68 = arith.constant 0 : index
    %c0_69 = arith.constant 0 : index
    %73 = vector.load %arg1[%c1_66, %c1_67, %c0_68, %c0_69] : memref<4x7x8x28xf32, #tpu.memory_space<vmem>>, vector<1x6x8x28xf32>
    %74 = vector.shape_cast %73 : vector<1x6x8x28xf32> to vector<6x8x28xf32>
    %75 = vector.shape_cast %74 : vector<6x8x28xf32> to vector<48x28xf32>
    %76 = arith.truncf %75 : vector<48x28xf32> to vector<48x28xbf16>
    %c4_70 = arith.constant 4 : index
    %c0_71 = arith.constant 0 : index
    %c0_72 = arith.constant 0 : index
    %77 = vector.load %arg2[%c4_70, %c0_71, %c0_72] : memref<5x28x144xbf16, #tpu.memory_space<vmem>>, vector<1x28x144xbf16>
    %78 = vector.shape_cast %77 : vector<1x28x144xbf16> to vector<28x144xbf16>
    %cst_73 = arith.constant dense<0.000000e+00> : vector<48x144xf32>
    %79 = tpu.matmul %76, %78, %cst_73 {dimension_numbers = #tpu.dot_dimension_numbers<[1], [0], [0], [1], [0, 0, 1, 1], [], []>} : vector<48x28xbf16>, vector<28x144xbf16>, vector<48x144xf32> -> vector<48x144xf32>
    %80 = arith.addf %72, %79 : vector<48x144xf32>
    %81 = vector.extract_strided_slice %80 {offsets = [0, 0], sizes = [48, 72], strides = [1, 1]} : vector<48x144xf32> to vector<48x72xf32>
    %82 = vector.extract_strided_slice %80 {offsets = [0, 72], sizes = [48, 72], strides = [1, 1]} : vector<48x144xf32> to vector<48x72xf32>
    %83 = arith.maximumf %81, %82 : vector<48x72xf32>
    %84 = arith.maximumf %41, %83 : vector<48x72xf32>
    %c0_74 = arith.constant 0 : index
    %c0_75 = arith.constant 0 : index
    %85 = vector.load %arg3[%c0_74, %c0_75] : memref<1x72xf32, #tpu.memory_space<vmem>>, vector<1x72xf32>
    %86 = vector.broadcast %85 : vector<1x72xf32> to vector<48x72xf32>
    %87 = arith.addf %84, %86 : vector<48x72xf32>
    %cst_76 = arith.constant 0.000000e+00 : f32
    %88 = vector.broadcast %cst_76 : f32 to vector<48x72xf32>
    %89 = arith.maximumf %87, %88 : vector<48x72xf32>
    %c2_77 = arith.constant 2 : index
    %c0_78 = arith.constant 0 : index
    %c0_79 = arith.constant 0 : index
    %c0_80 = arith.constant 0 : index
    %90 = vector.load %arg1[%c2_77, %c0_78, %c0_79, %c0_80] : memref<4x7x8x28xf32, #tpu.memory_space<vmem>>, vector<1x6x8x28xf32>
    %91 = vector.shape_cast %90 : vector<1x6x8x28xf32> to vector<6x8x28xf32>
    %92 = vector.shape_cast %91 : vector<6x8x28xf32> to vector<48x28xf32>
    %93 = arith.truncf %92 : vector<48x28xf32> to vector<48x28xbf16>
    %c0_81 = arith.constant 0 : index
    %c0_82 = arith.constant 0 : index
    %c0_83 = arith.constant 0 : index
    %94 = vector.load %arg2[%c0_81, %c0_82, %c0_83] : memref<5x28x144xbf16, #tpu.memory_space<vmem>>, vector<1x28x144xbf16>
    %95 = vector.shape_cast %94 : vector<1x28x144xbf16> to vector<28x144xbf16>
    %cst_84 = arith.constant dense<0.000000e+00> : vector<48x144xf32>
    %96 = tpu.matmul %93, %95, %cst_84 {dimension_numbers = #tpu.dot_dimension_numbers<[1], [0], [0], [1], [0, 0, 1, 1], [], []>} : vector<48x28xbf16>, vector<28x144xbf16>, vector<48x144xf32> -> vector<48x144xf32>
    %c3_85 = arith.constant 3 : index
    %c0_86 = arith.constant 0 : index
    %c0_87 = arith.constant 0 : index
    %c0_88 = arith.constant 0 : index
    %97 = vector.load %arg1[%c3_85, %c0_86, %c0_87, %c0_88] : memref<4x7x8x28xf32, #tpu.memory_space<vmem>>, vector<1x6x8x28xf32>
    %98 = vector.shape_cast %97 : vector<1x6x8x28xf32> to vector<6x8x28xf32>
    %99 = vector.shape_cast %98 : vector<6x8x28xf32> to vector<48x28xf32>
    %100 = arith.truncf %99 : vector<48x28xf32> to vector<48x28xbf16>
    %c1_89 = arith.constant 1 : index
    %c0_90 = arith.constant 0 : index
    %c0_91 = arith.constant 0 : index
    %101 = vector.load %arg2[%c1_89, %c0_90, %c0_91] : memref<5x28x144xbf16, #tpu.memory_space<vmem>>, vector<1x28x144xbf16>
    %102 = vector.shape_cast %101 : vector<1x28x144xbf16> to vector<28x144xbf16>
    %cst_92 = arith.constant dense<0.000000e+00> : vector<48x144xf32>
    %103 = tpu.matmul %100, %102, %cst_92 {dimension_numbers = #tpu.dot_dimension_numbers<[1], [0], [0], [1], [0, 0, 1, 1], [], []>} : vector<48x28xbf16>, vector<28x144xbf16>, vector<48x144xf32> -> vector<48x144xf32>
    %104 = arith.addf %96, %103 : vector<48x144xf32>
    %c0_93 = arith.constant 0 : index
    %c1_94 = arith.constant 1 : index
    %c0_95 = arith.constant 0 : index
    %c0_96 = arith.constant 0 : index
    %105 = vector.load %arg1[%c0_93, %c1_94, %c0_95, %c0_96] : memref<4x7x8x28xf32, #tpu.memory_space<vmem>>, vector<1x6x8x28xf32>
    %106 = vector.shape_cast %105 : vector<1x6x8x28xf32> to vector<6x8x28xf32>
    %107 = vector.shape_cast %106 : vector<6x8x28xf32> to vector<48x28xf32>
    %108 = arith.truncf %107 : vector<48x28xf32> to vector<48x28xbf16>
    %c2_97 = arith.constant 2 : index
    %c0_98 = arith.constant 0 : index
    %c0_99 = arith.constant 0 : index
    %109 = vector.load %arg2[%c2_97, %c0_98, %c0_99] : memref<5x28x144xbf16, #tpu.memory_space<vmem>>, vector<1x28x144xbf16>
    %110 = vector.shape_cast %109 : vector<1x28x144xbf16> to vector<28x144xbf16>
    %cst_100 = arith.constant dense<0.000000e+00> : vector<48x144xf32>
    %111 = tpu.matmul %108, %110, %cst_100 {dimension_numbers = #tpu.dot_dimension_numbers<[1], [0], [0], [1], [0, 0, 1, 1], [], []>} : vector<48x28xbf16>, vector<28x144xbf16>, vector<48x144xf32> -> vector<48x144xf32>
    %112 = arith.addf %104, %111 : vector<48x144xf32>
    %c1_101 = arith.constant 1 : index
    %c1_102 = arith.constant 1 : index
    %c0_103 = arith.constant 0 : index
    %c0_104 = arith.constant 0 : index
    %113 = vector.load %arg1[%c1_101, %c1_102, %c0_103, %c0_104] : memref<4x7x8x28xf32, #tpu.memory_space<vmem>>, vector<1x6x8x28xf32>
    %114 = vector.shape_cast %113 : vector<1x6x8x28xf32> to vector<6x8x28xf32>
    %115 = vector.shape_cast %114 : vector<6x8x28xf32> to vector<48x28xf32>
    %116 = arith.truncf %115 : vector<48x28xf32> to vector<48x28xbf16>
    %c3_105 = arith.constant 3 : index
    %c0_106 = arith.constant 0 : index
    %c0_107 = arith.constant 0 : index
    %117 = vector.load %arg2[%c3_105, %c0_106, %c0_107] : memref<5x28x144xbf16, #tpu.memory_space<vmem>>, vector<1x28x144xbf16>
    %118 = vector.shape_cast %117 : vector<1x28x144xbf16> to vector<28x144xbf16>
    %cst_108 = arith.constant dense<0.000000e+00> : vector<48x144xf32>
    %119 = tpu.matmul %116, %118, %cst_108 {dimension_numbers = #tpu.dot_dimension_numbers<[1], [0], [0], [1], [0, 0, 1, 1], [], []>} : vector<48x28xbf16>, vector<28x144xbf16>, vector<48x144xf32> -> vector<48x144xf32>
    %120 = arith.addf %112, %119 : vector<48x144xf32>
    %c2_109 = arith.constant 2 : index
    %c1_110 = arith.constant 1 : index
    %c0_111 = arith.constant 0 : index
    %c0_112 = arith.constant 0 : index
    %121 = vector.load %arg1[%c2_109, %c1_110, %c0_111, %c0_112] : memref<4x7x8x28xf32, #tpu.memory_space<vmem>>, vector<1x6x8x28xf32>
    %122 = vector.shape_cast %121 : vector<1x6x8x28xf32> to vector<6x8x28xf32>
    %123 = vector.shape_cast %122 : vector<6x8x28xf32> to vector<48x28xf32>
    %124 = arith.truncf %123 : vector<48x28xf32> to vector<48x28xbf16>
    %c4_113 = arith.constant 4 : index
    %c0_114 = arith.constant 0 : index
    %c0_115 = arith.constant 0 : index
    %125 = vector.load %arg2[%c4_113, %c0_114, %c0_115] : memref<5x28x144xbf16, #tpu.memory_space<vmem>>, vector<1x28x144xbf16>
    %126 = vector.shape_cast %125 : vector<1x28x144xbf16> to vector<28x144xbf16>
    %cst_116 = arith.constant dense<0.000000e+00> : vector<48x144xf32>
    %127 = tpu.matmul %124, %126, %cst_116 {dimension_numbers = #tpu.dot_dimension_numbers<[1], [0], [0], [1], [0, 0, 1, 1], [], []>} : vector<48x28xbf16>, vector<28x144xbf16>, vector<48x144xf32> -> vector<48x144xf32>
    %128 = arith.addf %120, %127 : vector<48x144xf32>
    %129 = vector.extract_strided_slice %128 {offsets = [0, 0], sizes = [48, 72], strides = [1, 1]} : vector<48x144xf32> to vector<48x72xf32>
    %130 = vector.extract_strided_slice %128 {offsets = [0, 72], sizes = [48, 72], strides = [1, 1]} : vector<48x144xf32> to vector<48x72xf32>
    %131 = arith.maximumf %129, %130 : vector<48x72xf32>
    %c3_117 = arith.constant 3 : index
    %c0_118 = arith.constant 0 : index
    %c0_119 = arith.constant 0 : index
    %c0_120 = arith.constant 0 : index
    %132 = vector.load %arg1[%c3_117, %c0_118, %c0_119, %c0_120] : memref<4x7x8x28xf32, #tpu.memory_space<vmem>>, vector<1x6x8x28xf32>
    %133 = vector.shape_cast %132 : vector<1x6x8x28xf32> to vector<6x8x28xf32>
    %134 = vector.shape_cast %133 : vector<6x8x28xf32> to vector<48x28xf32>
    %135 = arith.truncf %134 : vector<48x28xf32> to vector<48x28xbf16>
    %c0_121 = arith.constant 0 : index
    %c0_122 = arith.constant 0 : index
    %c0_123 = arith.constant 0 : index
    %136 = vector.load %arg2[%c0_121, %c0_122, %c0_123] : memref<5x28x144xbf16, #tpu.memory_space<vmem>>, vector<1x28x144xbf16>
    %137 = vector.shape_cast %136 : vector<1x28x144xbf16> to vector<28x144xbf16>
    %cst_124 = arith.constant dense<0.000000e+00> : vector<48x144xf32>
    %138 = tpu.matmul %135, %137, %cst_124 {dimension_numbers = #tpu.dot_dimension_numbers<[1], [0], [0], [1], [0, 0, 1, 1], [], []>} : vector<48x28xbf16>, vector<28x144xbf16>, vector<48x144xf32> -> vector<48x144xf32>
    %c0_125 = arith.constant 0 : index
    %c1_126 = arith.constant 1 : index
    %c0_127 = arith.constant 0 : index
    %c0_128 = arith.constant 0 : index
    %139 = vector.load %arg1[%c0_125, %c1_126, %c0_127, %c0_128] : memref<4x7x8x28xf32, #tpu.memory_space<vmem>>, vector<1x6x8x28xf32>
    %140 = vector.shape_cast %139 : vector<1x6x8x28xf32> to vector<6x8x28xf32>
    %141 = vector.shape_cast %140 : vector<6x8x28xf32> to vector<48x28xf32>
    %142 = arith.truncf %141 : vector<48x28xf32> to vector<48x28xbf16>
    %c1_129 = arith.constant 1 : index
    %c0_130 = arith.constant 0 : index
    %c0_131 = arith.constant 0 : index
    %143 = vector.load %arg2[%c1_129, %c0_130, %c0_131] : memref<5x28x144xbf16, #tpu.memory_space<vmem>>, vector<1x28x144xbf16>
    %144 = vector.shape_cast %143 : vector<1x28x144xbf16> to vector<28x144xbf16>
    %cst_132 = arith.constant dense<0.000000e+00> : vector<48x144xf32>
    %145 = tpu.matmul %142, %144, %cst_132 {dimension_numbers = #tpu.dot_dimension_numbers<[1], [0], [0], [1], [0, 0, 1, 1], [], []>} : vector<48x28xbf16>, vector<28x144xbf16>, vector<48x144xf32> -> vector<48x144xf32>
    %146 = arith.addf %138, %145 : vector<48x144xf32>
    %c1_133 = arith.constant 1 : index
    %c1_134 = arith.constant 1 : index
    %c0_135 = arith.constant 0 : index
    %c0_136 = arith.constant 0 : index
    %147 = vector.load %arg1[%c1_133, %c1_134, %c0_135, %c0_136] : memref<4x7x8x28xf32, #tpu.memory_space<vmem>>, vector<1x6x8x28xf32>
    %148 = vector.shape_cast %147 : vector<1x6x8x28xf32> to vector<6x8x28xf32>
    %149 = vector.shape_cast %148 : vector<6x8x28xf32> to vector<48x28xf32>
    %150 = arith.truncf %149 : vector<48x28xf32> to vector<48x28xbf16>
    %c2_137 = arith.constant 2 : index
    %c0_138 = arith.constant 0 : index
    %c0_139 = arith.constant 0 : index
    %151 = vector.load %arg2[%c2_137, %c0_138, %c0_139] : memref<5x28x144xbf16, #tpu.memory_space<vmem>>, vector<1x28x144xbf16>
    %152 = vector.shape_cast %151 : vector<1x28x144xbf16> to vector<28x144xbf16>
    %cst_140 = arith.constant dense<0.000000e+00> : vector<48x144xf32>
    %153 = tpu.matmul %150, %152, %cst_140 {dimension_numbers = #tpu.dot_dimension_numbers<[1], [0], [0], [1], [0, 0, 1, 1], [], []>} : vector<48x28xbf16>, vector<28x144xbf16>, vector<48x144xf32> -> vector<48x144xf32>
    %154 = arith.addf %146, %153 : vector<48x144xf32>
    %c2_141 = arith.constant 2 : index
    %c1_142 = arith.constant 1 : index
    %c0_143 = arith.constant 0 : index
    %c0_144 = arith.constant 0 : index
    %155 = vector.load %arg1[%c2_141, %c1_142, %c0_143, %c0_144] : memref<4x7x8x28xf32, #tpu.memory_space<vmem>>, vector<1x6x8x28xf32>
    %156 = vector.shape_cast %155 : vector<1x6x8x28xf32> to vector<6x8x28xf32>
    %157 = vector.shape_cast %156 : vector<6x8x28xf32> to vector<48x28xf32>
    %158 = arith.truncf %157 : vector<48x28xf32> to vector<48x28xbf16>
    %c3_145 = arith.constant 3 : index
    %c0_146 = arith.constant 0 : index
    %c0_147 = arith.constant 0 : index
    %159 = vector.load %arg2[%c3_145, %c0_146, %c0_147] : memref<5x28x144xbf16, #tpu.memory_space<vmem>>, vector<1x28x144xbf16>
    %160 = vector.shape_cast %159 : vector<1x28x144xbf16> to vector<28x144xbf16>
    %cst_148 = arith.constant dense<0.000000e+00> : vector<48x144xf32>
    %161 = tpu.matmul %158, %160, %cst_148 {dimension_numbers = #tpu.dot_dimension_numbers<[1], [0], [0], [1], [0, 0, 1, 1], [], []>} : vector<48x28xbf16>, vector<28x144xbf16>, vector<48x144xf32> -> vector<48x144xf32>
    %162 = arith.addf %154, %161 : vector<48x144xf32>
    %c3_149 = arith.constant 3 : index
    %c1_150 = arith.constant 1 : index
    %c0_151 = arith.constant 0 : index
    %c0_152 = arith.constant 0 : index
    %163 = vector.load %arg1[%c3_149, %c1_150, %c0_151, %c0_152] : memref<4x7x8x28xf32, #tpu.memory_space<vmem>>, vector<1x6x8x28xf32>
    %164 = vector.shape_cast %163 : vector<1x6x8x28xf32> to vector<6x8x28xf32>
    %165 = vector.shape_cast %164 : vector<6x8x28xf32> to vector<48x28xf32>
    %166 = arith.truncf %165 : vector<48x28xf32> to vector<48x28xbf16>
    %c4_153 = arith.constant 4 : index
    %c0_154 = arith.constant 0 : index
    %c0_155 = arith.constant 0 : index
    %167 = vector.load %arg2[%c4_153, %c0_154, %c0_155] : memref<5x28x144xbf16, #tpu.memory_space<vmem>>, vector<1x28x144xbf16>
    %168 = vector.shape_cast %167 : vector<1x28x144xbf16> to vector<28x144xbf16>
    %cst_156 = arith.constant dense<0.000000e+00> : vector<48x144xf32>
    %169 = tpu.matmul %166, %168, %cst_156 {dimension_numbers = #tpu.dot_dimension_numbers<[1], [0], [0], [1], [0, 0, 1, 1], [], []>} : vector<48x28xbf16>, vector<28x144xbf16>, vector<48x144xf32> -> vector<48x144xf32>
    %170 = arith.addf %162, %169 : vector<48x144xf32>
    %171 = vector.extract_strided_slice %170 {offsets = [0, 0], sizes = [48, 72], strides = [1, 1]} : vector<48x144xf32> to vector<48x72xf32>
    %172 = vector.extract_strided_slice %170 {offsets = [0, 72], sizes = [48, 72], strides = [1, 1]} : vector<48x144xf32> to vector<48x72xf32>
    %173 = arith.maximumf %171, %172 : vector<48x72xf32>
    %174 = arith.maximumf %131, %173 : vector<48x72xf32>
    %c0_157 = arith.constant 0 : index
    %c0_158 = arith.constant 0 : index
    %175 = vector.load %arg3[%c0_157, %c0_158] : memref<1x72xf32, #tpu.memory_space<vmem>>, vector<1x72xf32>
    %176 = vector.broadcast %175 : vector<1x72xf32> to vector<48x72xf32>
    %177 = arith.addf %174, %176 : vector<48x72xf32>
    %cst_159 = arith.constant 0.000000e+00 : f32
    %178 = vector.broadcast %cst_159 : f32 to vector<48x72xf32>
    %179 = arith.maximumf %177, %178 : vector<48x72xf32>
    %180 = vector.extract_strided_slice %89 {offsets = [0, 0], sizes = [32, 72], strides = [1, 1]} : vector<48x72xf32> to vector<32x72xf32>
    %181 = arith.truncf %180 : vector<32x72xf32> to vector<32x72xbf16>
    %c0_160 = arith.constant 0 : index
    %c0_161 = arith.constant 0 : index
    %c0_162 = arith.constant 0 : index
    %182 = vector.load %arg4[%c0_160, %c0_161, %c0_162] : memref<5x72x128xbf16, #tpu.memory_space<vmem>>, vector<1x72x128xbf16>
    %183 = vector.shape_cast %182 : vector<1x72x128xbf16> to vector<72x128xbf16>
    %cst_163 = arith.constant dense<0.000000e+00> : vector<32x128xf32>
    %184 = tpu.matmul %181, %183, %cst_163 {dimension_numbers = #tpu.dot_dimension_numbers<[1], [0], [0], [1], [0, 0, 1, 1], [], []>} : vector<32x72xbf16>, vector<72x128xbf16>, vector<32x128xf32> -> vector<32x128xf32>
    %185 = vector.extract_strided_slice %179 {offsets = [0, 0], sizes = [32, 72], strides = [1, 1]} : vector<48x72xf32> to vector<32x72xf32>
    %186 = arith.truncf %185 : vector<32x72xf32> to vector<32x72xbf16>
    %c1_164 = arith.constant 1 : index
    %c0_165 = arith.constant 0 : index
    %c0_166 = arith.constant 0 : index
    %187 = vector.load %arg4[%c1_164, %c0_165, %c0_166] : memref<5x72x128xbf16, #tpu.memory_space<vmem>>, vector<1x72x128xbf16>
    %188 = vector.shape_cast %187 : vector<1x72x128xbf16> to vector<72x128xbf16>
    %cst_167 = arith.constant dense<0.000000e+00> : vector<32x128xf32>
    %189 = tpu.matmul %186, %188, %cst_167 {dimension_numbers = #tpu.dot_dimension_numbers<[1], [0], [0], [1], [0, 0, 1, 1], [], []>} : vector<32x72xbf16>, vector<72x128xbf16>, vector<32x128xf32> -> vector<32x128xf32>
    %190 = arith.addf %184, %189 : vector<32x128xf32>
    %191 = vector.extract_strided_slice %89 {offsets = [8, 0], sizes = [32, 72], strides = [1, 1]} : vector<48x72xf32> to vector<32x72xf32>
    %192 = arith.truncf %191 : vector<32x72xf32> to vector<32x72xbf16>
    %c2_168 = arith.constant 2 : index
    %c0_169 = arith.constant 0 : index
    %c0_170 = arith.constant 0 : index
    %193 = vector.load %arg4[%c2_168, %c0_169, %c0_170] : memref<5x72x128xbf16, #tpu.memory_space<vmem>>, vector<1x72x128xbf16>
    %194 = vector.shape_cast %193 : vector<1x72x128xbf16> to vector<72x128xbf16>
    %cst_171 = arith.constant dense<0.000000e+00> : vector<32x128xf32>
    %195 = tpu.matmul %192, %194, %cst_171 {dimension_numbers = #tpu.dot_dimension_numbers<[1], [0], [0], [1], [0, 0, 1, 1], [], []>} : vector<32x72xbf16>, vector<72x128xbf16>, vector<32x128xf32> -> vector<32x128xf32>
    %196 = arith.addf %190, %195 : vector<32x128xf32>
    %197 = vector.extract_strided_slice %179 {offsets = [8, 0], sizes = [32, 72], strides = [1, 1]} : vector<48x72xf32> to vector<32x72xf32>
    %198 = arith.truncf %197 : vector<32x72xf32> to vector<32x72xbf16>
    %c3_172 = arith.constant 3 : index
    %c0_173 = arith.constant 0 : index
    %c0_174 = arith.constant 0 : index
    %199 = vector.load %arg4[%c3_172, %c0_173, %c0_174] : memref<5x72x128xbf16, #tpu.memory_space<vmem>>, vector<1x72x128xbf16>
    %200 = vector.shape_cast %199 : vector<1x72x128xbf16> to vector<72x128xbf16>
    %cst_175 = arith.constant dense<0.000000e+00> : vector<32x128xf32>
    %201 = tpu.matmul %198, %200, %cst_175 {dimension_numbers = #tpu.dot_dimension_numbers<[1], [0], [0], [1], [0, 0, 1, 1], [], []>} : vector<32x72xbf16>, vector<72x128xbf16>, vector<32x128xf32> -> vector<32x128xf32>
    %202 = arith.addf %196, %201 : vector<32x128xf32>
    %203 = vector.extract_strided_slice %89 {offsets = [16, 0], sizes = [32, 72], strides = [1, 1]} : vector<48x72xf32> to vector<32x72xf32>
    %204 = arith.truncf %203 : vector<32x72xf32> to vector<32x72xbf16>
    %c4_176 = arith.constant 4 : index
    %c0_177 = arith.constant 0 : index
    %c0_178 = arith.constant 0 : index
    %205 = vector.load %arg4[%c4_176, %c0_177, %c0_178] : memref<5x72x128xbf16, #tpu.memory_space<vmem>>, vector<1x72x128xbf16>
    %206 = vector.shape_cast %205 : vector<1x72x128xbf16> to vector<72x128xbf16>
    %cst_179 = arith.constant dense<0.000000e+00> : vector<32x128xf32>
    %207 = tpu.matmul %204, %206, %cst_179 {dimension_numbers = #tpu.dot_dimension_numbers<[1], [0], [0], [1], [0, 0, 1, 1], [], []>} : vector<32x72xbf16>, vector<72x128xbf16>, vector<32x128xf32> -> vector<32x128xf32>
    %208 = arith.addf %202, %207 : vector<32x128xf32>
    %209 = vector.extract_strided_slice %208 {offsets = [0, 0], sizes = [32, 64], strides = [1, 1]} : vector<32x128xf32> to vector<32x64xf32>
    %210 = vector.extract_strided_slice %208 {offsets = [0, 64], sizes = [32, 64], strides = [1, 1]} : vector<32x128xf32> to vector<32x64xf32>
    %211 = arith.maximumf %209, %210 : vector<32x64xf32>
    %212 = vector.extract_strided_slice %179 {offsets = [0, 0], sizes = [32, 72], strides = [1, 1]} : vector<48x72xf32> to vector<32x72xf32>
    %213 = arith.truncf %212 : vector<32x72xf32> to vector<32x72xbf16>
    %c0_180 = arith.constant 0 : index
    %c0_181 = arith.constant 0 : index
    %c0_182 = arith.constant 0 : index
    %214 = vector.load %arg4[%c0_180, %c0_181, %c0_182] : memref<5x72x128xbf16, #tpu.memory_space<vmem>>, vector<1x72x128xbf16>
    %215 = vector.shape_cast %214 : vector<1x72x128xbf16> to vector<72x128xbf16>
    %cst_183 = arith.constant dense<0.000000e+00> : vector<32x128xf32>
    %216 = tpu.matmul %213, %215, %cst_183 {dimension_numbers = #tpu.dot_dimension_numbers<[1], [0], [0], [1], [0, 0, 1, 1], [], []>} : vector<32x72xbf16>, vector<72x128xbf16>, vector<32x128xf32> -> vector<32x128xf32>
    %217 = vector.extract_strided_slice %89 {offsets = [8, 0], sizes = [32, 72], strides = [1, 1]} : vector<48x72xf32> to vector<32x72xf32>
    %218 = arith.truncf %217 : vector<32x72xf32> to vector<32x72xbf16>
    %c1_184 = arith.constant 1 : index
    %c0_185 = arith.constant 0 : index
    %c0_186 = arith.constant 0 : index
    %219 = vector.load %arg4[%c1_184, %c0_185, %c0_186] : memref<5x72x128xbf16, #tpu.memory_space<vmem>>, vector<1x72x128xbf16>
    %220 = vector.shape_cast %219 : vector<1x72x128xbf16> to vector<72x128xbf16>
    %cst_187 = arith.constant dense<0.000000e+00> : vector<32x128xf32>
    %221 = tpu.matmul %218, %220, %cst_187 {dimension_numbers = #tpu.dot_dimension_numbers<[1], [0], [0], [1], [0, 0, 1, 1], [], []>} : vector<32x72xbf16>, vector<72x128xbf16>, vector<32x128xf32> -> vector<32x128xf32>
    %222 = arith.addf %216, %221 : vector<32x128xf32>
    %223 = vector.extract_strided_slice %179 {offsets = [8, 0], sizes = [32, 72], strides = [1, 1]} : vector<48x72xf32> to vector<32x72xf32>
    %224 = arith.truncf %223 : vector<32x72xf32> to vector<32x72xbf16>
    %c2_188 = arith.constant 2 : index
    %c0_189 = arith.constant 0 : index
    %c0_190 = arith.constant 0 : index
    %225 = vector.load %arg4[%c2_188, %c0_189, %c0_190] : memref<5x72x128xbf16, #tpu.memory_space<vmem>>, vector<1x72x128xbf16>
    %226 = vector.shape_cast %225 : vector<1x72x128xbf16> to vector<72x128xbf16>
    %cst_191 = arith.constant dense<0.000000e+00> : vector<32x128xf32>
    %227 = tpu.matmul %224, %226, %cst_191 {dimension_numbers = #tpu.dot_dimension_numbers<[1], [0], [0], [1], [0, 0, 1, 1], [], []>} : vector<32x72xbf16>, vector<72x128xbf16>, vector<32x128xf32> -> vector<32x128xf32>
    %228 = arith.addf %222, %227 : vector<32x128xf32>
    %229 = vector.extract_strided_slice %89 {offsets = [16, 0], sizes = [32, 72], strides = [1, 1]} : vector<48x72xf32> to vector<32x72xf32>
    %230 = arith.truncf %229 : vector<32x72xf32> to vector<32x72xbf16>
    %c3_192 = arith.constant 3 : index
    %c0_193 = arith.constant 0 : index
    %c0_194 = arith.constant 0 : index
    %231 = vector.load %arg4[%c3_192, %c0_193, %c0_194] : memref<5x72x128xbf16, #tpu.memory_space<vmem>>, vector<1x72x128xbf16>
    %232 = vector.shape_cast %231 : vector<1x72x128xbf16> to vector<72x128xbf16>
    %cst_195 = arith.constant dense<0.000000e+00> : vector<32x128xf32>
    %233 = tpu.matmul %230, %232, %cst_195 {dimension_numbers = #tpu.dot_dimension_numbers<[1], [0], [0], [1], [0, 0, 1, 1], [], []>} : vector<32x72xbf16>, vector<72x128xbf16>, vector<32x128xf32> -> vector<32x128xf32>
    %234 = arith.addf %228, %233 : vector<32x128xf32>
    %235 = vector.extract_strided_slice %179 {offsets = [16, 0], sizes = [32, 72], strides = [1, 1]} : vector<48x72xf32> to vector<32x72xf32>
    %236 = arith.truncf %235 : vector<32x72xf32> to vector<32x72xbf16>
    %c4_196 = arith.constant 4 : index
    %c0_197 = arith.constant 0 : index
    %c0_198 = arith.constant 0 : index
    %237 = vector.load %arg4[%c4_196, %c0_197, %c0_198] : memref<5x72x128xbf16, #tpu.memory_space<vmem>>, vector<1x72x128xbf16>
    %238 = vector.shape_cast %237 : vector<1x72x128xbf16> to vector<72x128xbf16>
    %cst_199 = arith.constant dense<0.000000e+00> : vector<32x128xf32>
    %239 = tpu.matmul %236, %238, %cst_199 {dimension_numbers = #tpu.dot_dimension_numbers<[1], [0], [0], [1], [0, 0, 1, 1], [], []>} : vector<32x72xbf16>, vector<72x128xbf16>, vector<32x128xf32> -> vector<32x128xf32>
    %240 = arith.addf %234, %239 : vector<32x128xf32>
    %241 = vector.extract_strided_slice %240 {offsets = [0, 0], sizes = [32, 64], strides = [1, 1]} : vector<32x128xf32> to vector<32x64xf32>
    %242 = vector.extract_strided_slice %240 {offsets = [0, 64], sizes = [32, 64], strides = [1, 1]} : vector<32x128xf32> to vector<32x64xf32>
    %243 = arith.maximumf %241, %242 : vector<32x64xf32>
    %244 = arith.maximumf %211, %243 : vector<32x64xf32>
    %c0_200 = arith.constant 0 : index
    %c0_201 = arith.constant 0 : index
    %245 = vector.load %arg5[%c0_200, %c0_201] : memref<1x64xf32, #tpu.memory_space<vmem>>, vector<1x64xf32>
    %246 = vector.broadcast %245 : vector<1x64xf32> to vector<32x64xf32>
    %247 = arith.addf %244, %246 : vector<32x64xf32>
    %cst_202 = arith.constant 0.000000e+00 : f32
    %248 = vector.broadcast %cst_202 : f32 to vector<32x64xf32>
    %249 = arith.maximumf %247, %248 : vector<32x64xf32>
    %250 = vector.extract_strided_slice %249 {offsets = [0, 0], sizes = [8, 64], strides = [1, 1]} : vector<32x64xf32> to vector<8x64xf32>
    %251 = arith.truncf %250 : vector<8x64xf32> to vector<8x64xbf16>
    %c0_203 = arith.constant 0 : index
    %c0_204 = arith.constant 0 : index
    %c0_205 = arith.constant 0 : index
    %252 = vector.load %arg6[%c0_203, %c0_204, %c0_205] : memref<4x64x128xbf16, #tpu.memory_space<vmem>>, vector<1x64x128xbf16>
    %253 = vector.shape_cast %252 : vector<1x64x128xbf16> to vector<64x128xbf16>
    %cst_206 = arith.constant dense<0.000000e+00> : vector<8x128xf32>
    %254 = tpu.matmul %251, %253, %cst_206 {dimension_numbers = #tpu.dot_dimension_numbers<[1], [0], [0], [1], [0, 0, 1, 1], [], []>} : vector<8x64xbf16>, vector<64x128xbf16>, vector<8x128xf32> -> vector<8x128xf32>
    %255 = vector.extract_strided_slice %249 {offsets = [8, 0], sizes = [8, 64], strides = [1, 1]} : vector<32x64xf32> to vector<8x64xf32>
    %256 = arith.truncf %255 : vector<8x64xf32> to vector<8x64xbf16>
    %c1_207 = arith.constant 1 : index
    %c0_208 = arith.constant 0 : index
    %c0_209 = arith.constant 0 : index
    %257 = vector.load %arg6[%c1_207, %c0_208, %c0_209] : memref<4x64x128xbf16, #tpu.memory_space<vmem>>, vector<1x64x128xbf16>
    %258 = vector.shape_cast %257 : vector<1x64x128xbf16> to vector<64x128xbf16>
    %cst_210 = arith.constant dense<0.000000e+00> : vector<8x128xf32>
    %259 = tpu.matmul %256, %258, %cst_210 {dimension_numbers = #tpu.dot_dimension_numbers<[1], [0], [0], [1], [0, 0, 1, 1], [], []>} : vector<8x64xbf16>, vector<64x128xbf16>, vector<8x128xf32> -> vector<8x128xf32>
    %260 = arith.addf %254, %259 : vector<8x128xf32>
    %261 = vector.extract_strided_slice %249 {offsets = [16, 0], sizes = [8, 64], strides = [1, 1]} : vector<32x64xf32> to vector<8x64xf32>
    %262 = arith.truncf %261 : vector<8x64xf32> to vector<8x64xbf16>
    %c2_211 = arith.constant 2 : index
    %c0_212 = arith.constant 0 : index
    %c0_213 = arith.constant 0 : index
    %263 = vector.load %arg6[%c2_211, %c0_212, %c0_213] : memref<4x64x128xbf16, #tpu.memory_space<vmem>>, vector<1x64x128xbf16>
    %264 = vector.shape_cast %263 : vector<1x64x128xbf16> to vector<64x128xbf16>
    %cst_214 = arith.constant dense<0.000000e+00> : vector<8x128xf32>
    %265 = tpu.matmul %262, %264, %cst_214 {dimension_numbers = #tpu.dot_dimension_numbers<[1], [0], [0], [1], [0, 0, 1, 1], [], []>} : vector<8x64xbf16>, vector<64x128xbf16>, vector<8x128xf32> -> vector<8x128xf32>
    %266 = arith.addf %260, %265 : vector<8x128xf32>
    %267 = vector.extract_strided_slice %249 {offsets = [24, 0], sizes = [8, 64], strides = [1, 1]} : vector<32x64xf32> to vector<8x64xf32>
    %268 = arith.truncf %267 : vector<8x64xf32> to vector<8x64xbf16>
    %c3_215 = arith.constant 3 : index
    %c0_216 = arith.constant 0 : index
    %c0_217 = arith.constant 0 : index
    %269 = vector.load %arg6[%c3_215, %c0_216, %c0_217] : memref<4x64x128xbf16, #tpu.memory_space<vmem>>, vector<1x64x128xbf16>
    %270 = vector.shape_cast %269 : vector<1x64x128xbf16> to vector<64x128xbf16>
    %cst_218 = arith.constant dense<0.000000e+00> : vector<8x128xf32>
    %271 = tpu.matmul %268, %270, %cst_218 {dimension_numbers = #tpu.dot_dimension_numbers<[1], [0], [0], [1], [0, 0, 1, 1], [], []>} : vector<8x64xbf16>, vector<64x128xbf16>, vector<8x128xf32> -> vector<8x128xf32>
    %272 = arith.addf %266, %271 : vector<8x128xf32>
    %c0_219 = arith.constant 0 : index
    %c0_220 = arith.constant 0 : index
    %273 = vector.load %arg7[%c0_219, %c0_220] : memref<1x128xf32, #tpu.memory_space<vmem>>, vector<1x128xf32>
    %274 = vector.broadcast %273 : vector<1x128xf32> to vector<8x128xf32>
    %275 = arith.addf %272, %274 : vector<8x128xf32>
    %cst_221 = arith.constant 0.000000e+00 : f32
    %276 = vector.broadcast %cst_221 : f32 to vector<8x128xf32>
    %277 = arith.maximumf %275, %276 : vector<8x128xf32>
    %278 = arith.truncf %277 : vector<8x128xf32> to vector<8x128xbf16>
    %c0_222 = arith.constant 0 : index
    %c0_223 = arith.constant 0 : index
    %279 = vector.load %arg8[%c0_222, %c0_223] : memref<128x128xbf16, #tpu.memory_space<vmem>>, vector<128x128xbf16>
    %cst_224 = arith.constant dense<0.000000e+00> : vector<8x128xf32>
    %280 = tpu.matmul %278, %279, %cst_224 {dimension_numbers = #tpu.dot_dimension_numbers<[1], [0], [0], [1], [0, 0, 1, 1], [], []>} : vector<8x128xbf16>, vector<128x128xbf16>, vector<8x128xf32> -> vector<8x128xf32>
    %c0_225 = arith.constant 0 : index
    %c0_226 = arith.constant 0 : index
    %281 = vector.load %arg9[%c0_225, %c0_226] : memref<1x128xf32, #tpu.memory_space<vmem>>, vector<1x128xf32>
    %282 = vector.broadcast %281 : vector<1x128xf32> to vector<8x128xf32>
    %283 = arith.addf %280, %282 : vector<8x128xf32>
    %cst_227 = arith.constant 0.000000e+00 : f32
    %284 = vector.broadcast %cst_227 : f32 to vector<8x128xf32>
    %285 = arith.maximumf %283, %284 : vector<8x128xf32>
    %286 = arith.truncf %285 : vector<8x128xf32> to vector<8x128xbf16>
    %c0_228 = arith.constant 0 : index
    %c0_229 = arith.constant 0 : index
    %287 = vector.load %arg10[%c0_228, %c0_229] : memref<128x128xbf16, #tpu.memory_space<vmem>>, vector<128x128xbf16>
    %cst_230 = arith.constant dense<0.000000e+00> : vector<8x128xf32>
    %288 = tpu.matmul %286, %287, %cst_230 {dimension_numbers = #tpu.dot_dimension_numbers<[1], [0], [0], [1], [0, 0, 1, 1], [], []>} : vector<8x128xbf16>, vector<128x128xbf16>, vector<8x128xf32> -> vector<8x128xf32>
    %289 = vector.extract_strided_slice %288 {offsets = [0, 0], sizes = [8, 1], strides = [1, 1]} : vector<8x128xf32> to vector<8x1xf32>
    %c0_231 = arith.constant 0 : index
    %c0_232 = arith.constant 0 : index
    %290 = vector.load %arg11[%c0_231, %c0_232] : memref<1x1xf32, #tpu.memory_space<vmem>>, vector<1x1xf32>
    %291 = vector.broadcast %290 : vector<1x1xf32> to vector<8x1xf32>
    %292 = arith.addf %289, %291 : vector<8x1xf32>
    %c0_233 = arith.constant 0 : index
    %c0_234 = arith.constant 0 : index
    %293 = vector.load %arg12[%c0_233, %c0_234] : memref<8x1xf32, #tpu.memory_space<vmem>>, vector<8x1xf32>
    tpu.vector_store %arg12[%c0_233, %c0_234], %292 {strides = array<i32>} : memref<8x1xf32, #tpu.memory_space<vmem>>, vector<8x1xf32>,
    return
  }
  func.func @transform_0(%arg0: i32) -> (i32, i32, i32, i32) {
    %c0_i32 = arith.constant 0 : i32
    %c0_i32_0 = arith.constant 0 : i32
    %c0_i32_1 = arith.constant 0 : i32
    %c0_i32_2 = arith.constant 0 : i32
    return %c0_i32, %c0_i32_0, %arg0, %c0_i32_1 : i32, i32, i32, i32
  }
  func.func @transform_1(%arg0: i32) -> (i32, i32, i32) {
    %c0_i32 = arith.constant 0 : i32
    %c0_i32_0 = arith.constant 0 : i32
    %c0_i32_1 = arith.constant 0 : i32
    %c0_i32_2 = arith.constant 0 : i32
    return %c0_i32, %c0_i32_0, %c0_i32_1 : i32, i32, i32
  }
  func.func @transform_2(%arg0: i32) -> (i32, i32) {
    %c0_i32 = arith.constant 0 : i32
    %c0_i32_0 = arith.constant 0 : i32
    %c0_i32_1 = arith.constant 0 : i32
    return %c0_i32, %c0_i32_0 : i32, i32
  }
  func.func @transform_3(%arg0: i32) -> (i32, i32, i32) {
    %c0_i32 = arith.constant 0 : i32
    %c0_i32_0 = arith.constant 0 : i32
    %c0_i32_1 = arith.constant 0 : i32
    %c0_i32_2 = arith.constant 0 : i32
    return %c0_i32, %c0_i32_0, %c0_i32_1 : i32, i32, i32
  }
  func.func @transform_4(%arg0: i32) -> (i32, i32) {
    %c0_i32 = arith.constant 0 : i32
    %c0_i32_0 = arith.constant 0 : i32
    %c0_i32_1 = arith.constant 0 : i32
    return %c0_i32, %c0_i32_0 : i32, i32
  }
  func.func @transform_5(%arg0: i32) -> (i32, i32, i32) {
    %c0_i32 = arith.constant 0 : i32
    %c0_i32_0 = arith.constant 0 : i32
    %c0_i32_1 = arith.constant 0 : i32
    %c0_i32_2 = arith.constant 0 : i32
    return %c0_i32, %c0_i32_0, %c0_i32_1 : i32, i32, i32
  }
  func.func @transform_6(%arg0: i32) -> (i32, i32) {
    %c0_i32 = arith.constant 0 : i32
    %c0_i32_0 = arith.constant 0 : i32
    %c0_i32_1 = arith.constant 0 : i32
    return %c0_i32, %c0_i32_0 : i32, i32
  }
  func.func @transform_7(%arg0: i32) -> (i32, i32) {
    %c0_i32 = arith.constant 0 : i32
    %c0_i32_0 = arith.constant 0 : i32
    %c0_i32_1 = arith.constant 0 : i32
    return %c0_i32, %c0_i32_0 : i32, i32
  }
  func.func @transform_8(%arg0: i32) -> (i32, i32) {
    %c0_i32 = arith.constant 0 : i32
    %c0_i32_0 = arith.constant 0 : i32
    %c0_i32_1 = arith.constant 0 : i32
    return %c0_i32, %c0_i32_0 : i32, i32
  }
  func.func @transform_9(%arg0: i32) -> (i32, i32) {
    %c0_i32 = arith.constant 0 : i32
    %c0_i32_0 = arith.constant 0 : i32
    %c0_i32_1 = arith.constant 0 : i32
    return %c0_i32, %c0_i32_0 : i32, i32
  }
  func.func @transform_10(%arg0: i32) -> (i32, i32) {
    %c0_i32 = arith.constant 0 : i32
    %c0_i32_0 = arith.constant 0 : i32
    %c0_i32_1 = arith.constant 0 : i32
    return %c0_i32, %c0_i32_0 : i32, i32
  }
  func.func @transform_11(%arg0: i32) -> (i32, i32) {
    %c0_i32 = arith.constant 0 : i32
    %c0_i32_0 = arith.constant 0 : i32
    return %arg0, %c0_i32 : i32, i32
  }
}

</mosaic_0001>

<llo_original>
// kernel: cnn_forward.1
$region0: #{cnn_forward.1}
  #allocation0 [shape = 'u32[]', space=smem, size = 0x4, offset = 0x4, fixed_abs, tag = 'smem constant byte address 0x4 - core index']
  #allocation1 [shape = 'u32[72,128]{1,0:T(1,128)}', space=vmem, size = 0x9000, scoped, tag = 'internal scratch']
  #allocation2 [shape = 'f32[1,1]{1,0:T(1,128)S(1)}', space=vmem, size = 0x200, scoped, tag = 'scoped memory for cnn_forward.1']
  %s0 = inlined_call_operand.vmem [shape: f32[4,7,16,28], index: 0, kind: input, shape index: {}]
  %s1 = inlined_call_operand.vmem [shape: bf16[5,28,144], index: 1, kind: input, shape index: {}]
  %s2 = inlined_call_operand.vmem [shape: f32[1,72], index: 2, kind: input, shape index: {}]
  %s3 = inlined_call_operand.vmem [shape: bf16[5,72,128], index: 3, kind: input, shape index: {}]
  %s4 = inlined_call_operand.vmem [shape: f32[1,64], index: 4, kind: input, shape index: {}]
  %s5 = inlined_call_operand.vmem [shape: bf16[4,64,128], index: 5, kind: input, shape index: {}]
  %s6 = inlined_call_operand.vmem [shape: f32[1,128], index: 6, kind: input, shape index: {}]
  %s7 = inlined_call_operand.vmem [shape: bf16[128,128], index: 7, kind: input, shape index: {}]
  %s8 = inlined_call_operand.vmem [shape: f32[1,128], index: 8, kind: input, shape index: {}]
  %s9 = inlined_call_operand.vmem [shape: bf16[128,128], index: 9, kind: input, shape index: {}]
  %s10 = inlined_call_operand.<no memory space> [shape: f32[1,1], index: 10, kind: input, shape index: {}]
  %s11 = inlined_call_operand.vmem [shape: f32[16,1], index: 11, kind: output, shape index: {}]
  %s12 = sld [smem:[#allocation0]]
  $region115: #{cnn_forward.1} parent=0
    _
  %s14 = ssub.s32 1, %s12
  %s15 = scalar_select 0, %s14, %s12
  %v16 = vstv %s10
  %17 = vst [vmem:[#allocation2] sm:$0x1] %v16
  $region1: #{cnn_forward.1} parent=0
    #allocation3 [shape = 'u8[229376]{0}', space=vmem, size = 0x38000, scoped, tag = 'input window, operand 0']
    loop: start=0, step=1, limit=4
    $region2: #{cnn_forward.1} parent=1 // loop_pre_header
      _
    $region3: #{cnn_forward.1} parent=1 // loop_header
      %s19 = sphi 0, %s23
      %p20 = scmp.ge.s32.totalorder %s19, 4
      %s29 = sphi 0, %s31
      %s32 = sphi 0, %s29
      %s33 = sphi 0, %s32
      %s49 = sphi 0, %s33
      %s53 = sphi 0, %s53
      %s55 = sphi 0, %s53
      %s56 = sphi 0, %s55
      %s70 = sphi 0, %s56
      %s74 = sphi 0, %s74
      %s76 = sphi 0, %s74
      %s77 = sphi 0, %s76
      %s91 = sphi 0, %s77
      %s95 = sphi 0, %s95
      %s97 = sphi 0, %s95
      %s98 = sphi 0, %s97
      %s112 = sphi 0, %s98
      %s116 = sphi 0, %s116
      %s118 = sphi 0, %s116
      %s119 = sphi 0, %s118
      %s133 = sphi 0, %s119
      %s137 = sphi 0, %s137
      %s139 = sphi 0, %s137
      %s140 = sphi 0, %s139
      %s154 = sphi 0, %s140
      %s158 = sphi 0, %s158
      %s160 = sphi 0, %s158
      %s161 = sphi 0, %s160
      %s175 = sphi 0, %s161
      %s179 = sphi 0, %s179
      %s181 = sphi 0, %s179
      %s182 = sphi 0, %s181
      %s196 = sphi 0, %s182
      %s200 = sphi 0, %s200
      %s202 = sphi 0, %s200
      %s203 = sphi 0, %s202
      %s217 = sphi 0, %s203
      %s221 = sphi 0, %s221
      %s223 = sphi 0, %s221
      %s224 = sphi 0, %s223
      %s238 = sphi 0, %s224
      %s242 = sphi 0, %s242
      %s244 = sphi 0, %s242
      %s245 = sphi 0, %s244
      %s259 = sphi 0, %s245
      %s265 = sphi 0, %s267
      %s268 = sphi 0, %s265
      %s269 = sphi 0, %s268
      %s285 = sphi 0, %s269
    $region4: #{cnn_forward.1} parent=1 // loop_header_branch
      %22 = sbr.rel (%p20) target = $region8
    $region5: #{cnn_forward.1} parent=1 // loop_body
      %s24 = ssub.s32 %s19, 1
      %s25 = ssub.s32 %s19, 2
      %s26 = sadd.s32 %s19, 1
      %s27 = ssub.s32 %s19, %s26
      %p28 = scmp.eq.s32.totalorder %s27, 0
      %s30 = sadd.s32 %s29, 1
      %s31 = scalar_select %p28, %s29, %s30
      %p34 = pneg %p28
      %p35 = scmp.eq.s32.totalorder %s19, 1
      %p36 = por %p34, %p35
      %p37 = scmp.ne.s32.totalorder %s29, %s32
      %p38 = scmp.eq.s32.totalorder %s19, 0
      %p39 = por %p37, %p38
      %p40 = scmp.ne.s32.totalorder %s29, %s32
      %p41 = scmp.eq.s32.totalorder %s24, 1
      %p42 = por %p40, %p41
      %p43 = scmp.ne.s32.totalorder %s32, %s33
      %p44 = scmp.eq.s32.totalorder %s24, 0
      %p45 = por %p43, %p44
      %p46 = scmp.ne.s32.totalorder %s32, %s33
      %p47 = scmp.eq.s32.totalorder %s25, 1
      %p48 = por %p46, %p47
      %p50 = scmp.ne.s32.totalorder %s33, %s49
      %p51 = scmp.eq.s32.totalorder %s25, 0
      %p52 = por %p50, %p51
      %s54 = sadd.s32 %s53, 1
      %p57 = scmp.eq.s32.totalorder %s19, 1
      %p58 = scmp.ne.s32.totalorder %s53, %s55
      %p59 = scmp.eq.s32.totalorder %s19, 0
      %p60 = por %p58, %p59
      %p61 = scmp.ne.s32.totalorder %s53, %s55
      %p62 = scmp.eq.s32.totalorder %s24, 1
      %p63 = por %p61, %p62
      %p64 = scmp.ne.s32.totalorder %s55, %s56
      %p65 = scmp.eq.s32.totalorder %s24, 0
      %p66 = por %p64, %p65
      %p67 = scmp.ne.s32.totalorder %s55, %s56
      %p68 = scmp.eq.s32.totalorder %s25, 1
      %p69 = por %p67, %p68
      %p71 = scmp.ne.s32.totalorder %s56, %s70
      %p72 = scmp.eq.s32.totalorder %s25, 0
      %p73 = por %p71, %p72
      %s75 = sadd.s32 %s74, 1
      %p78 = scmp.eq.s32.totalorder %s19, 1
      %p79 = scmp.ne.s32.totalorder %s74, %s76
      %p80 = scmp.eq.s32.totalorder %s19, 0
      %p81 = por %p79, %p80
      %p82 = scmp.ne.s32.totalorder %s74, %s76
      %p83 = scmp.eq.s32.totalorder %s24, 1
      %p84 = por %p82, %p83
      %p85 = scmp.ne.s32.totalorder %s76, %s77
      %p86 = scmp.eq.s32.totalorder %s24, 0
      %p87 = por %p85, %p86
      %p88 = scmp.ne.s32.totalorder %s76, %s77
      %p89 = scmp.eq.s32.totalorder %s25, 1
      %p90 = por %p88, %p89
      %p92 = scmp.ne.s32.totalorder %s77, %s91
      %p93 = scmp.eq.s32.totalorder %s25, 0
      %p94 = por %p92, %p93
      %s96 = sadd.s32 %s95, 1
      %p99 = scmp.eq.s32.totalorder %s19, 1
      %p100 = scmp.ne.s32.totalorder %s95, %s97
      %p101 = scmp.eq.s32.totalorder %s19, 0
      %p102 = por %p100, %p101
      %p103 = scmp.ne.s32.totalorder %s95, %s97
      %p104 = scmp.eq.s32.totalorder %s24, 1
      %p105 = por %p103, %p104
      %p106 = scmp.ne.s32.totalorder %s97, %s98
      %p107 = scmp.eq.s32.totalorder %s24, 0
      %p108 = por %p106, %p107
      %p109 = scmp.ne.s32.totalorder %s97, %s98
      %p110 = scmp.eq.s32.totalorder %s25, 1
      %p111 = por %p109, %p110
      %p113 = scmp.ne.s32.totalorder %s98, %s112
      %p114 = scmp.eq.s32.totalorder %s25, 0
      %p115 = por %p113, %p114
      %s117 = sadd.s32 %s116, 1
      %p120 = scmp.eq.s32.totalorder %s19, 1
      %p121 = scmp.ne.s32.totalorder %s116, %s118
      %p122 = scmp.eq.s32.totalorder %s19, 0
      %p123 = por %p121, %p122
      %p124 = scmp.ne.s32.totalorder %s116, %s118
      %p125 = scmp.eq.s32.totalorder %s24, 1
      %p126 = por %p124, %p125
      %p127 = scmp.ne.s32.totalorder %s118, %s119
      %p128 = scmp.eq.s32.totalorder %s24, 0
      %p129 = por %p127, %p128
      %p130 = scmp.ne.s32.totalorder %s118, %s119
      %p131 = scmp.eq.s32.totalorder %s25, 1
      %p132 = por %p130, %p131
      %p134 = scmp.ne.s32.totalorder %s119, %s133
      %p135 = scmp.eq.s32.totalorder %s25, 0
      %p136 = por %p134, %p135
      %s138 = sadd.s32 %s137, 1
      %p141 = scmp.eq.s32.totalorder %s19, 1
      %p142 = scmp.ne.s32.totalorder %s137, %s139
      %p143 = scmp.eq.s32.totalorder %s19, 0
      %p144 = por %p142, %p143
      %p145 = scmp.ne.s32.totalorder %s137, %s139
      %p146 = scmp.eq.s32.totalorder %s24, 1
      %p147 = por %p145, %p146
      %p148 = scmp.ne.s32.totalorder %s139, %s140
      %p149 = scmp.eq.s32.totalorder %s24, 0
      %p150 = por %p148, %p149
      %p151 = scmp.ne.s32.totalorder %s139, %s140
      %p152 = scmp.eq.s32.totalorder %s25, 1
      %p153 = por %p151, %p152
      %p155 = scmp.ne.s32.totalorder %s140, %s154
      %p156 = scmp.eq.s32.totalorder %s25, 0
      %p157 = por %p155, %p156
      %s159 = sadd.s32 %s158, 1
      %p162 = scmp.eq.s32.totalorder %s19, 1
      %p163 = scmp.ne.s32.totalorder %s158, %s160
      %p164 = scmp.eq.s32.totalorder %s19, 0
      %p165 = por %p163, %p164
      %p166 = scmp.ne.s32.totalorder %s158, %s160
      %p167 = scmp.eq.s32.totalorder %s24, 1
      %p168 = por %p166, %p167
      %p169 = scmp.ne.s32.totalorder %s160, %s161
      %p170 = scmp.eq.s32.totalorder %s24, 0
      %p171 = por %p169, %p170
      %p172 = scmp.ne.s32.totalorder %s160, %s161
      %p173 = scmp.eq.s32.totalorder %s25, 1
      %p174 = por %p172, %p173
      %p176 = scmp.ne.s32.totalorder %s161, %s175
      %p177 = scmp.eq.s32.totalorder %s25, 0
      %p178 = por %p176, %p177
      %s180 = sadd.s32 %s179, 1
      %p183 = scmp.eq.s32.totalorder %s19, 1
      %p184 = scmp.ne.s32.totalorder %s179, %s181
      %p185 = scmp.eq.s32.totalorder %s19, 0
      %p186 = por %p184, %p185
      %p187 = scmp.ne.s32.totalorder %s179, %s181
      %p188 = scmp.eq.s32.totalorder %s24, 1
      %p189 = por %p187, %p188
      %p190 = scmp.ne.s32.totalorder %s181, %s182
      %p191 = scmp.eq.s32.totalorder %s24, 0
      %p192 = por %p190, %p191
      %p193 = scmp.ne.s32.totalorder %s181, %s182
      %p194 = scmp.eq.s32.totalorder %s25, 1
      %p195 = por %p193, %p194
      %p197 = scmp.ne.s32.totalorder %s182, %s196
      %p198 = scmp.eq.s32.totalorder %s25, 0
      %p199 = por %p197, %p198
      %s201 = sadd.s32 %s200, 1
      %p204 = scmp.eq.s32.totalorder %s19, 1
      %p205 = scmp.ne.s32.totalorder %s200, %s202
      %p206 = scmp.eq.s32.totalorder %s19, 0
      %p207 = por %p205, %p206
      %p208 = scmp.ne.s32.totalorder %s200, %s202
      %p209 = scmp.eq.s32.totalorder %s24, 1
      %p210 = por %p208, %p209
      %p211 = scmp.ne.s32.totalorder %s202, %s203
      %p212 = scmp.eq.s32.totalorder %s24, 0
      %p213 = por %p211, %p212
      %p214 = scmp.ne.s32.totalorder %s202, %s203
      %p215 = scmp.eq.s32.totalorder %s25, 1
      %p216 = por %p214, %p215
      %p218 = scmp.ne.s32.totalorder %s203, %s217
      %p219 = scmp.eq.s32.totalorder %s25, 0
      %p220 = por %p218, %p219
      %s222 = sadd.s32 %s221, 1
      %p225 = scmp.eq.s32.totalorder %s19, 1
      %p226 = scmp.ne.s32.totalorder %s221, %s223
      %p227 = scmp.eq.s32.totalorder %s19, 0
      %p228 = por %p226, %p227
      %p229 = scmp.ne.s32.totalorder %s221, %s223
      %p230 = scmp.eq.s32.totalorder %s24, 1
      %p231 = por %p229, %p230
      %p232 = scmp.ne.s32.totalorder %s223, %s224
      %p233 = scmp.eq.s32.totalorder %s24, 0
      %p234 = por %p232, %p233
      %p235 = scmp.ne.s32.totalorder %s223, %s224
      %p236 = scmp.eq.s32.totalorder %s25, 1
      %p237 = por %p235, %p236
      %p239 = scmp.ne.s32.totalorder %s224, %s238
      %p240 = scmp.eq.s32.totalorder %s25, 0
      %p241 = por %p239, %p240
      %s243 = sadd.s32 %s242, 1
      %p246 = scmp.eq.s32.totalorder %s19, 1
      %p247 = scmp.ne.s32.totalorder %s242, %s244
      %p248 = scmp.eq.s32.totalorder %s19, 0
      %p249 = por %p247, %p248
      %p250 = scmp.ne.s32.totalorder %s242, %s244
      %p251 = scmp.eq.s32.totalorder %s24, 1
      %p252 = por %p250, %p251
      %p253 = scmp.ne.s32.totalorder %s244, %s245
      %p254 = scmp.eq.s32.totalorder %s24, 0
      %p255 = por %p253, %p254
      %p256 = scmp.ne.s32.totalorder %s244, %s245
      %p257 = scmp.eq.s32.totalorder %s25, 1
      %p258 = por %p256, %p257
      %p260 = scmp.ne.s32.totalorder %s245, %s259
      %p261 = scmp.eq.s32.totalorder %s25, 0
      %p262 = por %p260, %p261
      %s263 = ssub.s32 %s19, %s26
      %p264 = scmp.eq.s32.totalorder %s263, 0
      %s266 = sadd.s32 %s265, 1
      %s267 = scalar_select %p264, %s265, %s266
      %p270 = pneg %p264
      %p271 = scmp.eq.s32.totalorder %s19, 1
      %p272 = por %p270, %p271
      %p273 = scmp.ne.s32.totalorder %s265, %s268
      %p274 = scmp.eq.s32.totalorder %s19, 0
      %p275 = por %p273, %p274
      %p276 = scmp.ne.s32.totalorder %s265, %s268
      %p277 = scmp.eq.s32.totalorder %s24, 1
      %p278 = por %p276, %p277
      %p279 = scmp.ne.s32.totalorder %s268, %s269
      %p280 = scmp.eq.s32.totalorder %s24, 0
      %p281 = por %p279, %p280
      %p282 = scmp.ne.s32.totalorder %s268, %s269
      %p283 = scmp.eq.s32.totalorder %s25, 1
      %p284 = por %p282, %p283
      %p286 = scmp.ne.s32.totalorder %s269, %s285
      %p287 = scmp.eq.s32.totalorder %s25, 0
      %p288 = por %p286, %p287
      %p289 = scmp.le.s32.totalorder 1, %s19
      %p290 = scmp.lt.s32.totalorder %s19, 3
      %p291 = pnand %p289, %p290
      %p292 = pneg %p291
      // Predicated region
      $region9: #{cnn_forward.1} parent=5 // pred_check
        _
      $region10: #{cnn_forward.1} parent=5 // pred_check_branch
        %294 = sbr.rel (%p291) target = $region12
      $region11: #{cnn_forward.1} parent=5 // pred_region
        %s295 = ssub.s32 %s19, 1
        // Predicated region
        $region13: #{cnn_forward.1} parent=11 // pred_check
          %p296 = pneg %p66
        $region14: #{cnn_forward.1} parent=11 // pred_check_branch
          %298 = sbr.rel (%p296) target = $region16
        $region15: #{cnn_forward.1} parent=11 // pred_region
          _
        $region16: #{cnn_forward.1} parent=11 // pred_fallthru
          _
        // Predicated region
        $region17: #{cnn_forward.1} parent=11 // pred_check
          %p299 = pneg %p87
        $region18: #{cnn_forward.1} parent=11 // pred_check_branch
          %301 = sbr.rel (%p299) target = $region20
        $region19: #{cnn_forward.1} parent=11 // pred_region
          _
        $region20: #{cnn_forward.1} parent=11 // pred_fallthru
          _
        // Predicated region
        $region21: #{cnn_forward.1} parent=11 // pred_check
          %p302 = pneg %p108
        $region22: #{cnn_forward.1} parent=11 // pred_check_branch
          %304 = sbr.rel (%p302) target = $region24
        $region23: #{cnn_forward.1} parent=11 // pred_region
          _
        $region24: #{cnn_forward.1} parent=11 // pred_fallthru
          _
        // Predicated region
        $region25: #{cnn_forward.1} parent=11 // pred_check
          %p305 = pneg %p129
        $region26: #{cnn_forward.1} parent=11 // pred_check_branch
          %307 = sbr.rel (%p305) target = $region28
        $region27: #{cnn_forward.1} parent=11 // pred_region
          _
        $region28: #{cnn_forward.1} parent=11 // pred_fallthru
          _
        // Predicated region
        $region29: #{cnn_forward.1} parent=11 // pred_check
          %p308 = pneg %p150
        $region30: #{cnn_forward.1} parent=11 // pred_check_branch
          %310 = sbr.rel (%p308) target = $region32
        $region31: #{cnn_forward.1} parent=11 // pred_region
          _
        $region32: #{cnn_forward.1} parent=11 // pred_fallthru
          _
        // Predicated region
        $region33: #{cnn_forward.1} parent=11 // pred_check
          %p311 = pneg %p171
        $region34: #{cnn_forward.1} parent=11 // pred_check_branch
          %313 = sbr.rel (%p311) target = $region36
        $region35: #{cnn_forward.1} parent=11 // pred_region
          _
        $region36: #{cnn_forward.1} parent=11 // pred_fallthru
          _
        // Predicated region
        $region37: #{cnn_forward.1} parent=11 // pred_check
          %p314 = pneg %p192
        $region38: #{cnn_forward.1} parent=11 // pred_check_branch
          %316 = sbr.rel (%p314) target = $region40
        $region39: #{cnn_forward.1} parent=11 // pred_region
          _
        $region40: #{cnn_forward.1} parent=11 // pred_fallthru
          _
        // Predicated region
        $region41: #{cnn_forward.1} parent=11 // pred_check
          %p317 = pneg %p213
        $region42: #{cnn_forward.1} parent=11 // pred_check_branch
          %319 = sbr.rel (%p317) target = $region44
        $region43: #{cnn_forward.1} parent=11 // pred_region
          _
        $region44: #{cnn_forward.1} parent=11 // pred_fallthru
          _
        // Predicated region
        $region45: #{cnn_forward.1} parent=11 // pred_check
          %p320 = pneg %p234
        $region46: #{cnn_forward.1} parent=11 // pred_check_branch
          %322 = sbr.rel (%p320) target = $region48
        $region47: #{cnn_forward.1} parent=11 // pred_region
          _
        $region48: #{cnn_forward.1} parent=11 // pred_fallthru
          _
        // Predicated region
        $region49: #{cnn_forward.1} parent=11 // pred_check
          %p323 = pneg %p255
        $region50: #{cnn_forward.1} parent=11 // pred_check_branch
          %325 = sbr.rel (%p323) target = $region52
        $region51: #{cnn_forward.1} parent=11 // pred_region
          _
        $region52: #{cnn_forward.1} parent=11 // pred_fallthru
          _
      $region12: #{cnn_forward.1} parent=5 // pred_fallthru
        _
      %p326 = scmp.lt.s32.totalorder %s19, 2
      // Predicated region
      $region53: #{cnn_forward.1} parent=5 // pred_check
        %p327 = pneg %p326
      $region54: #{cnn_forward.1} parent=5 // pred_check_branch
        %329 = sbr.rel (%p327) target = $region56
      $region55: #{cnn_forward.1} parent=5 // pred_region
        // Predicated region
        $region57: #{cnn_forward.1} parent=55 // pred_check
          %p330 = pneg %p39
        $region58: #{cnn_forward.1} parent=55 // pred_check_branch
          %332 = sbr.rel (%p330) target = $region60
        $region59: #{cnn_forward.1} parent=55 // pred_region
          %s333 = sand.u32 %s29, 1
          %s334 = sand.u32 %s29, 1
          %s335 = smul.addr %s334, 224
          %s336 = scalar_lea.vmem [#allocation3], %s335
          %s337 = smul.addr %s19, 8
          %s338 = scalar_lea.vmem %s0, %s337
          // Predicated region
          $region61: #{cnn_forward.1} parent=59 // pred_check
            _
          $region62: #{cnn_forward.1} parent=59 // pred_check_branch
            %340 = sbr.rel (0) target = $region64
          $region63: #{cnn_forward.1} parent=59 // pred_region
            // Predicated region
            $region65: #{cnn_forward.1} parent=63 // pred_check
              _
            $region66: #{cnn_forward.1} parent=63 // pred_check_branch
              %342 = sbr.rel (0) target = $region68
            $region67: #{cnn_forward.1} parent=63 // pred_region
              // Predicated region
              $region80: #{cnn_forward.1} parent=67 // pred_check
                _
              $region81: #{cnn_forward.1} parent=67 // pred_check_branch
                %412 = sbr.rel (0) target = $region83
              $region82: #{cnn_forward.1} parent=67 // pred_region
                loop: start=0, step=1, limit=1
                $region84: #{cnn_forward.1} parent=82 // loop_pre_header
                  _
                $region85: #{cnn_forward.1} parent=82 // loop_header
                  %s414 = sphi 0, %s418
                  %p415 = scmp.ge.s32.totalorder %s414, 1
                  %s419 = sphi %s338, %s338
                  %s420 = sphi %s336, %s336
                $region86: #{cnn_forward.1} parent=82 // loop_header_branch
                  %417 = sbr.rel (%p415) target = $region90
                $region87: #{cnn_forward.1} parent=82 // loop_body
                  %v421 = vld [vmem:[%s419] sm:$0xff]
                  %422 = vst [vmem:[%s420] sm:$0xff] %v421
                  %v423 = vld [vmem:[%s419 + $0x10] sm:$0xff]
                  %424 = vst [vmem:[%s420 + $0x8] sm:$0xff] %v423
                  %v425 = vld [vmem:[%s419 + $0x20] sm:$0xff]
                  %426 = vst [vmem:[%s420 + $0x10] sm:$0xff] %v425
                  %v427 = vld [vmem:[%s419 + $0x30] sm:$0xff]
                  %428 = vst [vmem:[%s420 + $0x18] sm:$0xff] %v427
                  %v429 = vld [vmem:[%s419 + $0x40] sm:$0xff]
                  %430 = vst [vmem:[%s420 + $0x20] sm:$0xff] %v429
                  %v431 = vld [vmem:[%s419 + $0x50] sm:$0xff]
                  %432 = vst [vmem:[%s420 + $0x28] sm:$0xff] %v431
                  %v433 = vld [vmem:[%s419 + $0x60] sm:$0xff]
                  %434 = vst [vmem:[%s420 + $0x30] sm:$0xff] %v433
                  %v435 = vld [vmem:[%s419 + $0x70] sm:$0xff]
                  %436 = vst [vmem:[%s420 + $0x38] sm:$0xff] %v435
                  %v437 = vld [vmem:[%s419 + $0x80] sm:$0xff]
                  %438 = vst [vmem:[%s420 + $0x40] sm:$0xff] %v437
                  %v439 = vld [vmem:[%s419 + $0x90] sm:$0xff]
                  %440 = vst [vmem:[%s420 + $0x48] sm:$0xff] %v439
                  %v441 = vld [vmem:[%s419 + $0xa0] sm:$0xff]
                  %442 = vst [vmem:[%s420 + $0x50] sm:$0xff] %v441
                  %v443 = vld [vmem:[%s419 + $0xb0] sm:$0xff]
                  %444 = vst [vmem:[%s420 + $0x58] sm:$0xff] %v443
                  %v445 = vld [vmem:[%s419 + $0xc0] sm:$0xff]
                  %446 = vst [vmem:[%s420 + $0x60] sm:$0xff] %v445
                  %v447 = vld [vmem:[%s419 + $0xd0] sm:$0xff]
                  %448 = vst [vmem:[%s420 + $0x68] sm:$0xff] %v447
                  %v449 = vld [vmem:[%s419 + $0xe0] sm:$0xff]
                  %450 = vst [vmem:[%s420 + $0x70] sm:$0xff] %v449
                  %v451 = vld [vmem:[%s419 + $0xf0] sm:$0xff]
                  %452 = vst [vmem:[%s420 + $0x78] sm:$0xff] %v451
                  %v453 = vld [vmem:[%s419 + $0x100] sm:$0xff]
                  %454 = vst [vmem:[%s420 + $0x80] sm:$0xff] %v453
                  %v455 = vld [vmem:[%s419 + $0x110] sm:$0xff]
                  %456 = vst [vmem:[%s420 + $0x88] sm:$0xff] %v455
                  %v457 = vld [vmem:[%s419 + $0x120] sm:$0xff]
                  %458 = vst [vmem:[%s420 + $0x90] sm:$0xff] %v457
                  %v459 = vld [vmem:[%s419 + $0x130] sm:$0xff]
                  %460 = vst [vmem:[%s420 + $0x98] sm:$0xff] %v459
                  %v461 = vld [vmem:[%s419 + $0x140] sm:$0xff]
                  %462 = vst [vmem:[%s420 + $0xa0] sm:$0xff] %v461
                  %v463 = vld [vmem:[%s419 + $0x150] sm:$0xff]
                  %464 = vst [vmem:[%s420 + $0xa8] sm:$0xff] %v463
                  %v465 = vld [vmem:[%s419 + $0x160] sm:$0xff]
                  %466 = vst [vmem:[%s420 + $0xb0] sm:$0xff] %v465
                  %v467 = vld [vmem:[%s419 + $0x170] sm:$0xff]
                  %468 = vst [vmem:[%s420 + $0xb8] sm:$0xff] %v467
                  %v469 = vld [vmem:[%s419 + $0x180] sm:$0xff]
                  %470 = vst [vmem:[%s420 + $0xc0] sm:$0xff] %v469
                  %v471 = vld [vmem:[%s419 + $0x190] sm:$0xff]
                  %472 = vst [vmem:[%s420 + $0xc8] sm:$0xff] %v471
                  %v473 = vld [vmem:[%s419 + $0x1a0] sm:$0xff]
                  %474 = vst [vmem:[%s420 + $0xd0] sm:$0xff] %v473
                  %v475 = vld [vmem:[%s419 + $0x1b0] sm:$0xff]
                  %476 = vst [vmem:[%s420 + $0xd8] sm:$0xff] %v475
                $region88: #{cnn_forward.1} parent=82 // loop_footer
                  %s418 = sadd.s32 1, %s414
                $region89: #{cnn_forward.1} parent=82 // loop_footer_branch
                  %413 = sbr.rel target = $region85
                $region90: #{cnn_forward.1} parent=82 // loop_exit
                  _
              $region83: #{cnn_forward.1} parent=67 // pred_fallthru
                _
              // Predicated region
              $region91: #{cnn_forward.1} parent=67 // pred_check
                _
              $region92: #{cnn_forward.1} parent=67 // pred_check_branch
                %478 = sbr.rel target = $region94
              $region93: #{cnn_forward.1} parent=67 // pred_region
                _
              $region94: #{cnn_forward.1} parent=67 // pred_fallthru
                _
            $region68: #{cnn_forward.1} parent=63 // pred_fallthru
              _
            // Predicated region
            $region69: #{cnn_forward.1} parent=63 // pred_check
              _
            $region70: #{cnn_forward.1} parent=63 // pred_check_branch
              %344 = sbr.rel target = $region72
            $region71: #{cnn_forward.1} parent=63 // pred_region
              %s346 = ssub.s32 256, 1
              loop: start=0, step=1, limit=1
              $region73: #{cnn_forward.1} parent=71 // loop_pre_header
                _
              $region74: #{cnn_forward.1} parent=71 // loop_header
                %s348 = sphi 0, %s352
                %p349 = scmp.ge.s32.totalorder %s348, 1
                %s353 = sphi %s338, %s338
                %s354 = sphi %s336, %s336
              $region75: #{cnn_forward.1} parent=71 // loop_header_branch
                %351 = sbr.rel (%p349) target = $region79
              $region76: #{cnn_forward.1} parent=71 // loop_body
                %v355 = vld [vmem:[%s353] sm:%s346]
                %356 = vst [vmem:[%s354] sm:%s346] %v355
                %v357 = vld [vmem:[%s353 + $0x10] sm:%s346]
                %358 = vst [vmem:[%s354 + $0x8] sm:%s346] %v357
                %v359 = vld [vmem:[%s353 + $0x20] sm:%s346]
                %360 = vst [vmem:[%s354 + $0x10] sm:%s346] %v359
                %v361 = vld [vmem:[%s353 + $0x30] sm:%s346]
                %362 = vst [vmem:[%s354 + $0x18] sm:%s346] %v361
                %v363 = vld [vmem:[%s353 + $0x40] sm:%s346]
                %364 = vst [vmem:[%s354 + $0x20] sm:%s346] %v363
                %v365 = vld [vmem:[%s353 + $0x50] sm:%s346]
                %366 = vst [vmem:[%s354 + $0x28] sm:%s346] %v365
                %v367 = vld [vmem:[%s353 + $0x60] sm:%s346]
                %368 = vst [vmem:[%s354 + $0x30] sm:%s346] %v367
                %v369 = vld [vmem:[%s353 + $0x70] sm:%s346]
                %370 = vst [vmem:[%s354 + $0x38] sm:%s346] %v369
                %v371 = vld [vmem:[%s353 + $0x80] sm:%s346]
                %372 = vst [vmem:[%s354 + $0x40] sm:%s346] %v371
                %v373 = vld [vmem:[%s353 + $0x90] sm:%s346]
                %374 = vst [vmem:[%s354 + $0x48] sm:%s346] %v373
                %v375 = vld [vmem:[%s353 + $0xa0] sm:%s346]
                %376 = vst [vmem:[%s354 + $0x50] sm:%s346] %v375
                %v377 = vld [vmem:[%s353 + $0xb0] sm:%s346]
                %378 = vst [vmem:[%s354 + $0x58] sm:%s346] %v377
                %v379 = vld [vmem:[%s353 + $0xc0] sm:%s346]
                %380 = vst [vmem:[%s354 + $0x60] sm:%s346] %v379
                %v381 = vld [vmem:[%s353 + $0xd0] sm:%s346]
                %382 = vst [vmem:[%s354 + $0x68] sm:%s346] %v381
                %v383 = vld [vmem:[%s353 + $0xe0] sm:%s346]
                %384 = vst [vmem:[%s354 + $0x70] sm:%s346] %v383
                %v385 = vld [vmem:[%s353 + $0xf0] sm:%s346]
                %386 = vst [vmem:[%s354 + $0x78] sm:%s346] %v385
                %v387 = vld [vmem:[%s353 + $0x100] sm:%s346]
                %388 = vst [vmem:[%s354 + $0x80] sm:%s346] %v387
                %v389 = vld [vmem:[%s353 + $0x110] sm:%s346]
                %390 = vst [vmem:[%s354 + $0x88] sm:%s346] %v389
                %v391 = vld [vmem:[%s353 + $0x120] sm:%s346]
                %392 = vst [vmem:[%s354 + $0x90] sm:%s346] %v391
                %v393 = vld [vmem:[%s353 + $0x130] sm:%s346]
                %394 = vst [vmem:[%s354 + $0x98] sm:%s346] %v393
                %v395 = vld [vmem:[%s353 + $0x140] sm:%s346]
                %396 = vst [vmem:[%s354 + $0xa0] sm:%s346] %v395
                %v397 = vld [vmem:[%s353 + $0x150] sm:%s346]
                %398 = vst [vmem:[%s354 + $0xa8] sm:%s346] %v397
                %v399 = vld [vmem:[%s353 + $0x160] sm:%s346]
                %400 = vst [vmem:[%s354 + $0xb0] sm:%s346] %v399
                %v401 = vld [vmem:[%s353 + $0x170] sm:%s346]
                %402 = vst [vmem:[%s354 + $0xb8] sm:%s346] %v401
                %v403 = vld [vmem:[%s353 + $0x180] sm:%s346]
                %404 = vst [vmem:[%s354 + $0xc0] sm:%s346] %v403
                %v405 = vld [vmem:[%s353 + $0x190] sm:%s346]
                %406 = vst [vmem:[%s354 + $0xc8] sm:%s346] %v405
                %v407 = vld [vmem:[%s353 + $0x1a0] sm:%s346]
                %408 = vst [vmem:[%s354 + $0xd0] sm:%s346] %v407
                %v409 = vld [vmem:[%s353 + $0x1b0] sm:%s346]
                %410 = vst [vmem:[%s354 + $0xd8] sm:%s346] %v409
              $region77: #{cnn_forward.1} parent=71 // loop_footer
                %s352 = sadd.s32 1, %s348
              $region78: #{cnn_forward.1} parent=71 // loop_footer_branch
                %347 = sbr.rel target = $region74
              $region79: #{cnn_forward.1} parent=71 // loop_exit
                _
            $region72: #{cnn_forward.1} parent=63 // pred_fallthru
              _
          $region64: #{cnn_forward.1} parent=59 // pred_fallthru
            _
          %479 = vnop
        $region60: #{cnn_forward.1} parent=55 // pred_fallthru
          _
      $region56: #{cnn_forward.1} parent=5 // pred_fallthru
        _
      %p480 = scmp.le.s32.totalorder 1, %s19
      %p481 = scmp.lt.s32.totalorder %s19, 3
      %p482 = pnand %p480, %p481
      %p483 = pneg %p482
      // Predicated region
      $region95: #{cnn_forward.1} parent=5 // pred_check
        _
      $region96: #{cnn_forward.1} parent=5 // pred_check_branch
        %485 = sbr.rel (%p482) target = $region98
      $region97: #{cnn_forward.1} parent=5 // pred_region
        %s486 = ssub.s32 %s19, 1
        %s487 = sand.u32 %s32, 1
        %s488 = sand.u32 %s32, 1
        %s489 = smul.addr %s488, 224
        %s490 = scalar_lea.vmem [#allocation3], %s489
        // Predicated region
        $region99: #{cnn_forward.1} parent=97 // pred_check
          %p491 = pneg %p45
        $region100: #{cnn_forward.1} parent=97 // pred_check_branch
          %493 = sbr.rel (%p491) target = $region102
        $region101: #{cnn_forward.1} parent=97 // pred_region
          _
        $region102: #{cnn_forward.1} parent=97 // pred_fallthru
          _
        %s494 = sand.u32 %s32, 1
        %s495 = sand.u32 %s32, 1
        %s496 = smul.addr %s495, 224
        %s497 = scalar_lea.vmem [#allocation3], %s496
        %p498 = pneg %p45
        %p499 = pneg %p42
        %p500 = pneg %p66
        %p501 = pneg %p63
        %p502 = pneg %p87
        %p503 = pneg %p84
        %p504 = pneg %p108
        %p505 = pneg %p105
        %p506 = pneg %p129
        %p507 = pneg %p126
        %p508 = pneg %p150
        %p509 = pneg %p147
        %p510 = pneg %p171
        %p511 = pneg %p168
        %p512 = pneg %p192
        %p513 = pneg %p189
        %p514 = pneg %p213
        %p515 = pneg %p210
        %p516 = pneg %p234
        %p517 = pneg %p231
        %p518 = pneg %p255
        %p519 = pneg %p252
        %p520 = pneg %p281
        %p521 = pneg %p278
        %p522 = scmp.lt.s32.totalorder %s24, 1
        %s523 = scalar_select %p522, %s24, 1
        %s524 = smul.addr %s523, 8
        %s525 = scalar_lea.vmem %s11, %s524
        %p526 = scmp.lt.s32.totalorder %s24, 1
        %s527 = scalar_select %p526, %s24, 1
        %s528 = smul.addr %s527, 8
        %s529 = scalar_lea.vmem %s11, %s528
        %v531 = vld [vmem:[%s490] sm:$0xff]
        %v532 = vld [vmem:[%s490 + $0x8] sm:$0xff]
        %v533 = vld [vmem:[%s490 + $0x10] sm:$0xff]
        %v534 = vld [vmem:[%s490 + $0x18] sm:$0xff]
        %v535 = vld [vmem:[%s490 + $0x20] sm:$0xff]
        %v536 = vld [vmem:[%s490 + $0x28] sm:$0xff]
        %v537 = vpack.c.bf16 %v532, %v531
        %v538 = vpack.c.bf16 %v534, %v533
        %v539 = vpack.c.bf16 %v536, %v535
        %v540 = vld [vmem:[%s1] sm:$0xff]
        %v541 = vld [vmem:[%s1 + $0x8] sm:$0xff]
        %v542 = vld [vmem:[%s1 + $0x10] sm:$0xff]
        %v543 = vld [vmem:[%s1 + $0x18] sm:$0x33]
        %s544 = scalar_lea.vmem %s490, 56 [#allocation3]
        %v545 = vld [vmem:[%s544] sm:$0xff]
        %v546 = vld [vmem:[%s544 + $0x8] sm:$0xff]
        %v547 = vld [vmem:[%s544 + $0x10] sm:$0xff]
        %v548 = vld [vmem:[%s544 + $0x18] sm:$0xff]
        %v549 = vld [vmem:[%s544 + $0x20] sm:$0xff]
        %v550 = vld [vmem:[%s544 + $0x28] sm:$0xff]
        %v551 = vpack.c.bf16 %v546, %v545
        %v552 = vpack.c.bf16 %v548, %v547
        %v553 = vpack.c.bf16 %v550, %v549
        %s554 = scalar_lea.vmem %s1, 32
        %v555 = vld [vmem:[%s554] sm:$0xff]
        %v556 = vld [vmem:[%s554 + $0x8] sm:$0xff]
        %v557 = vld [vmem:[%s554 + $0x10] sm:$0xff]
        %v558 = vld [vmem:[%s554 + $0x18] sm:$0x33]
        %v563 = vunpack.c.l.b16 %v555
        %v564 = vunpack.c.h.b16 %v555
        %v565 = vunpack.c.l.b16 %v556
        %v566 = vunpack.c.h.b16 %v556
        %v567 = vunpack.c.l.b16 %v557
        %v568 = vunpack.c.h.b16 %v557
        %v569 = vunpack.c.l.b16 %v558
        %v570 = vunpack.c.h.b16 %v558
        %v571 = vpack.c.b16 %v565, %v563
        %v572 = vpack.c.b16 %v566, %v564
        %v573 = vpack.c.b16 %v569, %v567
        %v574 = vpack.c.b16 %v570, %v568
        %vm577 = vcmask 228352
        %v579 = vsel %vm577, %v551, 0
        %v582 = vsel %vm577, %v552, 0
        %v585 = vsel %vm577, %v553, 0
        %vm587 = vcmask 1045504
        %v589 = vsel %vm587, %v573, 0
        %v592 = vsel %vm587, %v574, 0
        %594 = vmatpush.bf16.msra.mxu0 0
        %595 = vmatpush.bf16.msra.mxu0 0
        %596 = vmatpush.bf16.msra.mxu0 0
        %597 = vmatpush.bf16.msra.mxu0 0
        %598 = vmatpush.bf16.msra.mxu0 0
        %599 = vmatpush.bf16.msra.mxu0 0
        %600 = vmatpush.bf16.msra.mxu0 %v589
        %601 = vmatpush.bf16.msra.mxu0 %v571
        %602 = vmatmul.bf16.gmra.mxu0 %v579
        %v603 = vpop.f32.mrf.mxu0
        %v604 = vadd.f32 0.0, %v603
        %v605 = vpop.f32.mrf.mxu0
        %v606 = vadd.f32 0.0, %v605
        %607 = vmatmul.bf16.gmra.mxu0 %v582
        %v608 = vpop.f32.mrf.mxu0
        %v609 = vadd.f32 0.0, %v608
        %v610 = vpop.f32.mrf.mxu0
        %v611 = vadd.f32 0.0, %v610
        %612 = vmatmul.bf16.gmra.mxu0 %v585
        %v613 = vpop.f32.mrf.mxu0
        %v614 = vadd.f32 0.0, %v613
        %v615 = vpop.f32.mrf.mxu0
        %v616 = vadd.f32 0.0, %v615
        %617 = vdwg.mxu0
        %618 = vmatpush.bf16.msra.mxu0 0
        %619 = vmatpush.bf16.msra.mxu0 0
        %620 = vmatpush.bf16.msra.mxu0 0
        %621 = vmatpush.bf16.msra.mxu0 0
        %622 = vmatpush.bf16.msra.mxu0 0
        %623 = vmatpush.bf16.msra.mxu0 0
        %624 = vmatpush.bf16.msra.mxu0 %v592
        %625 = vmatpush.bf16.msra.mxu0 %v572
        %626 = vmatmul.bf16.gmra.mxu0 %v579
        %v627 = vpop.f32.mrf.mxu0
        %v628 = vadd.f32 0.0, %v627
        %v629 = vpop.f32.mrf.mxu0
        %v630 = vadd.f32 0.0, %v629
        %631 = vmatmul.bf16.gmra.mxu0 %v582
        %v632 = vpop.f32.mrf.mxu0
        %v633 = vadd.f32 0.0, %v632
        %v634 = vpop.f32.mrf.mxu0
        %v635 = vadd.f32 0.0, %v634
        %636 = vmatmul.bf16.gmra.mxu0 %v585
        %v637 = vpop.f32.mrf.mxu0
        %v638 = vadd.f32 0.0, %v637
        %v639 = vpop.f32.mrf.mxu0
        %v640 = vadd.f32 0.0, %v639
        %641 = vdwg.mxu0
        %v646 = vunpack.c.l.b16 %v540
        %v647 = vunpack.c.h.b16 %v540
        %v648 = vunpack.c.l.b16 %v541
        %v649 = vunpack.c.h.b16 %v541
        %v650 = vunpack.c.l.b16 %v542
        %v651 = vunpack.c.h.b16 %v542
        %v652 = vunpack.c.l.b16 %v543
        %v653 = vunpack.c.h.b16 %v543
        %v654 = vpack.c.b16 %v648, %v646
        %v655 = vpack.c.b16 %v649, %v647
        %v656 = vpack.c.b16 %v652, %v650
        %v657 = vpack.c.b16 %v653, %v651
        %v661 = vsel %vm577, %v537, 0
        %v664 = vsel %vm577, %v538, 0
        %v667 = vsel %vm577, %v539, 0
        %v670 = vsel %vm587, %v656, 0
        %v673 = vsel %vm587, %v657, 0
        %675 = vmatpush.bf16.msra.mxu0 0
        %676 = vmatpush.bf16.msra.mxu0 0
        %677 = vmatpush.bf16.msra.mxu0 0
        %678 = vmatpush.bf16.msra.mxu0 0
        %679 = vmatpush.bf16.msra.mxu0 0
        %680 = vmatpush.bf16.msra.mxu0 0
        %681 = vmatpush.bf16.msra.mxu0 %v670
        %682 = vmatpush.bf16.msra.mxu0 %v654
        %683 = vmatmul.bf16.gmra.mxu0 %v661
        %v684 = vpop.f32.mrf.mxu0
        %v685 = vadd.f32 %v604, %v684
        %v686 = vpop.f32.mrf.mxu0
        %v687 = vadd.f32 %v606, %v686
        %688 = vmatmul.bf16.gmra.mxu0 %v664
        %v689 = vpop.f32.mrf.mxu0
        %v690 = vadd.f32 %v609, %v689
        %v691 = vpop.f32.mrf.mxu0
        %v692 = vadd.f32 %v611, %v691
        %693 = vmatmul.bf16.gmra.mxu0 %v667
        %v694 = vpop.f32.mrf.mxu0
        %v695 = vadd.f32 %v614, %v694
        %v696 = vpop.f32.mrf.mxu0
        %v697 = vadd.f32 %v616, %v696
        %698 = vdwg.mxu0
        %699 = vmatpush.bf16.msra.mxu0 0
        %700 = vmatpush.bf16.msra.mxu0 0
        %701 = vmatpush.bf16.msra.mxu0 0
        %702 = vmatpush.bf16.msra.mxu0 0
        %703 = vmatpush.bf16.msra.mxu0 0
        %704 = vmatpush.bf16.msra.mxu0 0
        %705 = vmatpush.bf16.msra.mxu0 %v673
        %706 = vmatpush.bf16.msra.mxu0 %v655
        %707 = vmatmul.bf16.gmra.mxu0 %v661
        %v708 = vpop.f32.mrf.mxu0
        %v709 = vadd.f32 %v628, %v708
        %v710 = vpop.f32.mrf.mxu0
        %v711 = vadd.f32 %v630, %v710
        %712 = vmatmul.bf16.gmra.mxu0 %v664
        %v713 = vpop.f32.mrf.mxu0
        %v714 = vadd.f32 %v633, %v713
        %v715 = vpop.f32.mrf.mxu0
        %v716 = vadd.f32 %v635, %v715
        %717 = vmatmul.bf16.gmra.mxu0 %v667
        %v718 = vpop.f32.mrf.mxu0
        %v719 = vadd.f32 %v638, %v718
        %v720 = vpop.f32.mrf.mxu0
        %v721 = vadd.f32 %v640, %v720
        %722 = vdwg.mxu0
        %s723 = scalar_lea.vmem %s490, 112 [#allocation3]
        %v724 = vld [vmem:[%s723] sm:$0xff]
        %v725 = vld [vmem:[%s723 + $0x8] sm:$0xff]
        %v726 = vld [vmem:[%s723 + $0x10] sm:$0xff]
        %v727 = vld [vmem:[%s723 + $0x18] sm:$0xff]
        %v728 = vld [vmem:[%s723 + $0x20] sm:$0xff]
        %v729 = vld [vmem:[%s723 + $0x28] sm:$0xff]
        %v730 = vpack.c.bf16 %v725, %v724
        %v731 = vpack.c.bf16 %v727, %v726
        %v732 = vpack.c.bf16 %v729, %v728
        %s733 = scalar_lea.vmem %s1, 64
        %v734 = vld [vmem:[%s733] sm:$0xff]
        %v735 = vld [vmem:[%s733 + $0x8] sm:$0xff]
        %v736 = vld [vmem:[%s733 + $0x10] sm:$0xff]
        %v737 = vld [vmem:[%s733 + $0x18] sm:$0x33]
        %v742 = vunpack.c.l.b16 %v734
        %v743 = vunpack.c.h.b16 %v734
        %v744 = vunpack.c.l.b16 %v735
        %v745 = vunpack.c.h.b16 %v735
        %v746 = vunpack.c.l.b16 %v736
        %v747 = vunpack.c.h.b16 %v736
        %v748 = vunpack.c.l.b16 %v737
        %v749 = vunpack.c.h.b16 %v737
        %v750 = vpack.c.b16 %v744, %v742
        %v751 = vpack.c.b16 %v745, %v743
        %v752 = vpack.c.b16 %v748, %v746
        %v753 = vpack.c.b16 %v749, %v747
        %v757 = vsel %vm577, %v730, 0
        %v760 = vsel %vm577, %v731, 0
        %v763 = vsel %vm577, %v732, 0
        %v766 = vsel %vm587, %v752, 0
        %v769 = vsel %vm587, %v753, 0
        %771 = vmatpush.bf16.msra.mxu0 0
        %772 = vmatpush.bf16.msra.mxu0 0
        %773 = vmatpush.bf16.msra.mxu0 0
        %774 = vmatpush.bf16.msra.mxu0 0
        %775 = vmatpush.bf16.msra.mxu0 0
        %776 = vmatpush.bf16.msra.mxu0 0
        %777 = vmatpush.bf16.msra.mxu0 %v766
        %778 = vmatpush.bf16.msra.mxu0 %v750
        %779 = vmatmul.bf16.gmra.mxu0 %v757
        %v780 = vpop.f32.mrf.mxu0
        %v781 = vadd.f32 0.0, %v780
        %v782 = vpop.f32.mrf.mxu0
        %v783 = vadd.f32 0.0, %v782
        %784 = vmatmul.bf16.gmra.mxu0 %v760
        %v785 = vpop.f32.mrf.mxu0
        %v786 = vadd.f32 0.0, %v785
        %v787 = vpop.f32.mrf.mxu0
        %v788 = vadd.f32 0.0, %v787
        %789 = vmatmul.bf16.gmra.mxu0 %v763
        %v790 = vpop.f32.mrf.mxu0
        %v791 = vadd.f32 0.0, %v790
        %v792 = vpop.f32.mrf.mxu0
        %v793 = vadd.f32 0.0, %v792
        %794 = vdwg.mxu0
        %795 = vmatpush.bf16.msra.mxu0 0
        %796 = vmatpush.bf16.msra.mxu0 0
        %797 = vmatpush.bf16.msra.mxu0 0
        %798 = vmatpush.bf16.msra.mxu0 0
        %799 = vmatpush.bf16.msra.mxu0 0
        %800 = vmatpush.bf16.msra.mxu0 0
        %801 = vmatpush.bf16.msra.mxu0 %v769
        %802 = vmatpush.bf16.msra.mxu0 %v751
        %803 = vmatmul.bf16.gmra.mxu0 %v757
        %v804 = vpop.f32.mrf.mxu0
        %v805 = vadd.f32 0.0, %v804
        %v806 = vpop.f32.mrf.mxu0
        %v807 = vadd.f32 0.0, %v806
        %808 = vmatmul.bf16.gmra.mxu0 %v760
        %v809 = vpop.f32.mrf.mxu0
        %v810 = vadd.f32 0.0, %v809
        %v811 = vpop.f32.mrf.mxu0
        %v812 = vadd.f32 0.0, %v811
        %813 = vmatmul.bf16.gmra.mxu0 %v763
        %v814 = vpop.f32.mrf.mxu0
        %v815 = vadd.f32 0.0, %v814
        %v816 = vpop.f32.mrf.mxu0
        %v817 = vadd.f32 0.0, %v816
        %818 = vdwg.mxu0
        %v819 = vadd.f32 %v685, %v781
        %v820 = vadd.f32 %v709, %v805
        %v821 = vadd.f32 %v687, %v783
        %v822 = vadd.f32 %v711, %v807
        %v823 = vadd.f32 %v690, %v786
        %v824 = vadd.f32 %v714, %v810
        %v825 = vadd.f32 %v692, %v788
        %v826 = vadd.f32 %v716, %v812
        %v827 = vadd.f32 %v695, %v791
        %v828 = vadd.f32 %v719, %v815
        %v829 = vadd.f32 %v697, %v793
        %v830 = vadd.f32 %v721, %v817
        %s831 = scalar_lea.vmem %s490, 168 [#allocation3]
        %v832 = vld [vmem:[%s831] sm:$0xff]
        %v833 = vld [vmem:[%s831 + $0x8] sm:$0xff]
        %v834 = vld [vmem:[%s831 + $0x10] sm:$0xff]
        %v835 = vld [vmem:[%s831 + $0x18] sm:$0xff]
        %v836 = vld [vmem:[%s831 + $0x20] sm:$0xff]
        %v837 = vld [vmem:[%s831 + $0x28] sm:$0xff]
        %v838 = vpack.c.bf16 %v833, %v832
        %v839 = vpack.c.bf16 %v835, %v834
        %v840 = vpack.c.bf16 %v837, %v836
        %s841 = scalar_lea.vmem %s1, 96
        %v842 = vld [vmem:[%s841] sm:$0xff]
        %v843 = vld [vmem:[%s841 + $0x8] sm:$0xff]
        %v844 = vld [vmem:[%s841 + $0x10] sm:$0xff]
        %v845 = vld [vmem:[%s841 + $0x18] sm:$0x33]
        %v850 = vunpack.c.l.b16 %v842
        %v851 = vunpack.c.h.b16 %v842
        %v852 = vunpack.c.l.b16 %v843
        %v853 = vunpack.c.h.b16 %v843
        %v854 = vunpack.c.l.b16 %v844
        %v855 = vunpack.c.h.b16 %v844
        %v856 = vunpack.c.l.b16 %v845
        %v857 = vunpack.c.h.b16 %v845
        %v858 = vpack.c.b16 %v852, %v850
        %v859 = vpack.c.b16 %v853, %v851
        %v860 = vpack.c.b16 %v856, %v854
        %v861 = vpack.c.b16 %v857, %v855
        %v865 = vsel %vm577, %v838, 0
        %v868 = vsel %vm577, %v839, 0
        %v871 = vsel %vm577, %v840, 0
        %v874 = vsel %vm587, %v860, 0
        %v877 = vsel %vm587, %v861, 0
        %879 = vmatpush.bf16.msra.mxu0 0
        %880 = vmatpush.bf16.msra.mxu0 0
        %881 = vmatpush.bf16.msra.mxu0 0
        %882 = vmatpush.bf16.msra.mxu0 0
        %883 = vmatpush.bf16.msra.mxu0 0
        %884 = vmatpush.bf16.msra.mxu0 0
        %885 = vmatpush.bf16.msra.mxu0 %v874
        %886 = vmatpush.bf16.msra.mxu0 %v858
        %887 = vmatmul.bf16.gmra.mxu0 %v865
        %v888 = vpop.f32.mrf.mxu0
        %v889 = vadd.f32 0.0, %v888
        %v890 = vpop.f32.mrf.mxu0
        %v891 = vadd.f32 0.0, %v890
        %892 = vmatmul.bf16.gmra.mxu0 %v868
        %v893 = vpop.f32.mrf.mxu0
        %v894 = vadd.f32 0.0, %v893
        %v895 = vpop.f32.mrf.mxu0
        %v896 = vadd.f32 0.0, %v895
        %897 = vmatmul.bf16.gmra.mxu0 %v871
        %v898 = vpop.f32.mrf.mxu0
        %v899 = vadd.f32 0.0, %v898
        %v900 = vpop.f32.mrf.mxu0
        %v901 = vadd.f32 0.0, %v900
        %902 = vdwg.mxu0
        %903 = vmatpush.bf16.msra.mxu0 0
        %904 = vmatpush.bf16.msra.mxu0 0
        %905 = vmatpush.bf16.msra.mxu0 0
        %906 = vmatpush.bf16.msra.mxu0 0
        %907 = vmatpush.bf16.msra.mxu0 0
        %908 = vmatpush.bf16.msra.mxu0 0
        %909 = vmatpush.bf16.msra.mxu0 %v877
        %910 = vmatpush.bf16.msra.mxu0 %v859
        %911 = vmatmul.bf16.gmra.mxu0 %v865
        %v912 = vpop.f32.mrf.mxu0
        %v913 = vadd.f32 0.0, %v912
        %v914 = vpop.f32.mrf.mxu0
        %v915 = vadd.f32 0.0, %v914
        %916 = vmatmul.bf16.gmra.mxu0 %v868
        %v917 = vpop.f32.mrf.mxu0
        %v918 = vadd.f32 0.0, %v917
        %v919 = vpop.f32.mrf.mxu0
        %v920 = vadd.f32 0.0, %v919
        %921 = vmatmul.bf16.gmra.mxu0 %v871
        %v922 = vpop.f32.mrf.mxu0
        %v923 = vadd.f32 0.0, %v922
        %v924 = vpop.f32.mrf.mxu0
        %v925 = vadd.f32 0.0, %v924
        %926 = vdwg.mxu0
        %v927 = vadd.f32 %v819, %v889
        %v928 = vadd.f32 %v820, %v913
        %v929 = vadd.f32 %v821, %v891
        %v930 = vadd.f32 %v822, %v915
        %v931 = vadd.f32 %v823, %v894
        %v932 = vadd.f32 %v824, %v918
        %v933 = vadd.f32 %v825, %v896
        %v934 = vadd.f32 %v826, %v920
        %v935 = vadd.f32 %v827, %v899
        %v936 = vadd.f32 %v828, %v923
        %v937 = vadd.f32 %v829, %v901
        %v938 = vadd.f32 %v830, %v925
        %s939 = scalar_lea.vmem %s490, 8 [#allocation3]
        %v940 = vld [vmem:[%s939] sm:$0xff]
        %v941 = vld [vmem:[%s939 + $0x8] sm:$0xff]
        %v942 = vld [vmem:[%s939 + $0x10] sm:$0xff]
        %v943 = vld [vmem:[%s939 + $0x18] sm:$0xff]
        %v944 = vld [vmem:[%s939 + $0x20] sm:$0xff]
        %v945 = vld [vmem:[%s939 + $0x28] sm:$0xff]
        %v946 = vpack.c.bf16 %v941, %v940
        %v947 = vpack.c.bf16 %v943, %v942
        %v948 = vpack.c.bf16 %v945, %v944
        %s949 = scalar_lea.vmem %s1, 128
        %v950 = vld [vmem:[%s949] sm:$0xff]
        %v951 = vld [vmem:[%s949 + $0x8] sm:$0xff]
        %v952 = vld [vmem:[%s949 + $0x10] sm:$0xff]
        %v953 = vld [vmem:[%s949 + $0x18] sm:$0x33]
        %v958 = vunpack.c.l.b16 %v950
        %v959 = vunpack.c.h.b16 %v950
        %v960 = vunpack.c.l.b16 %v951
        %v961 = vunpack.c.h.b16 %v951
        %v962 = vunpack.c.l.b16 %v952
        %v963 = vunpack.c.h.b16 %v952
        %v964 = vunpack.c.l.b16 %v953
        %v965 = vunpack.c.h.b16 %v953
        %v966 = vpack.c.b16 %v960, %v958
        %v967 = vpack.c.b16 %v961, %v959
        %v968 = vpack.c.b16 %v964, %v962
        %v969 = vpack.c.b16 %v965, %v963
        %v973 = vsel %vm577, %v946, 0
        %v976 = vsel %vm577, %v947, 0
        %v979 = vsel %vm577, %v948, 0
        %v982 = vsel %vm587, %v968, 0
        %v985 = vsel %vm587, %v969, 0
        %987 = vmatpush.bf16.msra.mxu0 0
        %988 = vmatpush.bf16.msra.mxu0 0
        %989 = vmatpush.bf16.msra.mxu0 0
        %990 = vmatpush.bf16.msra.mxu0 0
        %991 = vmatpush.bf16.msra.mxu0 0
        %992 = vmatpush.bf16.msra.mxu0 0
        %993 = vmatpush.bf16.msra.mxu0 %v982
        %994 = vmatpush.bf16.msra.mxu0 %v966
        %995 = vmatmul.bf16.gmra.mxu0 %v973
        %v996 = vpop.f32.mrf.mxu0
        %v997 = vadd.f32 0.0, %v996
        %v998 = vpop.f32.mrf.mxu0
        %v999 = vadd.f32 0.0, %v998
        %1000 = vmatmul.bf16.gmra.mxu0 %v976
        %v1001 = vpop.f32.mrf.mxu0
        %v1002 = vadd.f32 0.0, %v1001
        %v1003 = vpop.f32.mrf.mxu0
        %v1004 = vadd.f32 0.0, %v1003
        %1005 = vmatmul.bf16.gmra.mxu0 %v979
        %v1006 = vpop.f32.mrf.mxu0
        %v1007 = vadd.f32 0.0, %v1006
        %v1008 = vpop.f32.mrf.mxu0
        %v1009 = vadd.f32 0.0, %v1008
        %1010 = vdwg.mxu0
        %1011 = vmatpush.bf16.msra.mxu0 0
        %1012 = vmatpush.bf16.msra.mxu0 0
        %1013 = vmatpush.bf16.msra.mxu0 0
        %1014 = vmatpush.bf16.msra.mxu0 0
        %1015 = vmatpush.bf16.msra.mxu0 0
        %1016 = vmatpush.bf16.msra.mxu0 0
        %1017 = vmatpush.bf16.msra.mxu0 %v985
        %1018 = vmatpush.bf16.msra.mxu0 %v967
        %1019 = vmatmul.bf16.gmra.mxu0 %v973
        %v1020 = vpop.f32.mrf.mxu0
        %v1021 = vadd.f32 0.0, %v1020
        %v1022 = vpop.f32.mrf.mxu0
        %v1023 = vadd.f32 0.0, %v1022
        %1024 = vmatmul.bf16.gmra.mxu0 %v976
        %v1025 = vpop.f32.mrf.mxu0
        %v1026 = vadd.f32 0.0, %v1025
        %v1027 = vpop.f32.mrf.mxu0
        %v1028 = vadd.f32 0.0, %v1027
        %1029 = vmatmul.bf16.gmra.mxu0 %v979
        %v1030 = vpop.f32.mrf.mxu0
        %v1031 = vadd.f32 0.0, %v1030
        %v1032 = vpop.f32.mrf.mxu0
        %v1033 = vadd.f32 0.0, %v1032
        %1034 = vdwg.mxu0
        %v1035 = vadd.f32 %v927, %v997
        %v1036 = vadd.f32 %v928, %v1021
        %v1037 = vadd.f32 %v929, %v999
        %v1038 = vadd.f32 %v930, %v1023
        %v1039 = vadd.f32 %v931, %v1002
        %v1040 = vadd.f32 %v932, %v1026
        %v1041 = vadd.f32 %v933, %v1004
        %v1042 = vadd.f32 %v934, %v1028
        %v1043 = vadd.f32 %v935, %v1007
        %v1044 = vadd.f32 %v936, %v1031
        %v1045 = vadd.f32 %v937, %v1009
        %v1046 = vadd.f32 %v938, %v1033
        %1059 = vrot.lane.b32.xlu0 %v1035, 56
        %v1060 = vpop.permute.xlu0 %1059
        %1061 = vrot.lane.b32.xlu0 %v1036, 56
        %v1062 = vpop.permute.xlu0 %1061
        %1063 = vrot.lane.b32.xlu0 %v1037, 56
        %v1064 = vpop.permute.xlu0 %1063
        %1065 = vrot.lane.b32.xlu0 %v1038, 56
        %v1066 = vpop.permute.xlu0 %1065
        %1067 = vrot.lane.b32.xlu0 %v1039, 56
        %v1068 = vpop.permute.xlu0 %1067
        %1069 = vrot.lane.b32.xlu0 %v1040, 56
        %v1070 = vpop.permute.xlu0 %1069
        %1071 = vrot.lane.b32.xlu0 %v1041, 56
        %v1072 = vpop.permute.xlu0 %1071
        %1073 = vrot.lane.b32.xlu0 %v1042, 56
        %v1074 = vpop.permute.xlu0 %1073
        %1075 = vrot.lane.b32.xlu0 %v1043, 56
        %v1076 = vpop.permute.xlu0 %1075
        %1077 = vrot.lane.b32.xlu0 %v1044, 56
        %v1078 = vpop.permute.xlu0 %1077
        %1079 = vrot.lane.b32.xlu0 %v1045, 56
        %v1080 = vpop.permute.xlu0 %1079
        %1081 = vrot.lane.b32.xlu0 %v1046, 56
        %v1082 = vpop.permute.xlu0 %1081
        %vm1083 = vcmask 457728
        %v1084 = vsel %vm1083, %v1060, %v1062
        %v1085 = vsel %vm1083, %v1064, %v1066
        %v1086 = vsel %vm1083, %v1068, %v1070
        %v1087 = vsel %vm1083, %v1072, %v1074
        %v1088 = vsel %vm1083, %v1076, %v1078
        %v1089 = vsel %vm1083, %v1080, %v1082
        %v1096 = vmax.f32 %v1035, %v1084
        %v1097 = vmax.f32 %v1037, %v1085
        %v1098 = vmax.f32 %v1039, %v1086
        %v1099 = vmax.f32 %v1041, %v1087
        %v1100 = vmax.f32 %v1043, %v1088
        %v1101 = vmax.f32 %v1045, %v1089
        %1102 = vmatpush.bf16.msra.mxu0 0
        %1103 = vmatpush.bf16.msra.mxu0 0
        %1104 = vmatpush.bf16.msra.mxu0 0
        %1105 = vmatpush.bf16.msra.mxu0 0
        %1106 = vmatpush.bf16.msra.mxu0 0
        %1107 = vmatpush.bf16.msra.mxu0 0
        %1108 = vmatpush.bf16.msra.mxu0 %v589
        %1109 = vmatpush.bf16.msra.mxu0 %v571
        %1110 = vmatmul.bf16.gmra.mxu0 %v757
        %v1111 = vpop.f32.mrf.mxu0
        %v1112 = vadd.f32 0.0, %v1111
        %v1113 = vpop.f32.mrf.mxu0
        %v1114 = vadd.f32 0.0, %v1113
        %1115 = vmatmul.bf16.gmra.mxu0 %v760
        %v1116 = vpop.f32.mrf.mxu0
        %v1117 = vadd.f32 0.0, %v1116
        %v1118 = vpop.f32.mrf.mxu0
        %v1119 = vadd.f32 0.0, %v1118
        %1120 = vmatmul.bf16.gmra.mxu0 %v763
        %v1121 = vpop.f32.mrf.mxu0
        %v1122 = vadd.f32 0.0, %v1121
        %v1123 = vpop.f32.mrf.mxu0
        %v1124 = vadd.f32 0.0, %v1123
        %1125 = vdwg.mxu0
        %1126 = vmatpush.bf16.msra.mxu0 0
        %1127 = vmatpush.bf16.msra.mxu0 0
        %1128 = vmatpush.bf16.msra.mxu0 0
        %1129 = vmatpush.bf16.msra.mxu0 0
        %1130 = vmatpush.bf16.msra.mxu0 0
        %1131 = vmatpush.bf16.msra.mxu0 0
        %1132 = vmatpush.bf16.msra.mxu0 %v592
        %1133 = vmatpush.bf16.msra.mxu0 %v572
        %1134 = vmatmul.bf16.gmra.mxu0 %v757
        %v1135 = vpop.f32.mrf.mxu0
        %v1136 = vadd.f32 0.0, %v1135
        %v1137 = vpop.f32.mrf.mxu0
        %v1138 = vadd.f32 0.0, %v1137
        %1139 = vmatmul.bf16.gmra.mxu0 %v760
        %v1140 = vpop.f32.mrf.mxu0
        %v1141 = vadd.f32 0.0, %v1140
        %v1142 = vpop.f32.mrf.mxu0
        %v1143 = vadd.f32 0.0, %v1142
        %1144 = vmatmul.bf16.gmra.mxu0 %v763
        %v1145 = vpop.f32.mrf.mxu0
        %v1146 = vadd.f32 0.0, %v1145
        %v1147 = vpop.f32.mrf.mxu0
        %v1148 = vadd.f32 0.0, %v1147
        %1149 = vdwg.mxu0
        %1150 = vmatpush.bf16.msra.mxu0 0
        %1151 = vmatpush.bf16.msra.mxu0 0
        %1152 = vmatpush.bf16.msra.mxu0 0
        %1153 = vmatpush.bf16.msra.mxu0 0
        %1154 = vmatpush.bf16.msra.mxu0 0
        %1155 = vmatpush.bf16.msra.mxu0 0
        %1156 = vmatpush.bf16.msra.mxu0 %v670
        %1157 = vmatpush.bf16.msra.mxu0 %v654
        %1158 = vmatmul.bf16.gmra.mxu0 %v579
        %v1159 = vpop.f32.mrf.mxu0
        %v1160 = vadd.f32 %v1112, %v1159
        %v1161 = vpop.f32.mrf.mxu0
        %v1162 = vadd.f32 %v1114, %v1161
        %1163 = vmatmul.bf16.gmra.mxu0 %v582
        %v1164 = vpop.f32.mrf.mxu0
        %v1165 = vadd.f32 %v1117, %v1164
        %v1166 = vpop.f32.mrf.mxu0
        %v1167 = vadd.f32 %v1119, %v1166
        %1168 = vmatmul.bf16.gmra.mxu0 %v585
        %v1169 = vpop.f32.mrf.mxu0
        %v1170 = vadd.f32 %v1122, %v1169
        %v1171 = vpop.f32.mrf.mxu0
        %v1172 = vadd.f32 %v1124, %v1171
        %1173 = vdwg.mxu0
        %1174 = vmatpush.bf16.msra.mxu0 0
        %1175 = vmatpush.bf16.msra.mxu0 0
        %1176 = vmatpush.bf16.msra.mxu0 0
        %1177 = vmatpush.bf16.msra.mxu0 0
        %1178 = vmatpush.bf16.msra.mxu0 0
        %1179 = vmatpush.bf16.msra.mxu0 0
        %1180 = vmatpush.bf16.msra.mxu0 %v673
        %1181 = vmatpush.bf16.msra.mxu0 %v655
        %1182 = vmatmul.bf16.gmra.mxu0 %v579
        %v1183 = vpop.f32.mrf.mxu0
        %v1184 = vadd.f32 %v1136, %v1183
        %v1185 = vpop.f32.mrf.mxu0
        %v1186 = vadd.f32 %v1138, %v1185
        %1187 = vmatmul.bf16.gmra.mxu0 %v582
        %v1188 = vpop.f32.mrf.mxu0
        %v1189 = vadd.f32 %v1141, %v1188
        %v1190 = vpop.f32.mrf.mxu0
        %v1191 = vadd.f32 %v1143, %v1190
        %1192 = vmatmul.bf16.gmra.mxu0 %v585
        %v1193 = vpop.f32.mrf.mxu0
        %v1194 = vadd.f32 %v1146, %v1193
        %v1195 = vpop.f32.mrf.mxu0
        %v1196 = vadd.f32 %v1148, %v1195
        %1197 = vdwg.mxu0
        %1198 = vmatpush.bf16.msra.mxu0 0
        %1199 = vmatpush.bf16.msra.mxu0 0
        %1200 = vmatpush.bf16.msra.mxu0 0
        %1201 = vmatpush.bf16.msra.mxu0 0
        %1202 = vmatpush.bf16.msra.mxu0 0
        %1203 = vmatpush.bf16.msra.mxu0 0
        %1204 = vmatpush.bf16.msra.mxu0 %v766
        %1205 = vmatpush.bf16.msra.mxu0 %v750
        %1206 = vmatmul.bf16.gmra.mxu0 %v865
        %v1207 = vpop.f32.mrf.mxu0
        %v1208 = vadd.f32 0.0, %v1207
        %v1209 = vpop.f32.mrf.mxu0
        %v1210 = vadd.f32 0.0, %v1209
        %1211 = vmatmul.bf16.gmra.mxu0 %v868
        %v1212 = vpop.f32.mrf.mxu0
        %v1213 = vadd.f32 0.0, %v1212
        %v1214 = vpop.f32.mrf.mxu0
        %v1215 = vadd.f32 0.0, %v1214
        %1216 = vmatmul.bf16.gmra.mxu0 %v871
        %v1217 = vpop.f32.mrf.mxu0
        %v1218 = vadd.f32 0.0, %v1217
        %v1219 = vpop.f32.mrf.mxu0
        %v1220 = vadd.f32 0.0, %v1219
        %1221 = vdwg.mxu0
        %1222 = vmatpush.bf16.msra.mxu0 0
        %1223 = vmatpush.bf16.msra.mxu0 0
        %1224 = vmatpush.bf16.msra.mxu0 0
        %1225 = vmatpush.bf16.msra.mxu0 0
        %1226 = vmatpush.bf16.msra.mxu0 0
        %1227 = vmatpush.bf16.msra.mxu0 0
        %1228 = vmatpush.bf16.msra.mxu0 %v769
        %1229 = vmatpush.bf16.msra.mxu0 %v751
        %1230 = vmatmul.bf16.gmra.mxu0 %v865
        %v1231 = vpop.f32.mrf.mxu0
        %v1232 = vadd.f32 0.0, %v1231
        %v1233 = vpop.f32.mrf.mxu0
        %v1234 = vadd.f32 0.0, %v1233
        %1235 = vmatmul.bf16.gmra.mxu0 %v868
        %v1236 = vpop.f32.mrf.mxu0
        %v1237 = vadd.f32 0.0, %v1236
        %v1238 = vpop.f32.mrf.mxu0
        %v1239 = vadd.f32 0.0, %v1238
        %1240 = vmatmul.bf16.gmra.mxu0 %v871
        %v1241 = vpop.f32.mrf.mxu0
        %v1242 = vadd.f32 0.0, %v1241
        %v1243 = vpop.f32.mrf.mxu0
        %v1244 = vadd.f32 0.0, %v1243
        %1245 = vdwg.mxu0
        %v1246 = vadd.f32 %v1160, %v1208
        %v1247 = vadd.f32 %v1184, %v1232
        %v1248 = vadd.f32 %v1162, %v1210
        %v1249 = vadd.f32 %v1186, %v1234
        %v1250 = vadd.f32 %v1165, %v1213
        %v1251 = vadd.f32 %v1189, %v1237
        %v1252 = vadd.f32 %v1167, %v1215
        %v1253 = vadd.f32 %v1191, %v1239
        %v1254 = vadd.f32 %v1170, %v1218
        %v1255 = vadd.f32 %v1194, %v1242
        %v1256 = vadd.f32 %v1172, %v1220
        %v1257 = vadd.f32 %v1196, %v1244
        %1258 = vmatpush.bf16.msra.mxu0 0
        %1259 = vmatpush.bf16.msra.mxu0 0
        %1260 = vmatpush.bf16.msra.mxu0 0
        %1261 = vmatpush.bf16.msra.mxu0 0
        %1262 = vmatpush.bf16.msra.mxu0 0
        %1263 = vmatpush.bf16.msra.mxu0 0
        %1264 = vmatpush.bf16.msra.mxu0 %v874
        %1265 = vmatpush.bf16.msra.mxu0 %v858
        %1266 = vmatmul.bf16.gmra.mxu0 %v973
        %v1267 = vpop.f32.mrf.mxu0
        %v1268 = vadd.f32 0.0, %v1267
        %v1269 = vpop.f32.mrf.mxu0
        %v1270 = vadd.f32 0.0, %v1269
        %1271 = vmatmul.bf16.gmra.mxu0 %v976
        %v1272 = vpop.f32.mrf.mxu0
        %v1273 = vadd.f32 0.0, %v1272
        %v1274 = vpop.f32.mrf.mxu0
        %v1275 = vadd.f32 0.0, %v1274
        %1276 = vmatmul.bf16.gmra.mxu0 %v979
        %v1277 = vpop.f32.mrf.mxu0
        %v1278 = vadd.f32 0.0, %v1277
        %v1279 = vpop.f32.mrf.mxu0
        %v1280 = vadd.f32 0.0, %v1279
        %1281 = vdwg.mxu0
        %1282 = vmatpush.bf16.msra.mxu0 0
        %1283 = vmatpush.bf16.msra.mxu0 0
        %1284 = vmatpush.bf16.msra.mxu0 0
        %1285 = vmatpush.bf16.msra.mxu0 0
        %1286 = vmatpush.bf16.msra.mxu0 0
        %1287 = vmatpush.bf16.msra.mxu0 0
        %1288 = vmatpush.bf16.msra.mxu0 %v877
        %1289 = vmatpush.bf16.msra.mxu0 %v859
        %1290 = vmatmul.bf16.gmra.mxu0 %v973
        %v1291 = vpop.f32.mrf.mxu0
        %v1292 = vadd.f32 0.0, %v1291
        %v1293 = vpop.f32.mrf.mxu0
        %v1294 = vadd.f32 0.0, %v1293
        %1295 = vmatmul.bf16.gmra.mxu0 %v976
        %v1296 = vpop.f32.mrf.mxu0
        %v1297 = vadd.f32 0.0, %v1296
        %v1298 = vpop.f32.mrf.mxu0
        %v1299 = vadd.f32 0.0, %v1298
        %1300 = vmatmul.bf16.gmra.mxu0 %v979
        %v1301 = vpop.f32.mrf.mxu0
        %v1302 = vadd.f32 0.0, %v1301
        %v1303 = vpop.f32.mrf.mxu0
        %v1304 = vadd.f32 0.0, %v1303
        %1305 = vdwg.mxu0
        %v1306 = vadd.f32 %v1246, %v1268
        %v1307 = vadd.f32 %v1247, %v1292
        %v1308 = vadd.f32 %v1248, %v1270
        %v1309 = vadd.f32 %v1249, %v1294
        %v1310 = vadd.f32 %v1250, %v1273
        %v1311 = vadd.f32 %v1251, %v1297
        %v1312 = vadd.f32 %v1252, %v1275
        %v1313 = vadd.f32 %v1253, %v1299
        %v1314 = vadd.f32 %v1254, %v1278
        %v1315 = vadd.f32 %v1255, %v1302
        %v1316 = vadd.f32 %v1256, %v1280
        %v1317 = vadd.f32 %v1257, %v1304
        %s1318 = scalar_lea.vmem %s490, 64 [#allocation3]
        %v1319 = vld [vmem:[%s1318] sm:$0xff]
        %v1320 = vld [vmem:[%s1318 + $0x8] sm:$0xff]
        %v1321 = vld [vmem:[%s1318 + $0x10] sm:$0xff]
        %v1322 = vld [vmem:[%s1318 + $0x18] sm:$0xff]
        %v1323 = vld [vmem:[%s1318 + $0x20] sm:$0xff]
        %v1324 = vld [vmem:[%s1318 + $0x28] sm:$0xff]
        %v1325 = vpack.c.bf16 %v1320, %v1319
        %v1326 = vpack.c.bf16 %v1322, %v1321
        %v1327 = vpack.c.bf16 %v1324, %v1323
        %v1329 = vsel %vm577, %v1325, 0
        %v1332 = vsel %vm577, %v1326, 0
        %v1335 = vsel %vm577, %v1327, 0
        %1337 = vmatpush.bf16.msra.mxu0 0
        %1338 = vmatpush.bf16.msra.mxu0 0
        %1339 = vmatpush.bf16.msra.mxu0 0
        %1340 = vmatpush.bf16.msra.mxu0 0
        %1341 = vmatpush.bf16.msra.mxu0 0
        %1342 = vmatpush.bf16.msra.mxu0 0
        %1343 = vmatpush.bf16.msra.mxu0 %v982
        %1344 = vmatpush.bf16.msra.mxu0 %v966
        %1345 = vmatmul.bf16.gmra.mxu0 %v1329
        %v1346 = vpop.f32.mrf.mxu0
        %v1347 = vadd.f32 0.0, %v1346
        %v1348 = vpop.f32.mrf.mxu0
        %v1349 = vadd.f32 0.0, %v1348
        %1350 = vmatmul.bf16.gmra.mxu0 %v1332
        %v1351 = vpop.f32.mrf.mxu0
        %v1352 = vadd.f32 0.0, %v1351
        %v1353 = vpop.f32.mrf.mxu0
        %v1354 = vadd.f32 0.0, %v1353
        %1355 = vmatmul.bf16.gmra.mxu0 %v1335
        %v1356 = vpop.f32.mrf.mxu0
        %v1357 = vadd.f32 0.0, %v1356
        %v1358 = vpop.f32.mrf.mxu0
        %v1359 = vadd.f32 0.0, %v1358
        %1360 = vdwg.mxu0
        %1361 = vmatpush.bf16.msra.mxu0 0
        %1362 = vmatpush.bf16.msra.mxu0 0
        %1363 = vmatpush.bf16.msra.mxu0 0
        %1364 = vmatpush.bf16.msra.mxu0 0
        %1365 = vmatpush.bf16.msra.mxu0 0
        %1366 = vmatpush.bf16.msra.mxu0 0
        %1367 = vmatpush.bf16.msra.mxu0 %v985
        %1368 = vmatpush.bf16.msra.mxu0 %v967
        %1369 = vmatmul.bf16.gmra.mxu0 %v1329
        %v1370 = vpop.f32.mrf.mxu0
        %v1371 = vadd.f32 0.0, %v1370
        %v1372 = vpop.f32.mrf.mxu0
        %v1373 = vadd.f32 0.0, %v1372
        %1374 = vmatmul.bf16.gmra.mxu0 %v1332
        %v1375 = vpop.f32.mrf.mxu0
        %v1376 = vadd.f32 0.0, %v1375
        %v1377 = vpop.f32.mrf.mxu0
        %v1378 = vadd.f32 0.0, %v1377
        %1379 = vmatmul.bf16.gmra.mxu0 %v1335
        %v1380 = vpop.f32.mrf.mxu0
        %v1381 = vadd.f32 0.0, %v1380
        %v1382 = vpop.f32.mrf.mxu0
        %v1383 = vadd.f32 0.0, %v1382
        %1384 = vdwg.mxu0
        %v1385 = vadd.f32 %v1306, %v1347
        %v1386 = vadd.f32 %v1307, %v1371
        %v1387 = vadd.f32 %v1308, %v1349
        %v1388 = vadd.f32 %v1309, %v1373
        %v1389 = vadd.f32 %v1310, %v1352
        %v1390 = vadd.f32 %v1311, %v1376
        %v1391 = vadd.f32 %v1312, %v1354
        %v1392 = vadd.f32 %v1313, %v1378
        %v1393 = vadd.f32 %v1314, %v1357
        %v1394 = vadd.f32 %v1315, %v1381
        %v1395 = vadd.f32 %v1316, %v1359
        %v1396 = vadd.f32 %v1317, %v1383
        %1409 = vrot.lane.b32.xlu0 %v1385, 56
        %v1410 = vpop.permute.xlu0 %1409
        %1411 = vrot.lane.b32.xlu0 %v1386, 56
        %v1412 = vpop.permute.xlu0 %1411
        %1413 = vrot.lane.b32.xlu0 %v1387, 56
        %v1414 = vpop.permute.xlu0 %1413
        %1415 = vrot.lane.b32.xlu0 %v1388, 56
        %v1416 = vpop.permute.xlu0 %1415
        %1417 = vrot.lane.b32.xlu0 %v1389, 56
        %v1418 = vpop.permute.xlu0 %1417
        %1419 = vrot.lane.b32.xlu0 %v1390, 56
        %v1420 = vpop.permute.xlu0 %1419
        %1421 = vrot.lane.b32.xlu0 %v1391, 56
        %v1422 = vpop.permute.xlu0 %1421
        %1423 = vrot.lane.b32.xlu0 %v1392, 56
        %v1424 = vpop.permute.xlu0 %1423
        %1425 = vrot.lane.b32.xlu0 %v1393, 56
        %v1426 = vpop.permute.xlu0 %1425
        %1427 = vrot.lane.b32.xlu0 %v1394, 56
        %v1428 = vpop.permute.xlu0 %1427
        %1429 = vrot.lane.b32.xlu0 %v1395, 56
        %v1430 = vpop.permute.xlu0 %1429
        %1431 = vrot.lane.b32.xlu0 %v1396, 56
        %v1432 = vpop.permute.xlu0 %1431
        %v1433 = vsel %vm1083, %v1410, %v1412
        %v1434 = vsel %vm1083, %v1414, %v1416
        %v1435 = vsel %vm1083, %v1418, %v1420
        %v1436 = vsel %vm1083, %v1422, %v1424
        %v1437 = vsel %vm1083, %v1426, %v1428
        %v1438 = vsel %vm1083, %v1430, %v1432
        %v1445 = vmax.f32 %v1385, %v1433
        %v1446 = vmax.f32 %v1387, %v1434
        %v1447 = vmax.f32 %v1389, %v1435
        %v1448 = vmax.f32 %v1391, %v1436
        %v1449 = vmax.f32 %v1393, %v1437
        %v1450 = vmax.f32 %v1395, %v1438
        %v1451 = vmax.f32 %v1096, %v1445
        %v1452 = vmax.f32 %v1097, %v1446
        %v1453 = vmax.f32 %v1098, %v1447
        %v1454 = vmax.f32 %v1099, %v1448
        %v1455 = vmax.f32 %v1100, %v1449
        %v1456 = vmax.f32 %v1101, %v1450
        %v1457 = vld [vmem:[%s2] sm:$0x1]
        %v1459 = vperm.slane %v1457, 0
        %v1461 = vadd.f32 %v1451, %v1459
        %v1462 = vadd.f32 %v1452, %v1459
        %v1463 = vadd.f32 %v1453, %v1459
        %v1464 = vadd.f32 %v1454, %v1459
        %v1465 = vadd.f32 %v1455, %v1459
        %v1466 = vadd.f32 %v1456, %v1459
        %v1467 = vmax.f32 %v1461, 0.0
        %v1468 = vmax.f32 %v1462, 0.0
        %v1469 = vmax.f32 %v1463, 0.0
        %v1470 = vmax.f32 %v1464, 0.0
        %v1471 = vmax.f32 %v1465, 0.0
        %v1472 = vmax.f32 %v1466, 0.0
        %1473 = vmatpush.bf16.msra.mxu0 0
        %1474 = vmatpush.bf16.msra.mxu0 0
        %1475 = vmatpush.bf16.msra.mxu0 0
        %1476 = vmatpush.bf16.msra.mxu0 0
        %1477 = vmatpush.bf16.msra.mxu0 0
        %1478 = vmatpush.bf16.msra.mxu0 0
        %1479 = vmatpush.bf16.msra.mxu0 %v589
        %1480 = vmatpush.bf16.msra.mxu0 %v571
        %1481 = vmatmul.bf16.gmra.mxu0 %v865
        %v1482 = vpop.f32.mrf.mxu0
        %v1483 = vadd.f32 0.0, %v1482
        %v1484 = vpop.f32.mrf.mxu0
        %v1485 = vadd.f32 0.0, %v1484
        %1486 = vmatmul.bf16.gmra.mxu0 %v868
        %v1487 = vpop.f32.mrf.mxu0
        %v1488 = vadd.f32 0.0, %v1487
        %v1489 = vpop.f32.mrf.mxu0
        %v1490 = vadd.f32 0.0, %v1489
        %1491 = vmatmul.bf16.gmra.mxu0 %v871
        %v1492 = vpop.f32.mrf.mxu0
        %v1493 = vadd.f32 0.0, %v1492
        %v1494 = vpop.f32.mrf.mxu0
        %v1495 = vadd.f32 0.0, %v1494
        %1496 = vdwg.mxu0
        %1497 = vmatpush.bf16.msra.mxu0 0
        %1498 = vmatpush.bf16.msra.mxu0 0
        %1499 = vmatpush.bf16.msra.mxu0 0
        %1500 = vmatpush.bf16.msra.mxu0 0
        %1501 = vmatpush.bf16.msra.mxu0 0
        %1502 = vmatpush.bf16.msra.mxu0 0
        %1503 = vmatpush.bf16.msra.mxu0 %v592
        %1504 = vmatpush.bf16.msra.mxu0 %v572
        %1505 = vmatmul.bf16.gmra.mxu0 %v865
        %v1506 = vpop.f32.mrf.mxu0
        %v1507 = vadd.f32 0.0, %v1506
        %v1508 = vpop.f32.mrf.mxu0
        %v1509 = vadd.f32 0.0, %v1508
        %1510 = vmatmul.bf16.gmra.mxu0 %v868
        %v1511 = vpop.f32.mrf.mxu0
        %v1512 = vadd.f32 0.0, %v1511
        %v1513 = vpop.f32.mrf.mxu0
        %v1514 = vadd.f32 0.0, %v1513
        %1515 = vmatmul.bf16.gmra.mxu0 %v871
        %v1516 = vpop.f32.mrf.mxu0
        %v1517 = vadd.f32 0.0, %v1516
        %v1518 = vpop.f32.mrf.mxu0
        %v1519 = vadd.f32 0.0, %v1518
        %1520 = vdwg.mxu0
        %1521 = vmatpush.bf16.msra.mxu0 0
        %1522 = vmatpush.bf16.msra.mxu0 0
        %1523 = vmatpush.bf16.msra.mxu0 0
        %1524 = vmatpush.bf16.msra.mxu0 0
        %1525 = vmatpush.bf16.msra.mxu0 0
        %1526 = vmatpush.bf16.msra.mxu0 0
        %1527 = vmatpush.bf16.msra.mxu0 %v670
        %1528 = vmatpush.bf16.msra.mxu0 %v654
        %1529 = vmatmul.bf16.gmra.mxu0 %v757
        %v1530 = vpop.f32.mrf.mxu0
        %v1531 = vadd.f32 %v1483, %v1530
        %v1532 = vpop.f32.mrf.mxu0
        %v1533 = vadd.f32 %v1485, %v1532
        %1534 = vmatmul.bf16.gmra.mxu0 %v760
        %v1535 = vpop.f32.mrf.mxu0
        %v1536 = vadd.f32 %v1488, %v1535
        %v1537 = vpop.f32.mrf.mxu0
        %v1538 = vadd.f32 %v1490, %v1537
        %1539 = vmatmul.bf16.gmra.mxu0 %v763
        %v1540 = vpop.f32.mrf.mxu0
        %v1541 = vadd.f32 %v1493, %v1540
        %v1542 = vpop.f32.mrf.mxu0
        %v1543 = vadd.f32 %v1495, %v1542
        %1544 = vdwg.mxu0
        %1545 = vmatpush.bf16.msra.mxu0 0
        %1546 = vmatpush.bf16.msra.mxu0 0
        %1547 = vmatpush.bf16.msra.mxu0 0
        %1548 = vmatpush.bf16.msra.mxu0 0
        %1549 = vmatpush.bf16.msra.mxu0 0
        %1550 = vmatpush.bf16.msra.mxu0 0
        %1551 = vmatpush.bf16.msra.mxu0 %v673
        %1552 = vmatpush.bf16.msra.mxu0 %v655
        %1553 = vmatmul.bf16.gmra.mxu0 %v757
        %v1554 = vpop.f32.mrf.mxu0
        %v1555 = vadd.f32 %v1507, %v1554
        %v1556 = vpop.f32.mrf.mxu0
        %v1557 = vadd.f32 %v1509, %v1556
        %1558 = vmatmul.bf16.gmra.mxu0 %v760
        %v1559 = vpop.f32.mrf.mxu0
        %v1560 = vadd.f32 %v1512, %v1559
        %v1561 = vpop.f32.mrf.mxu0
        %v1562 = vadd.f32 %v1514, %v1561
        %1563 = vmatmul.bf16.gmra.mxu0 %v763
        %v1564 = vpop.f32.mrf.mxu0
        %v1565 = vadd.f32 %v1517, %v1564
        %v1566 = vpop.f32.mrf.mxu0
        %v1567 = vadd.f32 %v1519, %v1566
        %1568 = vdwg.mxu0
        %1569 = vmatpush.bf16.msra.mxu0 0
        %1570 = vmatpush.bf16.msra.mxu0 0
        %1571 = vmatpush.bf16.msra.mxu0 0
        %1572 = vmatpush.bf16.msra.mxu0 0
        %1573 = vmatpush.bf16.msra.mxu0 0
        %1574 = vmatpush.bf16.msra.mxu0 0
        %1575 = vmatpush.bf16.msra.mxu0 %v766
        %1576 = vmatpush.bf16.msra.mxu0 %v750
        %1577 = vmatmul.bf16.gmra.mxu0 %v973
        %v1578 = vpop.f32.mrf.mxu0
        %v1579 = vadd.f32 0.0, %v1578
        %v1580 = vpop.f32.mrf.mxu0
        %v1581 = vadd.f32 0.0, %v1580
        %1582 = vmatmul.bf16.gmra.mxu0 %v976
        %v1583 = vpop.f32.mrf.mxu0
        %v1584 = vadd.f32 0.0, %v1583
        %v1585 = vpop.f32.mrf.mxu0
        %v1586 = vadd.f32 0.0, %v1585
        %1587 = vmatmul.bf16.gmra.mxu0 %v979
        %v1588 = vpop.f32.mrf.mxu0
        %v1589 = vadd.f32 0.0, %v1588
        %v1590 = vpop.f32.mrf.mxu0
        %v1591 = vadd.f32 0.0, %v1590
        %1592 = vdwg.mxu0
        %1593 = vmatpush.bf16.msra.mxu0 0
        %1594 = vmatpush.bf16.msra.mxu0 0
        %1595 = vmatpush.bf16.msra.mxu0 0
        %1596 = vmatpush.bf16.msra.mxu0 0
        %1597 = vmatpush.bf16.msra.mxu0 0
        %1598 = vmatpush.bf16.msra.mxu0 0
        %1599 = vmatpush.bf16.msra.mxu0 %v769
        %1600 = vmatpush.bf16.msra.mxu0 %v751
        %1601 = vmatmul.bf16.gmra.mxu0 %v973
        %v1602 = vpop.f32.mrf.mxu0
        %v1603 = vadd.f32 0.0, %v1602
        %v1604 = vpop.f32.mrf.mxu0
        %v1605 = vadd.f32 0.0, %v1604
        %1606 = vmatmul.bf16.gmra.mxu0 %v976
        %v1607 = vpop.f32.mrf.mxu0
        %v1608 = vadd.f32 0.0, %v1607
        %v1609 = vpop.f32.mrf.mxu0
        %v1610 = vadd.f32 0.0, %v1609
        %1611 = vmatmul.bf16.gmra.mxu0 %v979
        %v1612 = vpop.f32.mrf.mxu0
        %v1613 = vadd.f32 0.0, %v1612
        %v1614 = vpop.f32.mrf.mxu0
        %v1615 = vadd.f32 0.0, %v1614
        %1616 = vdwg.mxu0
        %v1617 = vadd.f32 %v1531, %v1579
        %v1618 = vadd.f32 %v1555, %v1603
        %v1619 = vadd.f32 %v1533, %v1581
        %v1620 = vadd.f32 %v1557, %v1605
        %v1621 = vadd.f32 %v1536, %v1584
        %v1622 = vadd.f32 %v1560, %v1608
        %v1623 = vadd.f32 %v1538, %v1586
        %v1624 = vadd.f32 %v1562, %v1610
        %v1625 = vadd.f32 %v1541, %v1589
        %v1626 = vadd.f32 %v1565, %v1613
        %v1627 = vadd.f32 %v1543, %v1591
        %v1628 = vadd.f32 %v1567, %v1615
        %1629 = vmatpush.bf16.msra.mxu0 0
        %1630 = vmatpush.bf16.msra.mxu0 0
        %1631 = vmatpush.bf16.msra.mxu0 0
        %1632 = vmatpush.bf16.msra.mxu0 0
        %1633 = vmatpush.bf16.msra.mxu0 0
        %1634 = vmatpush.bf16.msra.mxu0 0
        %1635 = vmatpush.bf16.msra.mxu0 %v874
        %1636 = vmatpush.bf16.msra.mxu0 %v858
        %1637 = vmatmul.bf16.gmra.mxu0 %v1329
        %v1638 = vpop.f32.mrf.mxu0
        %v1639 = vadd.f32 0.0, %v1638
        %v1640 = vpop.f32.mrf.mxu0
        %v1641 = vadd.f32 0.0, %v1640
        %1642 = vmatmul.bf16.gmra.mxu0 %v1332
        %v1643 = vpop.f32.mrf.mxu0
        %v1644 = vadd.f32 0.0, %v1643
        %v1645 = vpop.f32.mrf.mxu0
        %v1646 = vadd.f32 0.0, %v1645
        %1647 = vmatmul.bf16.gmra.mxu0 %v1335
        %v1648 = vpop.f32.mrf.mxu0
        %v1649 = vadd.f32 0.0, %v1648
        %v1650 = vpop.f32.mrf.mxu0
        %v1651 = vadd.f32 0.0, %v1650
        %1652 = vdwg.mxu0
        %1653 = vmatpush.bf16.msra.mxu0 0
        %1654 = vmatpush.bf16.msra.mxu0 0
        %1655 = vmatpush.bf16.msra.mxu0 0
        %1656 = vmatpush.bf16.msra.mxu0 0
        %1657 = vmatpush.bf16.msra.mxu0 0
        %1658 = vmatpush.bf16.msra.mxu0 0
        %1659 = vmatpush.bf16.msra.mxu0 %v877
        %1660 = vmatpush.bf16.msra.mxu0 %v859
        %1661 = vmatmul.bf16.gmra.mxu0 %v1329
        %v1662 = vpop.f32.mrf.mxu0
        %v1663 = vadd.f32 0.0, %v1662
        %v1664 = vpop.f32.mrf.mxu0
        %v1665 = vadd.f32 0.0, %v1664
        %1666 = vmatmul.bf16.gmra.mxu0 %v1332
        %v1667 = vpop.f32.mrf.mxu0
        %v1668 = vadd.f32 0.0, %v1667
        %v1669 = vpop.f32.mrf.mxu0
        %v1670 = vadd.f32 0.0, %v1669
        %1671 = vmatmul.bf16.gmra.mxu0 %v1335
        %v1672 = vpop.f32.mrf.mxu0
        %v1673 = vadd.f32 0.0, %v1672
        %v1674 = vpop.f32.mrf.mxu0
        %v1675 = vadd.f32 0.0, %v1674
        %1676 = vdwg.mxu0
        %v1677 = vadd.f32 %v1617, %v1639
        %v1678 = vadd.f32 %v1618, %v1663
        %v1679 = vadd.f32 %v1619, %v1641
        %v1680 = vadd.f32 %v1620, %v1665
        %v1681 = vadd.f32 %v1621, %v1644
        %v1682 = vadd.f32 %v1622, %v1668
        %v1683 = vadd.f32 %v1623, %v1646
        %v1684 = vadd.f32 %v1624, %v1670
        %v1685 = vadd.f32 %v1625, %v1649
        %v1686 = vadd.f32 %v1626, %v1673
        %v1687 = vadd.f32 %v1627, %v1651
        %v1688 = vadd.f32 %v1628, %v1675
        %s1689 = scalar_lea.vmem %s490, 120 [#allocation3]
        %v1690 = vld [vmem:[%s1689] sm:$0xff]
        %v1691 = vld [vmem:[%s1689 + $0x8] sm:$0xff]
        %v1692 = vld [vmem:[%s1689 + $0x10] sm:$0xff]
        %v1693 = vld [vmem:[%s1689 + $0x18] sm:$0xff]
        %v1694 = vld [vmem:[%s1689 + $0x20] sm:$0xff]
        %v1695 = vld [vmem:[%s1689 + $0x28] sm:$0xff]
        %v1696 = vpack.c.bf16 %v1691, %v1690
        %v1697 = vpack.c.bf16 %v1693, %v1692
        %v1698 = vpack.c.bf16 %v1695, %v1694
        %v1700 = vsel %vm577, %v1696, 0
        %v1703 = vsel %vm577, %v1697, 0
        %v1706 = vsel %vm577, %v1698, 0
        %1708 = vmatpush.bf16.msra.mxu0 0
        %1709 = vmatpush.bf16.msra.mxu0 0
        %1710 = vmatpush.bf16.msra.mxu0 0
        %1711 = vmatpush.bf16.msra.mxu0 0
        %1712 = vmatpush.bf16.msra.mxu0 0
        %1713 = vmatpush.bf16.msra.mxu0 0
        %1714 = vmatpush.bf16.msra.mxu0 %v982
        %1715 = vmatpush.bf16.msra.mxu0 %v966
        %1716 = vmatmul.bf16.gmra.mxu0 %v1700
        %v1717 = vpop.f32.mrf.mxu0
        %v1718 = vadd.f32 0.0, %v1717
        %v1719 = vpop.f32.mrf.mxu0
        %v1720 = vadd.f32 0.0, %v1719
        %1721 = vmatmul.bf16.gmra.mxu0 %v1703
        %v1722 = vpop.f32.mrf.mxu0
        %v1723 = vadd.f32 0.0, %v1722
        %v1724 = vpop.f32.mrf.mxu0
        %v1725 = vadd.f32 0.0, %v1724
        %1726 = vmatmul.bf16.gmra.mxu0 %v1706
        %v1727 = vpop.f32.mrf.mxu0
        %v1728 = vadd.f32 0.0, %v1727
        %v1729 = vpop.f32.mrf.mxu0
        %v1730 = vadd.f32 0.0, %v1729
        %1731 = vdwg.mxu0
        %1732 = vmatpush.bf16.msra.mxu0 0
        %1733 = vmatpush.bf16.msra.mxu0 0
        %1734 = vmatpush.bf16.msra.mxu0 0
        %1735 = vmatpush.bf16.msra.mxu0 0
        %1736 = vmatpush.bf16.msra.mxu0 0
        %1737 = vmatpush.bf16.msra.mxu0 0
        %1738 = vmatpush.bf16.msra.mxu0 %v985
        %1739 = vmatpush.bf16.msra.mxu0 %v967
        %1740 = vmatmul.bf16.gmra.mxu0 %v1700
        %v1741 = vpop.f32.mrf.mxu0
        %v1742 = vadd.f32 0.0, %v1741
        %v1743 = vpop.f32.mrf.mxu0
        %v1744 = vadd.f32 0.0, %v1743
        %1745 = vmatmul.bf16.gmra.mxu0 %v1703
        %v1746 = vpop.f32.mrf.mxu0
        %v1747 = vadd.f32 0.0, %v1746
        %v1748 = vpop.f32.mrf.mxu0
        %v1749 = vadd.f32 0.0, %v1748
        %1750 = vmatmul.bf16.gmra.mxu0 %v1706
        %v1751 = vpop.f32.mrf.mxu0
        %v1752 = vadd.f32 0.0, %v1751
        %v1753 = vpop.f32.mrf.mxu0
        %v1754 = vadd.f32 0.0, %v1753
        %1755 = vdwg.mxu0
        %v1756 = vadd.f32 %v1677, %v1718
        %v1757 = vadd.f32 %v1678, %v1742
        %v1758 = vadd.f32 %v1679, %v1720
        %v1759 = vadd.f32 %v1680, %v1744
        %v1760 = vadd.f32 %v1681, %v1723
        %v1761 = vadd.f32 %v1682, %v1747
        %v1762 = vadd.f32 %v1683, %v1725
        %v1763 = vadd.f32 %v1684, %v1749
        %v1764 = vadd.f32 %v1685, %v1728
        %v1765 = vadd.f32 %v1686, %v1752
        %v1766 = vadd.f32 %v1687, %v1730
        %v1767 = vadd.f32 %v1688, %v1754
        %1780 = vrot.lane.b32.xlu0 %v1756, 56
        %v1781 = vpop.permute.xlu0 %1780
        %1782 = vrot.lane.b32.xlu0 %v1757, 56
        %v1783 = vpop.permute.xlu0 %1782
        %1784 = vrot.lane.b32.xlu0 %v1758, 56
        %v1785 = vpop.permute.xlu0 %1784
        %1786 = vrot.lane.b32.xlu0 %v1759, 56
        %v1787 = vpop.permute.xlu0 %1786
        %1788 = vrot.lane.b32.xlu0 %v1760, 56
        %v1789 = vpop.permute.xlu0 %1788
        %1790 = vrot.lane.b32.xlu0 %v1761, 56
        %v1791 = vpop.permute.xlu0 %1790
        %1792 = vrot.lane.b32.xlu0 %v1762, 56
        %v1793 = vpop.permute.xlu0 %1792
        %1794 = vrot.lane.b32.xlu0 %v1763, 56
        %v1795 = vpop.permute.xlu0 %1794
        %1796 = vrot.lane.b32.xlu0 %v1764, 56
        %v1797 = vpop.permute.xlu0 %1796
        %1798 = vrot.lane.b32.xlu0 %v1765, 56
        %v1799 = vpop.permute.xlu0 %1798
        %1800 = vrot.lane.b32.xlu0 %v1766, 56
        %v1801 = vpop.permute.xlu0 %1800
        %1802 = vrot.lane.b32.xlu0 %v1767, 56
        %v1803 = vpop.permute.xlu0 %1802
        %v1804 = vsel %vm1083, %v1781, %v1783
        %v1805 = vsel %vm1083, %v1785, %v1787
        %v1806 = vsel %vm1083, %v1789, %v1791
        %v1807 = vsel %vm1083, %v1793, %v1795
        %v1808 = vsel %vm1083, %v1797, %v1799
        %v1809 = vsel %vm1083, %v1801, %v1803
        %v1816 = vmax.f32 %v1756, %v1804
        %v1817 = vmax.f32 %v1758, %v1805
        %v1818 = vmax.f32 %v1760, %v1806
        %v1819 = vmax.f32 %v1762, %v1807
        %v1820 = vmax.f32 %v1764, %v1808
        %v1821 = vmax.f32 %v1766, %v1809
        %1822 = vmatpush.bf16.msra.mxu0 0
        %1823 = vmatpush.bf16.msra.mxu0 0
        %1824 = vmatpush.bf16.msra.mxu0 0
        %1825 = vmatpush.bf16.msra.mxu0 0
        %1826 = vmatpush.bf16.msra.mxu0 0
        %1827 = vmatpush.bf16.msra.mxu0 0
        %1828 = vmatpush.bf16.msra.mxu0 %v589
        %1829 = vmatpush.bf16.msra.mxu0 %v571
        %1830 = vmatmul.bf16.gmra.mxu0 %v973
        %v1831 = vpop.f32.mrf.mxu0
        %v1832 = vadd.f32 0.0, %v1831
        %v1833 = vpop.f32.mrf.mxu0
        %v1834 = vadd.f32 0.0, %v1833
        %1835 = vmatmul.bf16.gmra.mxu0 %v976
        %v1836 = vpop.f32.mrf.mxu0
        %v1837 = vadd.f32 0.0, %v1836
        %v1838 = vpop.f32.mrf.mxu0
        %v1839 = vadd.f32 0.0, %v1838
        %1840 = vmatmul.bf16.gmra.mxu0 %v979
        %v1841 = vpop.f32.mrf.mxu0
        %v1842 = vadd.f32 0.0, %v1841
        %v1843 = vpop.f32.mrf.mxu0
        %v1844 = vadd.f32 0.0, %v1843
        %1845 = vdwg.mxu0
        %1846 = vmatpush.bf16.msra.mxu0 0
        %1847 = vmatpush.bf16.msra.mxu0 0
        %1848 = vmatpush.bf16.msra.mxu0 0
        %1849 = vmatpush.bf16.msra.mxu0 0
        %1850 = vmatpush.bf16.msra.mxu0 0
        %1851 = vmatpush.bf16.msra.mxu0 0
        %1852 = vmatpush.bf16.msra.mxu0 %v592
        %1853 = vmatpush.bf16.msra.mxu0 %v572
        %1854 = vmatmul.bf16.gmra.mxu0 %v973
        %v1855 = vpop.f32.mrf.mxu0
        %v1856 = vadd.f32 0.0, %v1855
        %v1857 = vpop.f32.mrf.mxu0
        %v1858 = vadd.f32 0.0, %v1857
        %1859 = vmatmul.bf16.gmra.mxu0 %v976
        %v1860 = vpop.f32.mrf.mxu0
        %v1861 = vadd.f32 0.0, %v1860
        %v1862 = vpop.f32.mrf.mxu0
        %v1863 = vadd.f32 0.0, %v1862
        %1864 = vmatmul.bf16.gmra.mxu0 %v979
        %v1865 = vpop.f32.mrf.mxu0
        %v1866 = vadd.f32 0.0, %v1865
        %v1867 = vpop.f32.mrf.mxu0
        %v1868 = vadd.f32 0.0, %v1867
        %1869 = vdwg.mxu0
        %1870 = vmatpush.bf16.msra.mxu0 0
        %1871 = vmatpush.bf16.msra.mxu0 0
        %1872 = vmatpush.bf16.msra.mxu0 0
        %1873 = vmatpush.bf16.msra.mxu0 0
        %1874 = vmatpush.bf16.msra.mxu0 0
        %1875 = vmatpush.bf16.msra.mxu0 0
        %1876 = vmatpush.bf16.msra.mxu0 %v670
        %1877 = vmatpush.bf16.msra.mxu0 %v654
        %1878 = vmatmul.bf16.gmra.mxu0 %v865
        %v1879 = vpop.f32.mrf.mxu0
        %v1880 = vadd.f32 %v1832, %v1879
        %v1881 = vpop.f32.mrf.mxu0
        %v1882 = vadd.f32 %v1834, %v1881
        %1883 = vmatmul.bf16.gmra.mxu0 %v868
        %v1884 = vpop.f32.mrf.mxu0
        %v1885 = vadd.f32 %v1837, %v1884
        %v1886 = vpop.f32.mrf.mxu0
        %v1887 = vadd.f32 %v1839, %v1886
        %1888 = vmatmul.bf16.gmra.mxu0 %v871
        %v1889 = vpop.f32.mrf.mxu0
        %v1890 = vadd.f32 %v1842, %v1889
        %v1891 = vpop.f32.mrf.mxu0
        %v1892 = vadd.f32 %v1844, %v1891
        %1893 = vdwg.mxu0
        %1894 = vmatpush.bf16.msra.mxu0 0
        %1895 = vmatpush.bf16.msra.mxu0 0
        %1896 = vmatpush.bf16.msra.mxu0 0
        %1897 = vmatpush.bf16.msra.mxu0 0
        %1898 = vmatpush.bf16.msra.mxu0 0
        %1899 = vmatpush.bf16.msra.mxu0 0
        %1900 = vmatpush.bf16.msra.mxu0 %v673
        %1901 = vmatpush.bf16.msra.mxu0 %v655
        %1902 = vmatmul.bf16.gmra.mxu0 %v865
        %v1903 = vpop.f32.mrf.mxu0
        %v1904 = vadd.f32 %v1856, %v1903
        %v1905 = vpop.f32.mrf.mxu0
        %v1906 = vadd.f32 %v1858, %v1905
        %1907 = vmatmul.bf16.gmra.mxu0 %v868
        %v1908 = vpop.f32.mrf.mxu0
        %v1909 = vadd.f32 %v1861, %v1908
        %v1910 = vpop.f32.mrf.mxu0
        %v1911 = vadd.f32 %v1863, %v1910
        %1912 = vmatmul.bf16.gmra.mxu0 %v871
        %v1913 = vpop.f32.mrf.mxu0
        %v1914 = vadd.f32 %v1866, %v1913
        %v1915 = vpop.f32.mrf.mxu0
        %v1916 = vadd.f32 %v1868, %v1915
        %1917 = vdwg.mxu0
        %1918 = vmatpush.bf16.msra.mxu0 0
        %1919 = vmatpush.bf16.msra.mxu0 0
        %1920 = vmatpush.bf16.msra.mxu0 0
        %1921 = vmatpush.bf16.msra.mxu0 0
        %1922 = vmatpush.bf16.msra.mxu0 0
        %1923 = vmatpush.bf16.msra.mxu0 0
        %1924 = vmatpush.bf16.msra.mxu0 %v766
        %1925 = vmatpush.bf16.msra.mxu0 %v750
        %1926 = vmatmul.bf16.gmra.mxu0 %v1329
        %v1927 = vpop.f32.mrf.mxu0
        %v1928 = vadd.f32 0.0, %v1927
        %v1929 = vpop.f32.mrf.mxu0
        %v1930 = vadd.f32 0.0, %v1929
        %1931 = vmatmul.bf16.gmra.mxu0 %v1332
        %v1932 = vpop.f32.mrf.mxu0
        %v1933 = vadd.f32 0.0, %v1932
        %v1934 = vpop.f32.mrf.mxu0
        %v1935 = vadd.f32 0.0, %v1934
        %1936 = vmatmul.bf16.gmra.mxu0 %v1335
        %v1937 = vpop.f32.mrf.mxu0
        %v1938 = vadd.f32 0.0, %v1937
        %v1939 = vpop.f32.mrf.mxu0
        %v1940 = vadd.f32 0.0, %v1939
        %1941 = vdwg.mxu0
        %1942 = vmatpush.bf16.msra.mxu0 0
        %1943 = vmatpush.bf16.msra.mxu0 0
        %1944 = vmatpush.bf16.msra.mxu0 0
        %1945 = vmatpush.bf16.msra.mxu0 0
        %1946 = vmatpush.bf16.msra.mxu0 0
        %1947 = vmatpush.bf16.msra.mxu0 0
        %1948 = vmatpush.bf16.msra.mxu0 %v769
        %1949 = vmatpush.bf16.msra.mxu0 %v751
        %1950 = vmatmul.bf16.gmra.mxu0 %v1329
        %v1951 = vpop.f32.mrf.mxu0
        %v1952 = vadd.f32 0.0, %v1951
        %v1953 = vpop.f32.mrf.mxu0
        %v1954 = vadd.f32 0.0, %v1953
        %1955 = vmatmul.bf16.gmra.mxu0 %v1332
        %v1956 = vpop.f32.mrf.mxu0
        %v1957 = vadd.f32 0.0, %v1956
        %v1958 = vpop.f32.mrf.mxu0
        %v1959 = vadd.f32 0.0, %v1958
        %1960 = vmatmul.bf16.gmra.mxu0 %v1335
        %v1961 = vpop.f32.mrf.mxu0
        %v1962 = vadd.f32 0.0, %v1961
        %v1963 = vpop.f32.mrf.mxu0
        %v1964 = vadd.f32 0.0, %v1963
        %1965 = vdwg.mxu0
        %v1966 = vadd.f32 %v1880, %v1928
        %v1967 = vadd.f32 %v1904, %v1952
        %v1968 = vadd.f32 %v1882, %v1930
        %v1969 = vadd.f32 %v1906, %v1954
        %v1970 = vadd.f32 %v1885, %v1933
        %v1971 = vadd.f32 %v1909, %v1957
        %v1972 = vadd.f32 %v1887, %v1935
        %v1973 = vadd.f32 %v1911, %v1959
        %v1974 = vadd.f32 %v1890, %v1938
        %v1975 = vadd.f32 %v1914, %v1962
        %v1976 = vadd.f32 %v1892, %v1940
        %v1977 = vadd.f32 %v1916, %v1964
        %1978 = vmatpush.bf16.msra.mxu0 0
        %1979 = vmatpush.bf16.msra.mxu0 0
        %1980 = vmatpush.bf16.msra.mxu0 0
        %1981 = vmatpush.bf16.msra.mxu0 0
        %1982 = vmatpush.bf16.msra.mxu0 0
        %1983 = vmatpush.bf16.msra.mxu0 0
        %1984 = vmatpush.bf16.msra.mxu0 %v874
        %1985 = vmatpush.bf16.msra.mxu0 %v858
        %1986 = vmatmul.bf16.gmra.mxu0 %v1700
        %v1987 = vpop.f32.mrf.mxu0
        %v1988 = vadd.f32 0.0, %v1987
        %v1989 = vpop.f32.mrf.mxu0
        %v1990 = vadd.f32 0.0, %v1989
        %1991 = vmatmul.bf16.gmra.mxu0 %v1703
        %v1992 = vpop.f32.mrf.mxu0
        %v1993 = vadd.f32 0.0, %v1992
        %v1994 = vpop.f32.mrf.mxu0
        %v1995 = vadd.f32 0.0, %v1994
        %1996 = vmatmul.bf16.gmra.mxu0 %v1706
        %v1997 = vpop.f32.mrf.mxu0
        %v1998 = vadd.f32 0.0, %v1997
        %v1999 = vpop.f32.mrf.mxu0
        %v2000 = vadd.f32 0.0, %v1999
        %2001 = vdwg.mxu0
        %2002 = vmatpush.bf16.msra.mxu0 0
        %2003 = vmatpush.bf16.msra.mxu0 0
        %2004 = vmatpush.bf16.msra.mxu0 0
        %2005 = vmatpush.bf16.msra.mxu0 0
        %2006 = vmatpush.bf16.msra.mxu0 0
        %2007 = vmatpush.bf16.msra.mxu0 0
        %2008 = vmatpush.bf16.msra.mxu0 %v877
        %2009 = vmatpush.bf16.msra.mxu0 %v859
        %2010 = vmatmul.bf16.gmra.mxu0 %v1700
        %v2011 = vpop.f32.mrf.mxu0
        %v2012 = vadd.f32 0.0, %v2011
        %v2013 = vpop.f32.mrf.mxu0
        %v2014 = vadd.f32 0.0, %v2013
        %2015 = vmatmul.bf16.gmra.mxu0 %v1703
        %v2016 = vpop.f32.mrf.mxu0
        %v2017 = vadd.f32 0.0, %v2016
        %v2018 = vpop.f32.mrf.mxu0
        %v2019 = vadd.f32 0.0, %v2018
        %2020 = vmatmul.bf16.gmra.mxu0 %v1706
        %v2021 = vpop.f32.mrf.mxu0
        %v2022 = vadd.f32 0.0, %v2021
        %v2023 = vpop.f32.mrf.mxu0
        %v2024 = vadd.f32 0.0, %v2023
        %2025 = vdwg.mxu0
        %v2026 = vadd.f32 %v1966, %v1988
        %v2027 = vadd.f32 %v1967, %v2012
        %v2028 = vadd.f32 %v1968, %v1990
        %v2029 = vadd.f32 %v1969, %v2014
        %v2030 = vadd.f32 %v1970, %v1993
        %v2031 = vadd.f32 %v1971, %v2017
        %v2032 = vadd.f32 %v1972, %v1995
        %v2033 = vadd.f32 %v1973, %v2019
        %v2034 = vadd.f32 %v1974, %v1998
        %v2035 = vadd.f32 %v1975, %v2022
        %v2036 = vadd.f32 %v1976, %v2000
        %v2037 = vadd.f32 %v1977, %v2024
        %s2038 = scalar_lea.vmem %s490, 176 [#allocation3]
        %v2039 = vld [vmem:[%s2038] sm:$0xff]
        %v2040 = vld [vmem:[%s2038 + $0x8] sm:$0xff]
        %v2041 = vld [vmem:[%s2038 + $0x10] sm:$0xff]
        %v2042 = vld [vmem:[%s2038 + $0x18] sm:$0xff]
        %v2043 = vld [vmem:[%s2038 + $0x20] sm:$0xff]
        %v2044 = vld [vmem:[%s2038 + $0x28] sm:$0xff]
        %v2045 = vpack.c.bf16 %v2040, %v2039
        %v2046 = vpack.c.bf16 %v2042, %v2041
        %v2047 = vpack.c.bf16 %v2044, %v2043
        %v2049 = vsel %vm577, %v2045, 0
        %v2052 = vsel %vm577, %v2046, 0
        %v2055 = vsel %vm577, %v2047, 0
        %2057 = vmatpush.bf16.msra.mxu0 0
        %2058 = vmatpush.bf16.msra.mxu0 0
        %2059 = vmatpush.bf16.msra.mxu0 0
        %2060 = vmatpush.bf16.msra.mxu0 0
        %2061 = vmatpush.bf16.msra.mxu0 0
        %2062 = vmatpush.bf16.msra.mxu0 0
        %2063 = vmatpush.bf16.msra.mxu0 %v982
        %2064 = vmatpush.bf16.msra.mxu0 %v966
        %2065 = vmatmul.bf16.gmra.mxu0 %v2049
        %v2066 = vpop.f32.mrf.mxu0
        %v2067 = vadd.f32 0.0, %v2066
        %v2068 = vpop.f32.mrf.mxu0
        %v2069 = vadd.f32 0.0, %v2068
        %2070 = vmatmul.bf16.gmra.mxu0 %v2052
        %v2071 = vpop.f32.mrf.mxu0
        %v2072 = vadd.f32 0.0, %v2071
        %v2073 = vpop.f32.mrf.mxu0
        %v2074 = vadd.f32 0.0, %v2073
        %2075 = vmatmul.bf16.gmra.mxu0 %v2055
        %v2076 = vpop.f32.mrf.mxu0
        %v2077 = vadd.f32 0.0, %v2076
        %v2078 = vpop.f32.mrf.mxu0
        %v2079 = vadd.f32 0.0, %v2078
        %2080 = vdwg.mxu0
        %2081 = vmatpush.bf16.msra.mxu0 0
        %2082 = vmatpush.bf16.msra.mxu0 0
        %2083 = vmatpush.bf16.msra.mxu0 0
        %2084 = vmatpush.bf16.msra.mxu0 0
        %2085 = vmatpush.bf16.msra.mxu0 0
        %2086 = vmatpush.bf16.msra.mxu0 0
        %2087 = vmatpush.bf16.msra.mxu0 %v985
        %2088 = vmatpush.bf16.msra.mxu0 %v967
        %2089 = vmatmul.bf16.gmra.mxu0 %v2049
        %v2090 = vpop.f32.mrf.mxu0
        %v2091 = vadd.f32 0.0, %v2090
        %v2092 = vpop.f32.mrf.mxu0
        %v2093 = vadd.f32 0.0, %v2092
        %2094 = vmatmul.bf16.gmra.mxu0 %v2052
        %v2095 = vpop.f32.mrf.mxu0
        %v2096 = vadd.f32 0.0, %v2095
        %v2097 = vpop.f32.mrf.mxu0
        %v2098 = vadd.f32 0.0, %v2097
        %2099 = vmatmul.bf16.gmra.mxu0 %v2055
        %v2100 = vpop.f32.mrf.mxu0
        %v2101 = vadd.f32 0.0, %v2100
        %v2102 = vpop.f32.mrf.mxu0
        %v2103 = vadd.f32 0.0, %v2102
        %2104 = vdwg.mxu0
        %v2105 = vadd.f32 %v2026, %v2067
        %v2106 = vadd.f32 %v2027, %v2091
        %v2107 = vadd.f32 %v2028, %v2069
        %v2108 = vadd.f32 %v2029, %v2093
        %v2109 = vadd.f32 %v2030, %v2072
        %v2110 = vadd.f32 %v2031, %v2096
        %v2111 = vadd.f32 %v2032, %v2074
        %v2112 = vadd.f32 %v2033, %v2098
        %v2113 = vadd.f32 %v2034, %v2077
        %v2114 = vadd.f32 %v2035, %v2101
        %v2115 = vadd.f32 %v2036, %v2079
        %v2116 = vadd.f32 %v2037, %v2103
        %2129 = vrot.lane.b32.xlu0 %v2105, 56
        %v2130 = vpop.permute.xlu0 %2129
        %2131 = vrot.lane.b32.xlu0 %v2106, 56
        %v2132 = vpop.permute.xlu0 %2131
        %2133 = vrot.lane.b32.xlu0 %v2107, 56
        %v2134 = vpop.permute.xlu0 %2133
        %2135 = vrot.lane.b32.xlu0 %v2108, 56
        %v2136 = vpop.permute.xlu0 %2135
        %2137 = vrot.lane.b32.xlu0 %v2109, 56
        %v2138 = vpop.permute.xlu0 %2137
        %2139 = vrot.lane.b32.xlu0 %v2110, 56
        %v2140 = vpop.permute.xlu0 %2139
        %2141 = vrot.lane.b32.xlu0 %v2111, 56
        %v2142 = vpop.permute.xlu0 %2141
        %2143 = vrot.lane.b32.xlu0 %v2112, 56
        %v2144 = vpop.permute.xlu0 %2143
        %2145 = vrot.lane.b32.xlu0 %v2113, 56
        %v2146 = vpop.permute.xlu0 %2145
        %2147 = vrot.lane.b32.xlu0 %v2114, 56
        %v2148 = vpop.permute.xlu0 %2147
        %2149 = vrot.lane.b32.xlu0 %v2115, 56
        %v2150 = vpop.permute.xlu0 %2149
        %2151 = vrot.lane.b32.xlu0 %v2116, 56
        %v2152 = vpop.permute.xlu0 %2151
        %v2153 = vsel %vm1083, %v2130, %v2132
        %v2154 = vsel %vm1083, %v2134, %v2136
        %v2155 = vsel %vm1083, %v2138, %v2140
        %v2156 = vsel %vm1083, %v2142, %v2144
        %v2157 = vsel %vm1083, %v2146, %v2148
        %v2158 = vsel %vm1083, %v2150, %v2152
        %v2165 = vmax.f32 %v2105, %v2153
        %v2166 = vmax.f32 %v2107, %v2154
        %v2167 = vmax.f32 %v2109, %v2155
        %v2168 = vmax.f32 %v2111, %v2156
        %v2169 = vmax.f32 %v2113, %v2157
        %v2170 = vmax.f32 %v2115, %v2158
        %v2171 = vmax.f32 %v1816, %v2165
        %v2172 = vmax.f32 %v1817, %v2166
        %v2173 = vmax.f32 %v1818, %v2167
        %v2174 = vmax.f32 %v1819, %v2168
        %v2175 = vmax.f32 %v1820, %v2169
        %v2176 = vmax.f32 %v1821, %v2170
        %v2177 = vadd.f32 %v2171, %v1459
        %v2178 = vadd.f32 %v2172, %v1459
        %v2179 = vadd.f32 %v2173, %v1459
        %v2180 = vadd.f32 %v2174, %v1459
        %v2181 = vadd.f32 %v2175, %v1459
        %v2182 = vadd.f32 %v2176, %v1459
        %v2183 = vmax.f32 %v2177, 0.0
        %v2184 = vmax.f32 %v2178, 0.0
        %v2185 = vmax.f32 %v2179, 0.0
        %v2186 = vmax.f32 %v2180, 0.0
        %v2187 = vmax.f32 %v2181, 0.0
        %v2188 = vmax.f32 %v2182, 0.0
        %v2189 = vpack.c.bf16 %v1468, %v1467
        %v2190 = vpack.c.bf16 %v1470, %v1469
        %v2191 = vld [vmem:[%s3] sm:$0xf]
        %v2192 = vld [vmem:[%s3 + $0x4] sm:$0xf]
        %v2193 = vld [vmem:[%s3 + $0x8] sm:$0xf]
        %v2194 = vld [vmem:[%s3 + $0xc] sm:$0xf]
        %v2195 = vld [vmem:[%s3 + $0x10] sm:$0xf]
        %v2196 = vld [vmem:[%s3 + $0x14] sm:$0xf]
        %v2197 = vld [vmem:[%s3 + $0x18] sm:$0xf]
        %v2198 = vld [vmem:[%s3 + $0x1c] sm:$0xf]
        %v2199 = vld [vmem:[%s3 + $0x20] sm:$0xf]
        %v2200 = vpack.c.bf16 %v2184, %v2183
        %v2201 = vpack.c.bf16 %v2186, %v2185
        %s2202 = scalar_lea.vmem %s3, 36
        %v2203 = vld [vmem:[%s2202] sm:$0xf]
        %v2204 = vld [vmem:[%s2202 + $0x4] sm:$0xf]
        %v2205 = vld [vmem:[%s2202 + $0x8] sm:$0xf]
        %v2206 = vld [vmem:[%s2202 + $0xc] sm:$0xf]
        %v2207 = vld [vmem:[%s2202 + $0x10] sm:$0xf]
        %v2208 = vld [vmem:[%s2202 + $0x14] sm:$0xf]
        %v2209 = vld [vmem:[%s2202 + $0x18] sm:$0xf]
        %v2210 = vld [vmem:[%s2202 + $0x1c] sm:$0xf]
        %v2211 = vld [vmem:[%s2202 + $0x20] sm:$0xf]
        %v2221 = vunpack.c.l.b16 %v2203
        %v2222 = vunpack.c.l.b16 %v2204
        %v2223 = vunpack.c.l.b16 %v2205
        %v2224 = vunpack.c.l.b16 %v2206
        %v2225 = vunpack.c.l.b16 %v2207
        %v2226 = vunpack.c.l.b16 %v2208
        %v2227 = vunpack.c.l.b16 %v2209
        %v2228 = vunpack.c.l.b16 %v2210
        %v2229 = vunpack.c.l.b16 %v2211
        %v2230 = vpack.c.b16 %v2222, %v2221
        %v2231 = vpack.c.b16 %v2224, %v2223
        %v2232 = vpack.c.b16 %v2226, %v2225
        %v2233 = vpack.c.b16 %v2228, %v2227
        %v2234 = vpack.c.b16 %v2229, %v2229
        %vm2239 = vcmask 588800
        %v2241 = vsel %vm2239, %v2200, 0
        %v2244 = vsel %vm2239, %v2201, 0
        %vm2246 = vcmask 1043456
        %v2248 = vsel %vm2246, %v2234, 0
        %2250 = vmatpush.bf16.msra.mxu0 0
        %2251 = vmatpush.bf16.msra.mxu0 0
        %2252 = vmatpush.bf16.msra.mxu0 0
        %2253 = vmatpush.bf16.msra.mxu0 %v2248
        %2254 = vmatpush.bf16.msra.mxu0 %v2233
        %2255 = vmatpush.bf16.msra.mxu0 %v2232
        %2256 = vmatpush.bf16.msra.mxu0 %v2231
        %2257 = vmatpush.bf16.msra.mxu0 %v2230
        %2258 = vmatmul.bf16.gmra.mxu0 %v2241
        %v2259 = vpop.f32.mrf.mxu0
        %v2260 = vadd.f32 0.0, %v2259
        %v2261 = vpop.f32.mrf.mxu0
        %v2262 = vadd.f32 0.0, %v2261
        %2263 = vmatmul.bf16.gmra.mxu0 %v2244
        %v2264 = vpop.f32.mrf.mxu0
        %v2265 = vadd.f32 0.0, %v2264
        %v2266 = vpop.f32.mrf.mxu0
        %v2267 = vadd.f32 0.0, %v2266
        %2268 = vdwg.mxu0
        %v2278 = vunpack.c.l.b16 %v2191
        %v2279 = vunpack.c.l.b16 %v2192
        %v2280 = vunpack.c.l.b16 %v2193
        %v2281 = vunpack.c.l.b16 %v2194
        %v2282 = vunpack.c.l.b16 %v2195
        %v2283 = vunpack.c.l.b16 %v2196
        %v2284 = vunpack.c.l.b16 %v2197
        %v2285 = vunpack.c.l.b16 %v2198
        %v2286 = vunpack.c.l.b16 %v2199
        %v2287 = vpack.c.b16 %v2279, %v2278
        %v2288 = vpack.c.b16 %v2281, %v2280
        %v2289 = vpack.c.b16 %v2283, %v2282
        %v2290 = vpack.c.b16 %v2285, %v2284
        %v2291 = vpack.c.b16 %v2286, %v2286
        %v2297 = vsel %vm2239, %v2189, 0
        %v2300 = vsel %vm2239, %v2190, 0
        %v2303 = vsel %vm2246, %v2291, 0
        %2305 = vmatpush.bf16.msra.mxu0 0
        %2306 = vmatpush.bf16.msra.mxu0 0
        %2307 = vmatpush.bf16.msra.mxu0 0
        %2308 = vmatpush.bf16.msra.mxu0 %v2303
        %2309 = vmatpush.bf16.msra.mxu0 %v2290
        %2310 = vmatpush.bf16.msra.mxu0 %v2289
        %2311 = vmatpush.bf16.msra.mxu0 %v2288
        %2312 = vmatpush.bf16.msra.mxu0 %v2287
        %2313 = vmatmul.bf16.gmra.mxu0 %v2297
        %v2314 = vpop.f32.mrf.mxu0
        %v2315 = vadd.f32 %v2260, %v2314
        %v2316 = vpop.f32.mrf.mxu0
        %v2317 = vadd.f32 %v2262, %v2316
        %2318 = vmatmul.bf16.gmra.mxu0 %v2300
        %v2319 = vpop.f32.mrf.mxu0
        %v2320 = vadd.f32 %v2265, %v2319
        %v2321 = vpop.f32.mrf.mxu0
        %v2322 = vadd.f32 %v2267, %v2321
        %2323 = vdwg.mxu0
        %v2324 = vpack.c.bf16 %v1469, %v1468
        %v2325 = vpack.c.bf16 %v1471, %v1470
        %s2326 = scalar_lea.vmem %s3, 72
        %v2327 = vld [vmem:[%s2326] sm:$0xf]
        %v2328 = vld [vmem:[%s2326 + $0x4] sm:$0xf]
        %v2329 = vld [vmem:[%s2326 + $0x8] sm:$0xf]
        %v2330 = vld [vmem:[%s2326 + $0xc] sm:$0xf]
        %v2331 = vld [vmem:[%s2326 + $0x10] sm:$0xf]
        %v2332 = vld [vmem:[%s2326 + $0x14] sm:$0xf]
        %v2333 = vld [vmem:[%s2326 + $0x18] sm:$0xf]
        %v2334 = vld [vmem:[%s2326 + $0x1c] sm:$0xf]
        %v2335 = vld [vmem:[%s2326 + $0x20] sm:$0xf]
        %v2345 = vunpack.c.l.b16 %v2327
        %v2346 = vunpack.c.l.b16 %v2328
        %v2347 = vunpack.c.l.b16 %v2329
        %v2348 = vunpack.c.l.b16 %v2330
        %v2349 = vunpack.c.l.b16 %v2331
        %v2350 = vunpack.c.l.b16 %v2332
        %v2351 = vunpack.c.l.b16 %v2333
        %v2352 = vunpack.c.l.b16 %v2334
        %v2353 = vunpack.c.l.b16 %v2335
        %v2354 = vpack.c.b16 %v2346, %v2345
        %v2355 = vpack.c.b16 %v2348, %v2347
        %v2356 = vpack.c.b16 %v2350, %v2349
        %v2357 = vpack.c.b16 %v2352, %v2351
        %v2358 = vpack.c.b16 %v2353, %v2353
        %v2364 = vsel %vm2239, %v2324, 0
        %v2367 = vsel %vm2239, %v2325, 0
        %v2370 = vsel %vm2246, %v2358, 0
        %2372 = vmatpush.bf16.msra.mxu0 0
        %2373 = vmatpush.bf16.msra.mxu0 0
        %2374 = vmatpush.bf16.msra.mxu0 0
        %2375 = vmatpush.bf16.msra.mxu0 %v2370
        %2376 = vmatpush.bf16.msra.mxu0 %v2357
        %2377 = vmatpush.bf16.msra.mxu0 %v2356
        %2378 = vmatpush.bf16.msra.mxu0 %v2355
        %2379 = vmatpush.bf16.msra.mxu0 %v2354
        %2380 = vmatmul.bf16.gmra.mxu0 %v2364
        %v2381 = vpop.f32.mrf.mxu0
        %v2382 = vadd.f32 0.0, %v2381
        %v2383 = vpop.f32.mrf.mxu0
        %v2384 = vadd.f32 0.0, %v2383
        %2385 = vmatmul.bf16.gmra.mxu0 %v2367
        %v2386 = vpop.f32.mrf.mxu0
        %v2387 = vadd.f32 0.0, %v2386
        %v2388 = vpop.f32.mrf.mxu0
        %v2389 = vadd.f32 0.0, %v2388
        %2390 = vdwg.mxu0
        %v2391 = vadd.f32 %v2315, %v2382
        %v2392 = vadd.f32 %v2317, %v2384
        %v2393 = vadd.f32 %v2320, %v2387
        %v2394 = vadd.f32 %v2322, %v2389
        %v2395 = vpack.c.bf16 %v2185, %v2184
        %v2396 = vpack.c.bf16 %v2187, %v2186
        %s2397 = scalar_lea.vmem %s3, 108
        %v2398 = vld [vmem:[%s2397] sm:$0xf]
        %v2399 = vld [vmem:[%s2397 + $0x4] sm:$0xf]
        %v2400 = vld [vmem:[%s2397 + $0x8] sm:$0xf]
        %v2401 = vld [vmem:[%s2397 + $0xc] sm:$0xf]
        %v2402 = vld [vmem:[%s2397 + $0x10] sm:$0xf]
        %v2403 = vld [vmem:[%s2397 + $0x14] sm:$0xf]
        %v2404 = vld [vmem:[%s2397 + $0x18] sm:$0xf]
        %v2405 = vld [vmem:[%s2397 + $0x1c] sm:$0xf]
        %v2406 = vld [vmem:[%s2397 + $0x20] sm:$0xf]
        %v2416 = vunpack.c.l.b16 %v2398
        %v2417 = vunpack.c.l.b16 %v2399
        %v2418 = vunpack.c.l.b16 %v2400
        %v2419 = vunpack.c.l.b16 %v2401
        %v2420 = vunpack.c.l.b16 %v2402
        %v2421 = vunpack.c.l.b16 %v2403
        %v2422 = vunpack.c.l.b16 %v2404
        %v2423 = vunpack.c.l.b16 %v2405
        %v2424 = vunpack.c.l.b16 %v2406
        %v2425 = vpack.c.b16 %v2417, %v2416
        %v2426 = vpack.c.b16 %v2419, %v2418
        %v2427 = vpack.c.b16 %v2421, %v2420
        %v2428 = vpack.c.b16 %v2423, %v2422
        %v2429 = vpack.c.b16 %v2424, %v2424
        %v2435 = vsel %vm2239, %v2395, 0
        %v2438 = vsel %vm2239, %v2396, 0
        %v2441 = vsel %vm2246, %v2429, 0
        %2443 = vmatpush.bf16.msra.mxu0 0
        %2444 = vmatpush.bf16.msra.mxu0 0
        %2445 = vmatpush.bf16.msra.mxu0 0
        %2446 = vmatpush.bf16.msra.mxu0 %v2441
        %2447 = vmatpush.bf16.msra.mxu0 %v2428
        %2448 = vmatpush.bf16.msra.mxu0 %v2427
        %2449 = vmatpush.bf16.msra.mxu0 %v2426
        %2450 = vmatpush.bf16.msra.mxu0 %v2425
        %2451 = vmatmul.bf16.gmra.mxu0 %v2435
        %v2452 = vpop.f32.mrf.mxu0
        %v2453 = vadd.f32 0.0, %v2452
        %v2454 = vpop.f32.mrf.mxu0
        %v2455 = vadd.f32 0.0, %v2454
        %2456 = vmatmul.bf16.gmra.mxu0 %v2438
        %v2457 = vpop.f32.mrf.mxu0
        %v2458 = vadd.f32 0.0, %v2457
        %v2459 = vpop.f32.mrf.mxu0
        %v2460 = vadd.f32 0.0, %v2459
        %2461 = vdwg.mxu0
        %v2462 = vadd.f32 %v2391, %v2453
        %v2463 = vadd.f32 %v2392, %v2455
        %v2464 = vadd.f32 %v2393, %v2458
        %v2465 = vadd.f32 %v2394, %v2460
        %v2466 = vpack.c.bf16 %v1472, %v1471
        %s2467 = scalar_lea.vmem %s3, 144
        %v2468 = vld [vmem:[%s2467] sm:$0xf]
        %v2469 = vld [vmem:[%s2467 + $0x4] sm:$0xf]
        %v2470 = vld [vmem:[%s2467 + $0x8] sm:$0xf]
        %v2471 = vld [vmem:[%s2467 + $0xc] sm:$0xf]
        %v2472 = vld [vmem:[%s2467 + $0x10] sm:$0xf]
        %v2473 = vld [vmem:[%s2467 + $0x14] sm:$0xf]
        %v2474 = vld [vmem:[%s2467 + $0x18] sm:$0xf]
        %v2475 = vld [vmem:[%s2467 + $0x1c] sm:$0xf]
        %v2476 = vld [vmem:[%s2467 + $0x20] sm:$0xf]
        %v2486 = vunpack.c.l.b16 %v2468
        %v2487 = vunpack.c.l.b16 %v2469
        %v2488 = vunpack.c.l.b16 %v2470
        %v2489 = vunpack.c.l.b16 %v2471
        %v2490 = vunpack.c.l.b16 %v2472
        %v2491 = vunpack.c.l.b16 %v2473
        %v2492 = vunpack.c.l.b16 %v2474
        %v2493 = vunpack.c.l.b16 %v2475
        %v2494 = vunpack.c.l.b16 %v2476
        %v2495 = vpack.c.b16 %v2487, %v2486
        %v2496 = vpack.c.b16 %v2489, %v2488
        %v2497 = vpack.c.b16 %v2491, %v2490
        %v2498 = vpack.c.b16 %v2493, %v2492
        %v2499 = vpack.c.b16 %v2494, %v2494
        %v2505 = vsel %vm2239, %v2466, 0
        %v2508 = vsel %vm2246, %v2499, 0
        %2510 = vmatpush.bf16.msra.mxu0 0
        %2511 = vmatpush.bf16.msra.mxu0 0
        %2512 = vmatpush.bf16.msra.mxu0 0
        %2513 = vmatpush.bf16.msra.mxu0 %v2508
        %2514 = vmatpush.bf16.msra.mxu0 %v2498
        %2515 = vmatpush.bf16.msra.mxu0 %v2497
        %2516 = vmatpush.bf16.msra.mxu0 %v2496
        %2517 = vmatpush.bf16.msra.mxu0 %v2495
        %2518 = vmatmul.bf16.gmra.mxu0 %v2300
        %v2519 = vpop.f32.mrf.mxu0
        %v2520 = vadd.f32 0.0, %v2519
        %v2521 = vpop.f32.mrf.mxu0
        %v2522 = vadd.f32 0.0, %v2521
        %2523 = vmatmul.bf16.gmra.mxu0 %v2505
        %v2524 = vpop.f32.mrf.mxu0
        %v2525 = vadd.f32 0.0, %v2524
        %v2526 = vpop.f32.mrf.mxu0
        %v2527 = vadd.f32 0.0, %v2526
        %2528 = vdwg.mxu0
        %v2529 = vadd.f32 %v2462, %v2520
        %v2530 = vadd.f32 %v2463, %v2522
        %v2531 = vadd.f32 %v2464, %v2525
        %v2532 = vadd.f32 %v2465, %v2527
        %2537 = vrot.lane.b32.xlu0 %v2529, 64
        %v2538 = vpop.permute.xlu0 %2537
        %2539 = vrot.lane.b32.xlu0 %v2530, 64
        %v2540 = vpop.permute.xlu0 %2539
        %2541 = vrot.lane.b32.xlu0 %v2531, 64
        %v2542 = vpop.permute.xlu0 %2541
        %2543 = vrot.lane.b32.xlu0 %v2532, 64
        %v2544 = vpop.permute.xlu0 %2543
        %v2549 = vmax.f32 %v2529, %v2538
        %v2550 = vmax.f32 %v2530, %v2540
        %v2551 = vmax.f32 %v2531, %v2542
        %v2552 = vmax.f32 %v2532, %v2544
        %2553 = vmatpush.bf16.msra.mxu0 0
        %2554 = vmatpush.bf16.msra.mxu0 0
        %2555 = vmatpush.bf16.msra.mxu0 0
        %2556 = vmatpush.bf16.msra.mxu0 %v2248
        %2557 = vmatpush.bf16.msra.mxu0 %v2233
        %2558 = vmatpush.bf16.msra.mxu0 %v2232
        %2559 = vmatpush.bf16.msra.mxu0 %v2231
        %2560 = vmatpush.bf16.msra.mxu0 %v2230
        %2561 = vmatmul.bf16.gmra.mxu0 %v2364
        %v2562 = vpop.f32.mrf.mxu0
        %v2563 = vadd.f32 0.0, %v2562
        %v2564 = vpop.f32.mrf.mxu0
        %v2565 = vadd.f32 0.0, %v2564
        %2566 = vmatmul.bf16.gmra.mxu0 %v2367
        %v2567 = vpop.f32.mrf.mxu0
        %v2568 = vadd.f32 0.0, %v2567
        %v2569 = vpop.f32.mrf.mxu0
        %v2570 = vadd.f32 0.0, %v2569
        %2571 = vdwg.mxu0
        %2572 = vmatpush.bf16.msra.mxu0 0
        %2573 = vmatpush.bf16.msra.mxu0 0
        %2574 = vmatpush.bf16.msra.mxu0 0
        %2575 = vmatpush.bf16.msra.mxu0 %v2303
        %2576 = vmatpush.bf16.msra.mxu0 %v2290
        %2577 = vmatpush.bf16.msra.mxu0 %v2289
        %2578 = vmatpush.bf16.msra.mxu0 %v2288
        %2579 = vmatpush.bf16.msra.mxu0 %v2287
        %2580 = vmatmul.bf16.gmra.mxu0 %v2241
        %v2581 = vpop.f32.mrf.mxu0
        %v2582 = vadd.f32 %v2563, %v2581
        %v2583 = vpop.f32.mrf.mxu0
        %v2584 = vadd.f32 %v2565, %v2583
        %2585 = vmatmul.bf16.gmra.mxu0 %v2244
        %v2586 = vpop.f32.mrf.mxu0
        %v2587 = vadd.f32 %v2568, %v2586
        %v2588 = vpop.f32.mrf.mxu0
        %v2589 = vadd.f32 %v2570, %v2588
        %2590 = vdwg.mxu0
        %2591 = vmatpush.bf16.msra.mxu0 0
        %2592 = vmatpush.bf16.msra.mxu0 0
        %2593 = vmatpush.bf16.msra.mxu0 0
        %2594 = vmatpush.bf16.msra.mxu0 %v2370
        %2595 = vmatpush.bf16.msra.mxu0 %v2357
        %2596 = vmatpush.bf16.msra.mxu0 %v2356
        %2597 = vmatpush.bf16.msra.mxu0 %v2355
        %2598 = vmatpush.bf16.msra.mxu0 %v2354
        %2599 = vmatmul.bf16.gmra.mxu0 %v2435
        %v2600 = vpop.f32.mrf.mxu0
        %v2601 = vadd.f32 0.0, %v2600
        %v2602 = vpop.f32.mrf.mxu0
        %v2603 = vadd.f32 0.0, %v2602
        %2604 = vmatmul.bf16.gmra.mxu0 %v2438
        %v2605 = vpop.f32.mrf.mxu0
        %v2606 = vadd.f32 0.0, %v2605
        %v2607 = vpop.f32.mrf.mxu0
        %v2608 = vadd.f32 0.0, %v2607
        %2609 = vdwg.mxu0
        %v2610 = vadd.f32 %v2582, %v2601
        %v2611 = vadd.f32 %v2584, %v2603
        %v2612 = vadd.f32 %v2587, %v2606
        %v2613 = vadd.f32 %v2589, %v2608
        %2614 = vmatpush.bf16.msra.mxu0 0
        %2615 = vmatpush.bf16.msra.mxu0 0
        %2616 = vmatpush.bf16.msra.mxu0 0
        %2617 = vmatpush.bf16.msra.mxu0 %v2441
        %2618 = vmatpush.bf16.msra.mxu0 %v2428
        %2619 = vmatpush.bf16.msra.mxu0 %v2427
        %2620 = vmatpush.bf16.msra.mxu0 %v2426
        %2621 = vmatpush.bf16.msra.mxu0 %v2425
        %2622 = vmatmul.bf16.gmra.mxu0 %v2300
        %v2623 = vpop.f32.mrf.mxu0
        %v2624 = vadd.f32 0.0, %v2623
        %v2625 = vpop.f32.mrf.mxu0
        %v2626 = vadd.f32 0.0, %v2625
        %2627 = vmatmul.bf16.gmra.mxu0 %v2505
        %v2628 = vpop.f32.mrf.mxu0
        %v2629 = vadd.f32 0.0, %v2628
        %v2630 = vpop.f32.mrf.mxu0
        %v2631 = vadd.f32 0.0, %v2630
        %2632 = vdwg.mxu0
        %v2633 = vadd.f32 %v2610, %v2624
        %v2634 = vadd.f32 %v2611, %v2626
        %v2635 = vadd.f32 %v2612, %v2629
        %v2636 = vadd.f32 %v2613, %v2631
        %v2637 = vpack.c.bf16 %v2188, %v2187
        %v2639 = vsel %vm2239, %v2637, 0
        %2641 = vmatpush.bf16.msra.mxu0 0
        %2642 = vmatpush.bf16.msra.mxu0 0
        %2643 = vmatpush.bf16.msra.mxu0 0
        %2644 = vmatpush.bf16.msra.mxu0 %v2508
        %2645 = vmatpush.bf16.msra.mxu0 %v2498
        %2646 = vmatpush.bf16.msra.mxu0 %v2497
        %2647 = vmatpush.bf16.msra.mxu0 %v2496
        %2648 = vmatpush.bf16.msra.mxu0 %v2495
        %2649 = vmatmul.bf16.gmra.mxu0 %v2244
        %v2650 = vpop.f32.mrf.mxu0
        %v2651 = vadd.f32 0.0, %v2650
        %v2652 = vpop.f32.mrf.mxu0
        %v2653 = vadd.f32 0.0, %v2652
        %2654 = vmatmul.bf16.gmra.mxu0 %v2639
        %v2655 = vpop.f32.mrf.mxu0
        %v2656 = vadd.f32 0.0, %v2655
        %v2657 = vpop.f32.mrf.mxu0
        %v2658 = vadd.f32 0.0, %v2657
        %2659 = vdwg.mxu0
        %v2660 = vadd.f32 %v2633, %v2651
        %v2661 = vadd.f32 %v2634, %v2653
        %v2662 = vadd.f32 %v2635, %v2656
        %v2663 = vadd.f32 %v2636, %v2658
        %2668 = vrot.lane.b32.xlu0 %v2660, 64
        %v2669 = vpop.permute.xlu0 %2668
        %2670 = vrot.lane.b32.xlu0 %v2661, 64
        %v2671 = vpop.permute.xlu0 %2670
        %2672 = vrot.lane.b32.xlu0 %v2662, 64
        %v2673 = vpop.permute.xlu0 %2672
        %2674 = vrot.lane.b32.xlu0 %v2663, 64
        %v2675 = vpop.permute.xlu0 %2674
        %v2680 = vmax.f32 %v2660, %v2669
        %v2681 = vmax.f32 %v2661, %v2671
        %v2682 = vmax.f32 %v2662, %v2673
        %v2683 = vmax.f32 %v2663, %v2675
        %v2684 = vmax.f32 %v2549, %v2680
        %v2685 = vmax.f32 %v2550, %v2681
        %v2686 = vmax.f32 %v2551, %v2682
        %v2687 = vmax.f32 %v2552, %v2683
        %v2688 = vld [vmem:[%s4] sm:$0x1]
        %v2690 = vperm.slane %v2688, 0
        %v2692 = vadd.f32 %v2684, %v2690
        %v2693 = vadd.f32 %v2685, %v2690
        %v2694 = vadd.f32 %v2686, %v2690
        %v2695 = vadd.f32 %v2687, %v2690
        %v2696 = vmax.f32 %v2692, 0.0
        %v2697 = vmax.f32 %v2693, 0.0
        %v2698 = vmax.f32 %v2694, 0.0
        %v2699 = vmax.f32 %v2695, 0.0
        %v2700 = vpack.c.bf16 %v2696, %v2696
        %v2701 = vld [vmem:[%s5] sm:$0xf]
        %v2702 = vld [vmem:[%s5 + $0x4] sm:$0xf]
        %v2703 = vld [vmem:[%s5 + $0x8] sm:$0xf]
        %v2704 = vld [vmem:[%s5 + $0xc] sm:$0xf]
        %v2705 = vld [vmem:[%s5 + $0x10] sm:$0xf]
        %v2706 = vld [vmem:[%s5 + $0x14] sm:$0xf]
        %v2707 = vld [vmem:[%s5 + $0x18] sm:$0xf]
        %v2708 = vld [vmem:[%s5 + $0x1c] sm:$0xf]
        %v2709 = vpack.c.bf16 %v2697, %v2697
        %s2710 = scalar_lea.vmem %s5, 32
        %v2711 = vld [vmem:[%s2710] sm:$0xf]
        %v2712 = vld [vmem:[%s2710 + $0x4] sm:$0xf]
        %v2713 = vld [vmem:[%s2710 + $0x8] sm:$0xf]
        %v2714 = vld [vmem:[%s2710 + $0xc] sm:$0xf]
        %v2715 = vld [vmem:[%s2710 + $0x10] sm:$0xf]
        %v2716 = vld [vmem:[%s2710 + $0x14] sm:$0xf]
        %v2717 = vld [vmem:[%s2710 + $0x18] sm:$0xf]
        %v2718 = vld [vmem:[%s2710 + $0x1c] sm:$0xf]
        %v2727 = vunpack.c.l.b16 %v2711
        %v2728 = vunpack.c.l.b16 %v2712
        %v2729 = vunpack.c.l.b16 %v2713
        %v2730 = vunpack.c.l.b16 %v2714
        %v2731 = vunpack.c.l.b16 %v2715
        %v2732 = vunpack.c.l.b16 %v2716
        %v2733 = vunpack.c.l.b16 %v2717
        %v2734 = vunpack.c.l.b16 %v2718
        %v2735 = vpack.c.b16 %v2728, %v2727
        %v2736 = vpack.c.b16 %v2730, %v2729
        %v2737 = vpack.c.b16 %v2732, %v2731
        %v2738 = vpack.c.b16 %v2734, %v2733
        %vm2743 = vcmask 523264
        %v2745 = vsel %vm2743, %v2709, 0
        %2747 = vmatpush.bf16.msra.mxu0 0
        %2748 = vmatpush.bf16.msra.mxu0 0
        %2749 = vmatpush.bf16.msra.mxu0 0
        %2750 = vmatpush.bf16.msra.mxu0 0
        %2751 = vmatpush.bf16.msra.mxu0 %v2738
        %2752 = vmatpush.bf16.msra.mxu0 %v2737
        %2753 = vmatpush.bf16.msra.mxu0 %v2736
        %2754 = vmatpush.bf16.msra.mxu0 %v2735
        %2755 = vmatmul.bf16.gmra.mxu0 %v2745
        %v2756 = vpop.f32.mrf.mxu0
        %v2757 = vadd.f32 0.0, %v2756
        %v2758 = vpop.f32.mrf.mxu0
        %2759 = vdwg.mxu0
        %v2768 = vunpack.c.l.b16 %v2701
        %v2769 = vunpack.c.l.b16 %v2702
        %v2770 = vunpack.c.l.b16 %v2703
        %v2771 = vunpack.c.l.b16 %v2704
        %v2772 = vunpack.c.l.b16 %v2705
        %v2773 = vunpack.c.l.b16 %v2706
        %v2774 = vunpack.c.l.b16 %v2707
        %v2775 = vunpack.c.l.b16 %v2708
        %v2776 = vpack.c.b16 %v2769, %v2768
        %v2777 = vpack.c.b16 %v2771, %v2770
        %v2778 = vpack.c.b16 %v2773, %v2772
        %v2779 = vpack.c.b16 %v2775, %v2774
        %v2785 = vsel %vm2743, %v2700, 0
        %2787 = vmatpush.bf16.msra.mxu0 0
        %2788 = vmatpush.bf16.msra.mxu0 0
        %2789 = vmatpush.bf16.msra.mxu0 0
        %2790 = vmatpush.bf16.msra.mxu0 0
        %2791 = vmatpush.bf16.msra.mxu0 %v2779
        %2792 = vmatpush.bf16.msra.mxu0 %v2778
        %2793 = vmatpush.bf16.msra.mxu0 %v2777
        %2794 = vmatpush.bf16.msra.mxu0 %v2776
        %2795 = vmatmul.bf16.gmra.mxu0 %v2785
        %v2796 = vpop.f32.mrf.mxu0
        %v2797 = vadd.f32 %v2757, %v2796
        %v2798 = vpop.f32.mrf.mxu0
        %2799 = vdwg.mxu0
        %v2800 = vpack.c.bf16 %v2698, %v2698
        %s2801 = scalar_lea.vmem %s5, 64
        %v2802 = vld [vmem:[%s2801] sm:$0xf]
        %v2803 = vld [vmem:[%s2801 + $0x4] sm:$0xf]
        %v2804 = vld [vmem:[%s2801 + $0x8] sm:$0xf]
        %v2805 = vld [vmem:[%s2801 + $0xc] sm:$0xf]
        %v2806 = vld [vmem:[%s2801 + $0x10] sm:$0xf]
        %v2807 = vld [vmem:[%s2801 + $0x14] sm:$0xf]
        %v2808 = vld [vmem:[%s2801 + $0x18] sm:$0xf]
        %v2809 = vld [vmem:[%s2801 + $0x1c] sm:$0xf]
        %v2818 = vunpack.c.l.b16 %v2802
        %v2819 = vunpack.c.l.b16 %v2803
        %v2820 = vunpack.c.l.b16 %v2804
        %v2821 = vunpack.c.l.b16 %v2805
        %v2822 = vunpack.c.l.b16 %v2806
        %v2823 = vunpack.c.l.b16 %v2807
        %v2824 = vunpack.c.l.b16 %v2808
        %v2825 = vunpack.c.l.b16 %v2809
        %v2826 = vpack.c.b16 %v2819, %v2818
        %v2827 = vpack.c.b16 %v2821, %v2820
        %v2828 = vpack.c.b16 %v2823, %v2822
        %v2829 = vpack.c.b16 %v2825, %v2824
        %v2835 = vsel %vm2743, %v2800, 0
        %2837 = vmatpush.bf16.msra.mxu0 0
        %2838 = vmatpush.bf16.msra.mxu0 0
        %2839 = vmatpush.bf16.msra.mxu0 0
        %2840 = vmatpush.bf16.msra.mxu0 0
        %2841 = vmatpush.bf16.msra.mxu0 %v2829
        %2842 = vmatpush.bf16.msra.mxu0 %v2828
        %2843 = vmatpush.bf16.msra.mxu0 %v2827
        %2844 = vmatpush.bf16.msra.mxu0 %v2826
        %2845 = vmatmul.bf16.gmra.mxu0 %v2835
        %v2846 = vpop.f32.mrf.mxu0
        %v2847 = vadd.f32 0.0, %v2846
        %v2848 = vpop.f32.mrf.mxu0
        %2849 = vdwg.mxu0
        %v2850 = vadd.f32 %v2797, %v2847
        %v2851 = vpack.c.bf16 %v2699, %v2699
        %s2852 = scalar_lea.vmem %s5, 96
        %v2853 = vld [vmem:[%s2852] sm:$0xf]
        %v2854 = vld [vmem:[%s2852 + $0x4] sm:$0xf]
        %v2855 = vld [vmem:[%s2852 + $0x8] sm:$0xf]
        %v2856 = vld [vmem:[%s2852 + $0xc] sm:$0xf]
        %v2857 = vld [vmem:[%s2852 + $0x10] sm:$0xf]
        %v2858 = vld [vmem:[%s2852 + $0x14] sm:$0xf]
        %v2859 = vld [vmem:[%s2852 + $0x18] sm:$0xf]
        %v2860 = vld [vmem:[%s2852 + $0x1c] sm:$0xf]
        %v2869 = vunpack.c.l.b16 %v2853
        %v2870 = vunpack.c.l.b16 %v2854
        %v2871 = vunpack.c.l.b16 %v2855
        %v2872 = vunpack.c.l.b16 %v2856
        %v2873 = vunpack.c.l.b16 %v2857
        %v2874 = vunpack.c.l.b16 %v2858
        %v2875 = vunpack.c.l.b16 %v2859
        %v2876 = vunpack.c.l.b16 %v2860
        %v2877 = vpack.c.b16 %v2870, %v2869
        %v2878 = vpack.c.b16 %v2872, %v2871
        %v2879 = vpack.c.b16 %v2874, %v2873
        %v2880 = vpack.c.b16 %v2876, %v2875
        %v2886 = vsel %vm2743, %v2851, 0
        %2888 = vmatpush.bf16.msra.mxu0 0
        %2889 = vmatpush.bf16.msra.mxu0 0
        %2890 = vmatpush.bf16.msra.mxu0 0
        %2891 = vmatpush.bf16.msra.mxu0 0
        %2892 = vmatpush.bf16.msra.mxu0 %v2880
        %2893 = vmatpush.bf16.msra.mxu0 %v2879
        %2894 = vmatpush.bf16.msra.mxu0 %v2878
        %2895 = vmatpush.bf16.msra.mxu0 %v2877
        %2896 = vmatmul.bf16.gmra.mxu0 %v2886
        %v2897 = vpop.f32.mrf.mxu0
        %v2898 = vadd.f32 0.0, %v2897
        %v2899 = vpop.f32.mrf.mxu0
        %2900 = vdwg.mxu0
        %v2901 = vadd.f32 %v2850, %v2898
        %v2902 = vld [vmem:[%s6] sm:$0x1]
        %v2904 = vperm.slane %v2902, 0
        %v2906 = vadd.f32 %v2901, %v2904
        %v2907 = vmax.f32 %v2906, 0.0
        %v2908 = vpack.c.bf16 %v2907, %v2907
        %v2909 = vld [vmem:[%s7] sm:$0xf]
        %v2910 = vld [vmem:[%s7 + $0x4] sm:$0xf]
        %v2911 = vld [vmem:[%s7 + $0x8] sm:$0xf]
        %v2912 = vld [vmem:[%s7 + $0xc] sm:$0xf]
        %v2913 = vld [vmem:[%s7 + $0x10] sm:$0xf]
        %v2914 = vld [vmem:[%s7 + $0x14] sm:$0xf]
        %v2915 = vld [vmem:[%s7 + $0x18] sm:$0xf]
        %v2916 = vld [vmem:[%s7 + $0x1c] sm:$0xf]
        %v2917 = vld [vmem:[%s7 + $0x20] sm:$0xf]
        %v2918 = vld [vmem:[%s7 + $0x24] sm:$0xf]
        %v2919 = vld [vmem:[%s7 + $0x28] sm:$0xf]
        %v2920 = vld [vmem:[%s7 + $0x2c] sm:$0xf]
        %v2921 = vld [vmem:[%s7 + $0x30] sm:$0xf]
        %v2922 = vld [vmem:[%s7 + $0x34] sm:$0xf]
        %v2923 = vld [vmem:[%s7 + $0x38] sm:$0xf]
        %v2924 = vld [vmem:[%s7 + $0x3c] sm:$0xf]
        %v2925 = vld [vmem:[%s8] sm:$0x1]
        %v2927 = vperm.slane %v2925, 0
        %v2945 = vunpack.c.l.b16 %v2909
        %v2946 = vunpack.c.l.b16 %v2910
        %v2947 = vunpack.c.l.b16 %v2911
        %v2948 = vunpack.c.l.b16 %v2912
        %v2949 = vunpack.c.l.b16 %v2913
        %v2950 = vunpack.c.l.b16 %v2914
        %v2951 = vunpack.c.l.b16 %v2915
        %v2952 = vunpack.c.l.b16 %v2916
        %v2953 = vunpack.c.l.b16 %v2917
        %v2954 = vunpack.c.l.b16 %v2918
        %v2955 = vunpack.c.l.b16 %v2919
        %v2956 = vunpack.c.l.b16 %v2920
        %v2957 = vunpack.c.l.b16 %v2921
        %v2958 = vunpack.c.l.b16 %v2922
        %v2959 = vunpack.c.l.b16 %v2923
        %v2960 = vunpack.c.l.b16 %v2924
        %v2961 = vpack.c.b16 %v2946, %v2945
        %v2962 = vpack.c.b16 %v2948, %v2947
        %v2963 = vpack.c.b16 %v2950, %v2949
        %v2964 = vpack.c.b16 %v2952, %v2951
        %v2965 = vpack.c.b16 %v2954, %v2953
        %v2966 = vpack.c.b16 %v2956, %v2955
        %v2967 = vpack.c.b16 %v2958, %v2957
        %v2968 = vpack.c.b16 %v2960, %v2959
        %2977 = vmatpush.bf16.msra.mxu0 %v2968
        %2978 = vmatpush.bf16.msra.mxu0 %v2967
        %2979 = vmatpush.bf16.msra.mxu0 %v2966
        %2980 = vmatpush.bf16.msra.mxu0 %v2965
        %2981 = vmatpush.bf16.msra.mxu0 %v2964
        %2982 = vmatpush.bf16.msra.mxu0 %v2963
        %2983 = vmatpush.bf16.msra.mxu0 %v2962
        %2984 = vmatpush.bf16.msra.mxu0 %v2961
        %2985 = vmatmul.bf16.gmra.mxu0 %v2908
        %v2986 = vpop.f32.mrf.mxu0
        %v2987 = vadd.f32 %v2927, %v2986
        %v2988 = vpop.f32.mrf.mxu0
        %2989 = vdwg.mxu0
        %v2990 = vmax.f32 %v2987, 0.0
        %v2991 = vpack.c.bf16 %v2990, %v2990
        %v2992 = vld [vmem:[%s9] sm:$0xf]
        %v2993 = vld [vmem:[%s9 + $0x4] sm:$0xf]
        %v2994 = vld [vmem:[%s9 + $0x8] sm:$0xf]
        %v2995 = vld [vmem:[%s9 + $0xc] sm:$0xf]
        %v2996 = vld [vmem:[%s9 + $0x10] sm:$0xf]
        %v2997 = vld [vmem:[%s9 + $0x14] sm:$0xf]
        %v2998 = vld [vmem:[%s9 + $0x18] sm:$0xf]
        %v2999 = vld [vmem:[%s9 + $0x1c] sm:$0xf]
        %v3000 = vld [vmem:[%s9 + $0x20] sm:$0xf]
        %v3001 = vld [vmem:[%s9 + $0x24] sm:$0xf]
        %v3002 = vld [vmem:[%s9 + $0x28] sm:$0xf]
        %v3003 = vld [vmem:[%s9 + $0x2c] sm:$0xf]
        %v3004 = vld [vmem:[%s9 + $0x30] sm:$0xf]
        %v3005 = vld [vmem:[%s9 + $0x34] sm:$0xf]
        %v3006 = vld [vmem:[%s9 + $0x38] sm:$0xf]
        %v3007 = vld [vmem:[%s9 + $0x3c] sm:$0xf]
        %v3024 = vunpack.c.l.b16 %v2992
        %v3025 = vunpack.c.l.b16 %v2993
        %v3026 = vunpack.c.l.b16 %v2994
        %v3027 = vunpack.c.l.b16 %v2995
        %v3028 = vunpack.c.l.b16 %v2996
        %v3029 = vunpack.c.l.b16 %v2997
        %v3030 = vunpack.c.l.b16 %v2998
        %v3031 = vunpack.c.l.b16 %v2999
        %v3032 = vunpack.c.l.b16 %v3000
        %v3033 = vunpack.c.l.b16 %v3001
        %v3034 = vunpack.c.l.b16 %v3002
        %v3035 = vunpack.c.l.b16 %v3003
        %v3036 = vunpack.c.l.b16 %v3004
        %v3037 = vunpack.c.l.b16 %v3005
        %v3038 = vunpack.c.l.b16 %v3006
        %v3039 = vunpack.c.l.b16 %v3007
        %v3040 = vpack.c.b16 %v3025, %v3024
        %v3041 = vpack.c.b16 %v3027, %v3026
        %v3042 = vpack.c.b16 %v3029, %v3028
        %v3043 = vpack.c.b16 %v3031, %v3030
        %v3044 = vpack.c.b16 %v3033, %v3032
        %v3045 = vpack.c.b16 %v3035, %v3034
        %v3046 = vpack.c.b16 %v3037, %v3036
        %v3047 = vpack.c.b16 %v3039, %v3038
        %3056 = vmatpush.bf16.msra.mxu0 %v3047
        %3057 = vmatpush.bf16.msra.mxu0 %v3046
        %3058 = vmatpush.bf16.msra.mxu0 %v3045
        %3059 = vmatpush.bf16.msra.mxu0 %v3044
        %3060 = vmatpush.bf16.msra.mxu0 %v3043
        %3061 = vmatpush.bf16.msra.mxu0 %v3042
        %3062 = vmatpush.bf16.msra.mxu0 %v3041
        %3063 = vmatpush.bf16.msra.mxu0 %v3040
        %3064 = vmatmul.bf16.gmra.mxu0 %v2991
        %v3065 = vpop.f32.mrf.mxu0
        %v3066 = vadd.f32 0.0, %v3065
        %v3067 = vpop.f32.mrf.mxu0
        %3068 = vdwg.mxu0
        %v3069 = vld [vmem:[#allocation2] sm:$0x1]
        %v3071 = vperm.slane %v3069, 0
        %v3073 = vadd.f32 %v3066, %v3071
        %vm3074 = vcmask 7168
        %3075 = vst.msk [vmem:[%s529] sm:$0xff] %vm3074, %v3073
        %p3076 = scmp.lt.s32.totalorder %s24, 1
        %s3077 = scalar_select %p3076, %s24, 1
        %s3078 = smul.addr %s3077, 8
        %s3079 = scalar_lea.vmem %s11, %s3078
        // Predicated region
        $region103: #{cnn_forward.1} parent=97 // pred_check
          %p3080 = pneg %p278
        $region104: #{cnn_forward.1} parent=97 // pred_check_branch
          %3082 = sbr.rel (%p3080) target = $region106
        $region105: #{cnn_forward.1} parent=97 // pred_region
          _
        $region106: #{cnn_forward.1} parent=97 // pred_fallthru
          _
      $region98: #{cnn_forward.1} parent=5 // pred_fallthru
        _
      %p3083 = scmp.le.s32.totalorder 2, %s19
      // Predicated region
      $region107: #{cnn_forward.1} parent=5 // pred_check
        %p3084 = pneg %p3083
      $region108: #{cnn_forward.1} parent=5 // pred_check_branch
        %3086 = sbr.rel (%p3084) target = $region110
      $region109: #{cnn_forward.1} parent=5 // pred_region
        %s3087 = ssub.s32 %s19, 2
        // Predicated region
        $region111: #{cnn_forward.1} parent=109 // pred_check
          %p3088 = pneg %p284
        $region112: #{cnn_forward.1} parent=109 // pred_check_branch
          %3090 = sbr.rel (%p3088) target = $region114
        $region113: #{cnn_forward.1} parent=109 // pred_region
          %p3091 = scmp.lt.s32.totalorder %s25, 1
          %s3092 = scalar_select %p3091, %s25, 1
          %s3093 = smul.addr %s3092, 8
          %s3094 = scalar_lea.vmem %s11, %s3093
        $region114: #{cnn_forward.1} parent=109 // pred_fallthru
          _
      $region110: #{cnn_forward.1} parent=5 // pred_fallthru
        _
    $region6: #{cnn_forward.1} parent=1 // loop_footer
      %s23 = sadd.s32 1, %s19
    $region7: #{cnn_forward.1} parent=1 // loop_footer_branch
      %18 = sbr.rel target = $region3
    $region8: #{cnn_forward.1} parent=1 // loop_exit
      _

</llo_original>
